<compile_context>
chip_gen: v7x
topology: tpu7x:2x2x1
jax: 0.10.0
libtpu: 0.0.40
codegen_flags: <defaults>
</compile_context>

<pallas_src>
import jax
import jax.numpy as jnp
import numpy as np
from jax.experimental import pallas as pl
from jax.experimental.pallas import tpu as pltpu

# ---- MoCo hyper-parameters (small synthetic sizes) -------------------------
DIM = 128        # feature dimension (MoCo default)
HIDDEN = 256     # hidden width of the synthetic base encoder
K_QUEUE = 256    # queue size (small; K % batch == 0)
TK = 128         # queue tile for the l_neg grid (lane aligned)
M_MOM = 0.999    # key-encoder momentum
TEMP = 0.07      # softmax temperature

assert K_QUEUE % TK == 0


def _encode(x, w1, b1, w2, b2):
    """Linear -> ReLU -> Linear -> L2-normalize rows. bf16 MXU, f32 epilogue."""
    h = jnp.dot(x.astype(jnp.bfloat16), w1.astype(jnp.bfloat16),
                preferred_element_type=jnp.float32) + b1
    h = jnp.maximum(h, 0.0)
    z = jnp.dot(h.astype(jnp.bfloat16), w2.astype(jnp.bfloat16),
                preferred_element_type=jnp.float32) + b2
    # F.normalize(z, dim=1) == z * rsqrt(max(||z||^2, eps^2))
    sq = jnp.sum(z * z, axis=1, keepdims=True)
    return z * jax.lax.rsqrt(jnp.maximum(sq, 1e-24))


def _moco_fused_kernel(
    # inputs
    imq_ref, imk_ref, ptr_ref,
    w1q_ref, b1q_ref, w2q_ref, b2q_ref,
    w1k_ref, b1k_ref, w2k_ref, b2k_ref,
    queue_hbm,                                   # (K, DIM) f32, raw HBM (pl.ANY)
    # outputs
    lpos_ref, lneg_ref,                          # (N,1) f32 ; (N,TK) f32 tile
    w1k_out, b1k_out, w2k_out, b2k_out,          # aliased EMA write-back
    queue_out,                                   # (K, DIM) raw HBM, aliased to queue_hbm
    # scratch
    qs_ref,                                      # (N, DIM) bf16: q * (1/T)
    kv_ref,                                      # (N, DIM) f32 : keys to enqueue
    qbuf_ref,                                    # (2, TK, DIM) f32: queue tile dbl-buffer
    fetch_sem,                                   # DMA sems (2,)
    enq_sem,                                     # DMA sem  (1,)
):
    j = pl.program_id(0)
    n_tiles = pl.num_programs(0)
    n = kv_ref.shape[0]
    tk = qbuf_ref.shape[1]

    def start_fetch(tile, slot):
        pltpu.make_async_copy(queue_hbm.at[pl.ds(tile * tk, tk), :],
                              qbuf_ref.at[slot], fetch_sem.at[slot]).start()

    # ---- once (first tile): momentum EMA, both encoders, l_pos ---------------
    @pl.when(j == 0)
    def _():
        start_fetch(0, 0)                         # queue DMA overlaps encoder compute

        one_m = 1.0 - M_MOM                       # EMA in exact f32, written in place
        w1k = w1k_ref[...] * M_MOM + w1q_ref[...] * one_m
        b1k = b1k_ref[...] * M_MOM + b1q_ref[...] * one_m
        w2k = w2k_ref[...] * M_MOM + w2q_ref[...] * one_m
        b2k = b2k_ref[...] * M_MOM + b2q_ref[...] * one_m
        w1k_out[...] = w1k
        b1k_out[...] = b1k
        w2k_out[...] = w2k
        b2k_out[...] = b2k

        q = _encode(imq_ref[...], w1q_ref[...], b1q_ref[...], w2q_ref[...], b2q_ref[...])
        # shuffle -> encoder_k -> unshuffle is exactly encoder_k for a row-wise
        # encoder (no BatchNorm) at world size 1, so the permutation is dropped.
        k = _encode(imk_ref[...], w1k, b1k, w2k, b2k)

        q_s = q * (1.0 / TEMP)                    # fold 1/T into q once (N*DIM elems)
        qs_ref[...] = q_s.astype(jnp.bfloat16)    # persists across the K-tile grid
        kv_ref[...] = k                           # new keys, to be enqueued at the end
        lpos_ref[...] = jnp.sum(q_s * k, axis=1, keepdims=True)

    # ---- every tile: lane-dense l_neg slab with double-buffered queue DMA ----
    slot = j % 2
    pltpu.make_async_copy(queue_hbm.at[pl.ds(0, tk), :], qbuf_ref.at[slot],
                          fetch_sem.at[slot]).wait()

    @pl.when(j + 1 < n_tiles)
    def _():
        start_fetch(j + 1, 1 - slot)

    # q_scaled @ queue_tile.T : bf16 operands, f32 accumulation; the per-tile
    # (TK, DIM) transpose runs on the XLU and overlaps the MXU passes.
    lneg_ref[...] = jax.lax.dot_general(
        qs_ref[...], qbuf_ref[slot].astype(jnp.bfloat16),
        dimension_numbers=(((1,), (1,)), ((), ())),
        preferred_element_type=jnp.float32)

    # ---- last tile: enqueue ONLY the N new key rows ---------------------------
    # All queue-tile reads have completed (last fetch waited above), so the
    # in-place row write cannot be observed by l_neg (matches reference order).
    @pl.when(j == n_tiles - 1)
    def _():
        ptr = ptr_ref[0]
        cp = pltpu.make_async_copy(kv_ref, queue_out.at[pl.ds(ptr, n), :],
                                   enq_sem.at[0])
        cp.start()
        cp.wait()


def init_moco_params(key, in_features):
    k1, k2, kq = jax.random.split(key, 3)
    w1 = jax.random.normal(k1, (in_features, HIDDEN), jnp.float32) * 0.02
    b1 = jnp.zeros((1, HIDDEN), jnp.float32)
    w2 = jax.random.normal(k2, (HIDDEN, DIM), jnp.float32) * 0.02
    b2 = jnp.zeros((1, DIM), jnp.float32)
    params_q = (w1, b1, w2, b2)
    # param_k.data.copy_(param_q.data) -> independent buffers so params_k is donatable
    params_k = tuple(jnp.array(p, copy=True) for p in params_q)
    # Reference: queue = normalize(randn(dim, K), dim=0).  Stored row-major as
    # (K, dim) so the ring-buffer enqueue is one contiguous N-row DMA.
    q0 = jax.random.normal(kq, (DIM, K_QUEUE), jnp.float32)
    q0 = q0 / jnp.maximum(jnp.sqrt(jnp.sum(q0 * q0, axis=0, keepdims=True)), 1e-12)
    queue_t = jnp.asarray(q0.T)                  # (K, DIM)
    queue_ptr = jnp.zeros((1,), jnp.int32)
    return params_q, params_k, queue_t, queue_ptr


def _moco_forward_impl(im_q, im_k, params_q, params_k, queue, queue_ptr):
    n = im_q.shape[0]
    f = int(np.prod(im_q.shape[1:]))
    imq = im_q.reshape(n, f)
    imk = im_k.reshape(n, f)
    w1q, b1q, w2q, b2q = params_q
    w1k, b1k, w2k, b2k = params_k

    grid = (K_QUEUE // TK,)
    full = lambda shape: pl.BlockSpec(shape, lambda j: (0,) * len(shape))
    in_specs = [
        full((n, f)),                                      # im_q
        full((n, f)),                                      # im_k
        pl.BlockSpec(memory_space=pltpu.MemorySpace.SMEM), # queue_ptr
        full(w1q.shape), full(b1q.shape), full(w2q.shape), full(b2q.shape),
        full(w1k.shape), full(b1k.shape), full(w2k.shape), full(b2k.shape),
        pl.BlockSpec(memory_space=pl.ANY),                 # queue (raw HBM)
    ]
    out_specs = [
        full((n, 1)),                                      # l_pos
        pl.BlockSpec((n, TK), lambda j: (0, j)),           # l_neg tiles (lane dense)
        full(w1k.shape), full(b1k.shape), full(w2k.shape), full(b2k.shape),
        pl.BlockSpec(memory_space=pl.ANY),                 # queue_new (aliased, DMA only)
    ]
    out_shape = (
        jax.ShapeDtypeStruct((n, 1), jnp.float32),
        jax.ShapeDtypeStruct((n, K_QUEUE), jnp.float32),
        jax.ShapeDtypeStruct(w1k.shape, w1k.dtype),
        jax.ShapeDtypeStruct(b1k.shape, b1k.dtype),
        jax.ShapeDtypeStruct(w2k.shape, w2k.dtype),
        jax.ShapeDtypeStruct(b2k.shape, b2k.dtype),
        jax.ShapeDtypeStruct(queue.shape, queue.dtype),
    )
    scratch_shapes = [
        pltpu.VMEM((n, DIM), jnp.bfloat16),       # q * (1/T)
        pltpu.VMEM((n, DIM), jnp.float32),        # new keys
        pltpu.VMEM((2, TK, DIM), jnp.float32),    # queue tile double buffer
        pltpu.SemaphoreType.DMA((2,)),
        pltpu.SemaphoreType.DMA((1,)),
    ]

    fused = pl.pallas_call(
        _moco_fused_kernel,
        out_shape=out_shape,
        grid_spec=pltpu.PrefetchScalarGridSpec(
            num_scalar_prefetch=0,
            grid=grid,
            in_specs=in_specs,
            out_specs=out_specs,
            scratch_shapes=scratch_shapes,
        ),
        # key-encoder params (EMA) and queue (ring buffer) are updated in place.
        input_output_aliases={7: 2, 8: 3, 9: 4, 10: 5, 11: 6},
        compiler_params=pltpu.CompilerParams(
            # "arbitrary": q_s / k live in scratch across the K tiles.
            dimension_semantics=("arbitrary",),
            vmem_limit_bytes=32 * 1024 * 1024,
        ),
    )
    l_pos, l_neg, w1k_n, b1k_n, w2k_n, b2k_n, queue_n = fused(
        imq, imk, queue_ptr, w1q, b1q, w2q, b2q, w1k, b1k, w2k, b2k, queue)

    # Reference layout: positive logit in column 0, labels all zero.
    logits = jnp.concatenate([l_pos, l_neg], axis=1)       # already scaled by 1/T
    labels = jnp.zeros((n,), jnp.int32)                    # torch.long -> int32 on TPU
    new_ptr = (queue_ptr + n) % K_QUEUE
    return logits, labels, ((w1k_n, b1k_n, w2k_n, b2k_n), queue_n, new_ptr)


# Single jit (no nesting) so donation reaches the pallas_call's aliased buffers.
moco_forward = jax.jit(_moco_forward_impl, donate_argnums=(3, 4))


# ---- pure-JAX reference (same math, PyTorch op order) for validation --------
def moco_forward_ref(im_q, im_k, params_q, params_k, queue, queue_ptr):
    n = im_q.shape[0]
    xq = im_q.reshape(n, -1)
    xk = im_k.reshape(n, -1)
    new_k = tuple(pk * M_MOM + pq * (1.0 - M_MOM) for pk, pq in zip(params_k, params_q))
    q = _encode(xq, *params_q)
    k = _encode(xk, *new_k)
    l_pos = jnp.sum(q * k, axis=1, keepdims=True)
    l_neg = jax.lax.dot_general(q.astype(jnp.bfloat16), queue.astype(jnp.bfloat16),
                                dimension_numbers=(((1,), (1,)), ((), ())),
                                preferred_element_type=jnp.float32)
    logits = jnp.concatenate([l_pos, l_neg], axis=1) / TEMP
    ptr = int(queue_ptr[0])
    queue_new = queue.at[ptr:ptr + n, :].set(k)
    return logits, new_k, queue_new


if __name__ == "__main__":
    key = jax.random.PRNGKey(0)
    k_img_q, k_img_k, k_params = jax.random.split(key, 3)

    N, C, H, W = 8, 3, 16, 16                       # K_QUEUE % N == 0
    im_q = jax.random.normal(k_img_q, (N, C, H, W), jnp.float32)
    im_k = jax.random.normal(k_img_k, (N, C, H, W), jnp.float32)

    params_q, params_k, queue_t, queue_ptr = init_moco_params(k_params, C * H * W)

    # Reference for step 1 computed BEFORE the donating call consumes the state.
    ref_logits, ref_params_k, ref_queue = jax.block_until_ready(
        moco_forward_ref(im_q, im_k, params_q, params_k, queue_t, queue_ptr))

    # step 1
    logits, labels, (params_k, queue_t, queue_ptr) = moco_forward(
        im_q, im_k, params_q, params_k, queue_t, queue_ptr)
    jax.block_until_ready((logits, labels, params_k, queue_t, queue_ptr))

    assert logits.shape == (N, 1 + K_QUEUE)
    assert labels.shape == (N,) and bool(jnp.all(labels == 0))
    assert bool(jnp.all(jnp.isfinite(logits)))
    # bf16 MXU + 1/T-folding order => small tolerance vs the f32-ordered reference.
    assert np.allclose(np.asarray(logits), np.asarray(ref_logits), atol=0.15, rtol=0.02)
    for got, want in zip(params_k, ref_params_k):
        assert np.allclose(np.asarray(got), np.asarray(want), atol=1e-5)
    assert np.allclose(np.asarray(queue_t), np.asarray(ref_queue), atol=5e-3)
    assert int(queue_ptr[0]) == N % K_QUEUE

    # step 2: exercises the donated in-place EMA / ring-buffer path again
    logits, labels, (params_k, queue_t, queue_ptr) = moco_forward(
        im_q, im_k, params_q, params_k, queue_t, queue_ptr)
    jax.block_until_ready((logits, labels, params_k, queue_t, queue_ptr))
    assert bool(jnp.all(jnp.isfinite(logits)))
    assert int(queue_ptr[0]) == (2 * N) % K_QUEUE

    print("KERNEL_OK")
</pallas_src>

<mosaic_0001>
module attributes {stable_mosaic.version = 11 : i64} {
  func.func @_moco_fused_kernel(%arg0: i32, %arg1: memref<8x768xf32, #tpu.memory_space<vmem>>, %arg2: memref<8x768xf32, #tpu.memory_space<vmem>>, %arg3: memref<1xi32, #tpu.memory_space<smem>>, %arg4: memref<768x256xf32, #tpu.memory_space<vmem>>, %arg5: memref<1x256xf32, #tpu.memory_space<vmem>>, %arg6: memref<256x128xf32, #tpu.memory_space<vmem>>, %arg7: memref<1x128xf32, #tpu.memory_space<vmem>>, %arg8: memref<768x256xf32, #tpu.memory_space<vmem>>, %arg9: memref<1x256xf32, #tpu.memory_space<vmem>>, %arg10: memref<256x128xf32, #tpu.memory_space<vmem>>, %arg11: memref<1x128xf32, #tpu.memory_space<vmem>>, %arg12: memref<256x128xf32, #tpu.memory_space<any>>, %arg13: memref<8x1xf32, #tpu.memory_space<vmem>>, %arg14: memref<8x128xf32, #tpu.memory_space<vmem>>, %arg15: memref<768x256xf32, #tpu.memory_space<vmem>>, %arg16: memref<1x256xf32, #tpu.memory_space<vmem>>, %arg17: memref<256x128xf32, #tpu.memory_space<vmem>>, %arg18: memref<1x128xf32, #tpu.memory_space<vmem>>, %arg19: memref<256x128xf32, #tpu.memory_space<any>>, %arg20: memref<8x128xbf16, #tpu.memory_space<vmem>>, %arg21: memref<8x128xf32, #tpu.memory_space<vmem>>, %arg22: memref<2x128x128xf32, #tpu.memory_space<vmem>>, %arg23: memref<2x!tpu.dma_semaphore, #tpu.memory_space<semaphore_mem>>, %arg24: memref<1x!tpu.dma_semaphore, #tpu.memory_space<semaphore_mem>>) attributes {dimension_semantics = [#tpu.dimension_semantics<arbitrary>], iteration_bounds = array<i64: 2>, scalar_prefetch = 0 : i64, scratch_operands = 5 : i64, tpu.core_type = #tpu.core_type<tc>, window_params = [{pipeline_mode = #tpu.pipeline_mode<synchronous>, transform_indices = @transform_0, window_bounds = array<i64: 8, 768>}, {pipeline_mode = #tpu.pipeline_mode<synchronous>, transform_indices = @transform_1, window_bounds = array<i64: 8, 768>}, {transform_indices = @transform_2, window_bounds = array<i64: 1>}, {pipeline_mode = #tpu.pipeline_mode<synchronous>, transform_indices = @transform_3, window_bounds = array<i64: 768, 256>}, {pipeline_mode = #tpu.pipeline_mode<synchronous>, transform_indices = @transform_4, window_bounds = array<i64: 1, 256>}, {pipeline_mode = #tpu.pipeline_mode<synchronous>, transform_indices = @transform_5, window_bounds = array<i64: 256, 128>}, {pipeline_mode = #tpu.pipeline_mode<synchronous>, transform_indices = @transform_6, window_bounds = array<i64: 1, 128>}, {pipeline_mode = #tpu.pipeline_mode<synchronous>, transform_indices = @transform_7, window_bounds = array<i64: 768, 256>}, {pipeline_mode = #tpu.pipeline_mode<synchronous>, transform_indices = @transform_8, window_bounds = array<i64: 1, 256>}, {pipeline_mode = #tpu.pipeline_mode<synchronous>, transform_indices = @transform_9, window_bounds = array<i64: 256, 128>}, {pipeline_mode = #tpu.pipeline_mode<synchronous>, transform_indices = @transform_10, window_bounds = array<i64: 1, 128>}, {}, {pipeline_mode = #tpu.pipeline_mode<synchronous>, transform_indices = @transform_12, window_bounds = array<i64: 8, 1>}, {transform_indices = @transform_13, window_bounds = array<i64: 8, 128>}, {pipeline_mode = #tpu.pipeline_mode<synchronous>, transform_indices = @transform_14, window_bounds = array<i64: 768, 256>}, {pipeline_mode = #tpu.pipeline_mode<synchronous>, transform_indices = @transform_15, window_bounds = array<i64: 1, 256>}, {pipeline_mode = #tpu.pipeline_mode<synchronous>, transform_indices = @transform_16, window_bounds = array<i64: 256, 128>}, {pipeline_mode = #tpu.pipeline_mode<synchronous>, transform_indices = @transform_17, window_bounds = array<i64: 1, 128>}, {}]} {
    %c0_i32 = arith.constant 0 : i32
    %0 = arith.cmpi eq, %arg0, %c0_i32 : i32
    %1 = arith.extui %0 : i1 to i32
    %c0_i32_0 = arith.constant 0 : i32
    %2 = arith.cmpi ne, %1, %c0_i32_0 : i32
    scf.if %2 {
      %c0_i32_19 = arith.constant 0 : i32
      %c0_i32_20 = arith.constant 0 : i32
      %c0_i32_21 = arith.constant 0 : i32
      %c0_i32_22 = arith.constant 0 : i32
      %32 = tpu.memref_slice %arg12[%c0_i32_21, %c0_i32_22] : memref<256x128xf32, #tpu.memory_space<any>> -> memref<128x128xf32, #tpu.memory_space<any>>
      %c0_i32_23 = arith.constant 0 : i32
      %c0_i32_24 = arith.constant 0 : i32
      %33 = tpu.memref_slice %arg22[%c0_i32_19, %c0_i32_23, %c0_i32_24] : memref<2x128x128xf32, #tpu.memory_space<vmem>> -> memref<1x128x128xf32, #tpu.memory_space<vmem>>
      %34 = tpu.memref_squeeze %33 : memref<1x128x128xf32, #tpu.memory_space<vmem>> -> memref<128x128xf32, #tpu.memory_space<vmem>>
      %35 = tpu.memref_slice %arg23[%c0_i32_20] : memref<2x!tpu.dma_semaphore, #tpu.memory_space<semaphore_mem>> -> memref<1x!tpu.dma_semaphore, #tpu.memory_space<semaphore_mem>>
      %36 = tpu.memref_squeeze %35 : memref<1x!tpu.dma_semaphore, #tpu.memory_space<semaphore_mem>> -> memref<!tpu.dma_semaphore, #tpu.memory_space<semaphore_mem>>
      tpu.enqueue_dma source(%32 : memref<128x128xf32, #tpu.memory_space<any>>) target(%34 : memref<128x128xf32, #tpu.memory_space<vmem>>) target_semaphore(%36 : memref<!tpu.dma_semaphore, #tpu.memory_space<semaphore_mem>>)
      %c0_25 = arith.constant 0 : index
      %c0_26 = arith.constant 0 : index
      %37 = vector.load %arg8[%c0_25, %c0_26] : memref<768x256xf32, #tpu.memory_space<vmem>>, vector<768x256xf32>
      %cst_27 = arith.constant 9.990000e-01 : f32
      %38 = vector.broadcast %cst_27 : f32 to vector<768x256xf32>
      %39 = arith.mulf %37, %38 : vector<768x256xf32>
      %c0_28 = arith.constant 0 : index
      %c0_29 = arith.constant 0 : index
      %40 = vector.load %arg4[%c0_28, %c0_29] : memref<768x256xf32, #tpu.memory_space<vmem>>, vector<768x256xf32>
      %cst_30 = arith.constant 1.000000e-03 : f32
      %41 = vector.broadcast %cst_30 : f32 to vector<768x256xf32>
      %42 = arith.mulf %40, %41 : vector<768x256xf32>
      %43 = arith.addf %39, %42 : vector<768x256xf32>
      %c0_31 = arith.constant 0 : index
      %c0_32 = arith.constant 0 : index
      %44 = vector.load %arg9[%c0_31, %c0_32] : memref<1x256xf32, #tpu.memory_space<vmem>>, vector<1x256xf32>
      %cst_33 = arith.constant 9.990000e-01 : f32
      %45 = vector.broadcast %cst_33 : f32 to vector<1x256xf32>
      %46 = arith.mulf %44, %45 : vector<1x256xf32>
      %c0_34 = arith.constant 0 : index
      %c0_35 = arith.constant 0 : index
      %47 = vector.load %arg5[%c0_34, %c0_35] : memref<1x256xf32, #tpu.memory_space<vmem>>, vector<1x256xf32>
      %cst_36 = arith.constant 1.000000e-03 : f32
      %48 = vector.broadcast %cst_36 : f32 to vector<1x256xf32>
      %49 = arith.mulf %47, %48 : vector<1x256xf32>
      %50 = arith.addf %46, %49 : vector<1x256xf32>
      %c0_37 = arith.constant 0 : index
      %c0_38 = arith.constant 0 : index
      %51 = vector.load %arg10[%c0_37, %c0_38] : memref<256x128xf32, #tpu.memory_space<vmem>>, vector<256x128xf32>
      %cst_39 = arith.constant 9.990000e-01 : f32
      %52 = vector.broadcast %cst_39 : f32 to vector<256x128xf32>
      %53 = arith.mulf %51, %52 : vector<256x128xf32>
      %c0_40 = arith.constant 0 : index
      %c0_41 = arith.constant 0 : index
      %54 = vector.load %arg6[%c0_40, %c0_41] : memref<256x128xf32, #tpu.memory_space<vmem>>, vector<256x128xf32>
      %cst_42 = arith.constant 1.000000e-03 : f32
      %55 = vector.broadcast %cst_42 : f32 to vector<256x128xf32>
      %56 = arith.mulf %54, %55 : vector<256x128xf32>
      %57 = arith.addf %53, %56 : vector<256x128xf32>
      %c0_43 = arith.constant 0 : index
      %c0_44 = arith.constant 0 : index
      %58 = vector.load %arg11[%c0_43, %c0_44] : memref<1x128xf32, #tpu.memory_space<vmem>>, vector<1x128xf32>
      %cst_45 = arith.constant 9.990000e-01 : f32
      %59 = vector.broadcast %cst_45 : f32 to vector<1x128xf32>
      %60 = arith.mulf %58, %59 : vector<1x128xf32>
      %c0_46 = arith.constant 0 : index
      %c0_47 = arith.constant 0 : index
      %61 = vector.load %arg7[%c0_46, %c0_47] : memref<1x128xf32, #tpu.memory_space<vmem>>, vector<1x128xf32>
      %cst_48 = arith.constant 1.000000e-03 : f32
      %62 = vector.broadcast %cst_48 : f32 to vector<1x128xf32>
      %63 = arith.mulf %61, %62 : vector<1x128xf32>
      %64 = arith.addf %60, %63 : vector<1x128xf32>
      %c0_49 = arith.constant 0 : index
      %c0_50 = arith.constant 0 : index
      %65 = vector.load %arg15[%c0_49, %c0_50] : memref<768x256xf32, #tpu.memory_space<vmem>>, vector<768x256xf32>
      tpu.vector_store %arg15[%c0_49, %c0_50], %43 {strides = array<i32>} : memref<768x256xf32, #tpu.memory_space<vmem>>, vector<768x256xf32>,
      %c0_51 = arith.constant 0 : index
      %c0_52 = arith.constant 0 : index
      %66 = vector.load %arg16[%c0_51, %c0_52] : memref<1x256xf32, #tpu.memory_space<vmem>>, vector<1x256xf32>
      tpu.vector_store %arg16[%c0_51, %c0_52], %50 {strides = array<i32>} : memref<1x256xf32, #tpu.memory_space<vmem>>, vector<1x256xf32>,
      %c0_53 = arith.constant 0 : index
      %c0_54 = arith.constant 0 : index
      %67 = vector.load %arg17[%c0_53, %c0_54] : memref<256x128xf32, #tpu.memory_space<vmem>>, vector<256x128xf32>
      tpu.vector_store %arg17[%c0_53, %c0_54], %57 {strides = array<i32>} : memref<256x128xf32, #tpu.memory_space<vmem>>, vector<256x128xf32>,
      %c0_55 = arith.constant 0 : index
      %c0_56 = arith.constant 0 : index
      %68 = vector.load %arg18[%c0_55, %c0_56] : memref<1x128xf32, #tpu.memory_space<vmem>>, vector<1x128xf32>
      tpu.vector_store %arg18[%c0_55, %c0_56], %64 {strides = array<i32>} : memref<1x128xf32, #tpu.memory_space<vmem>>, vector<1x128xf32>,
      %c0_57 = arith.constant 0 : index
      %c0_58 = arith.constant 0 : index
      %69 = vector.load %arg1[%c0_57, %c0_58] : memref<8x768xf32, #tpu.memory_space<vmem>>, vector<8x768xf32>
      %c0_59 = arith.constant 0 : index
      %c0_60 = arith.constant 0 : index
      %70 = vector.load %arg4[%c0_59, %c0_60] : memref<768x256xf32, #tpu.memory_space<vmem>>, vector<768x256xf32>
      %c0_61 = arith.constant 0 : index
      %c0_62 = arith.constant 0 : index
      %71 = vector.load %arg5[%c0_61, %c0_62] : memref<1x256xf32, #tpu.memory_space<vmem>>, vector<1x256xf32>
      %c0_63 = arith.constant 0 : index
      %c0_64 = arith.constant 0 : index
      %72 = vector.load %arg6[%c0_63, %c0_64] : memref<256x128xf32, #tpu.memory_space<vmem>>, vector<256x128xf32>
      %c0_65 = arith.constant 0 : index
      %c0_66 = arith.constant 0 : index
      %73 = vector.load %arg7[%c0_65, %c0_66] : memref<1x128xf32, #tpu.memory_space<vmem>>, vector<1x128xf32>
      %74 = arith.truncf %69 : vector<8x768xf32> to vector<8x768xbf16>
      %75 = arith.truncf %70 : vector<768x256xf32> to vector<768x256xbf16>
      %cst_67 = arith.constant dense<0.000000e+00> : vector<8x256xf32>
      %76 = tpu.matmul %74, %75, %cst_67 {dimension_numbers = #tpu.dot_dimension_numbers<[1], [0], [0], [1], [0, 0, 1, 1], [], []>} : vector<8x768xbf16>, vector<768x256xbf16>, vector<8x256xf32> -> vector<8x256xf32>
      %77 = vector.broadcast %71 : vector<1x256xf32> to vector<8x256xf32>
      %78 = arith.addf %76, %77 : vector<8x256xf32>
      %cst_68 = arith.constant 0.000000e+00 : f32
      %79 = vector.broadcast %cst_68 : f32 to vector<8x256xf32>
      %80 = arith.maximumf %78, %79 : vector<8x256xf32>
      %81 = arith.truncf %80 : vector<8x256xf32> to vector<8x256xbf16>
      %82 = arith.truncf %72 : vector<256x128xf32> to vector<256x128xbf16>
      %cst_69 = arith.constant dense<0.000000e+00> : vector<8x128xf32>
      %83 = tpu.matmul %81, %82, %cst_69 {dimension_numbers = #tpu.dot_dimension_numbers<[1], [0], [0], [1], [0, 0, 1, 1], [], []>} : vector<8x256xbf16>, vector<256x128xbf16>, vector<8x128xf32> -> vector<8x128xf32>
      %84 = vector.broadcast %73 : vector<1x128xf32> to vector<8x128xf32>
      %85 = arith.addf %83, %84 : vector<8x128xf32>
      %86 = arith.mulf %85, %85 : vector<8x128xf32>
      %cst_70 = arith.constant dense<0.000000e+00> : vector<8xf32>
      %87 = vector.multi_reduction <add>, %86, %cst_70 [1] : vector<8x128xf32> to vector<8xf32>
      %88 = vector.shape_cast %87 : vector<8xf32> to vector<8x1xf32>
      %cst_71 = arith.constant 1.000000e-24 : f32
      %89 = vector.broadcast %cst_71 : f32 to vector<8x1xf32>
      %90 = arith.maximumf %88, %89 : vector<8x1xf32>
      %91 = math.rsqrt %90 : vector<8x1xf32>
      %92 = vector.broadcast %91 : vector<8x1xf32> to vector<8x128xf32>
      %93 = arith.mulf %85, %92 : vector<8x128xf32>
      %c0_72 = arith.constant 0 : index
      %c0_73 = arith.constant 0 : index
      %94 = vector.load %arg2[%c0_72, %c0_73] : memref<8x768xf32, #tpu.memory_space<vmem>>, vector<8x768xf32>
      %95 = arith.truncf %94 : vector<8x768xf32> to vector<8x768xbf16>
      %96 = arith.truncf %43 : vector<768x256xf32> to vector<768x256xbf16>
      %cst_74 = arith.constant dense<0.000000e+00> : vector<8x256xf32>
      %97 = tpu.matmul %95, %96, %cst_74 {dimension_numbers = #tpu.dot_dimension_numbers<[1], [0], [0], [1], [0, 0, 1, 1], [], []>} : vector<8x768xbf16>, vector<768x256xbf16>, vector<8x256xf32> -> vector<8x256xf32>
      %98 = vector.broadcast %50 : vector<1x256xf32> to vector<8x256xf32>
      %99 = arith.addf %97, %98 : vector<8x256xf32>
      %cst_75 = arith.constant 0.000000e+00 : f32
      %100 = vector.broadcast %cst_75 : f32 to vector<8x256xf32>
      %101 = arith.maximumf %99, %100 : vector<8x256xf32>
      %102 = arith.truncf %101 : vector<8x256xf32> to vector<8x256xbf16>
      %103 = arith.truncf %57 : vector<256x128xf32> to vector<256x128xbf16>
      %cst_76 = arith.constant dense<0.000000e+00> : vector<8x128xf32>
      %104 = tpu.matmul %102, %103, %cst_76 {dimension_numbers = #tpu.dot_dimension_numbers<[1], [0], [0], [1], [0, 0, 1, 1], [], []>} : vector<8x256xbf16>, vector<256x128xbf16>, vector<8x128xf32> -> vector<8x128xf32>
      %105 = vector.broadcast %64 : vector<1x128xf32> to vector<8x128xf32>
      %106 = arith.addf %104, %105 : vector<8x128xf32>
      %107 = arith.mulf %106, %106 : vector<8x128xf32>
      %cst_77 = arith.constant dense<0.000000e+00> : vector<8xf32>
      %108 = vector.multi_reduction <add>, %107, %cst_77 [1] : vector<8x128xf32> to vector<8xf32>
      %109 = vector.shape_cast %108 : vector<8xf32> to vector<8x1xf32>
      %cst_78 = arith.constant 1.000000e-24 : f32
      %110 = vector.broadcast %cst_78 : f32 to vector<8x1xf32>
      %111 = arith.maximumf %109, %110 : vector<8x1xf32>
      %112 = math.rsqrt %111 : vector<8x1xf32>
      %113 = vector.broadcast %112 : vector<8x1xf32> to vector<8x128xf32>
      %114 = arith.mulf %106, %113 : vector<8x128xf32>
      %cst_79 = arith.constant 14.2857141 : f32
      %115 = vector.broadcast %cst_79 : f32 to vector<8x128xf32>
      %116 = arith.mulf %93, %115 : vector<8x128xf32>
      %117 = arith.truncf %116 : vector<8x128xf32> to vector<8x128xbf16>
      %c0_80 = arith.constant 0 : index
      %c0_81 = arith.constant 0 : index
      %118 = vector.load %arg20[%c0_80, %c0_81] : memref<8x128xbf16, #tpu.memory_space<vmem>>, vector<8x128xbf16>
      tpu.vector_store %arg20[%c0_80, %c0_81], %117 {strides = array<i32>} : memref<8x128xbf16, #tpu.memory_space<vmem>>, vector<8x128xbf16>,
      %c0_82 = arith.constant 0 : index
      %c0_83 = arith.constant 0 : index
      %119 = vector.load %arg21[%c0_82, %c0_83] : memref<8x128xf32, #tpu.memory_space<vmem>>, vector<8x128xf32>
      tpu.vector_store %arg21[%c0_82, %c0_83], %114 {strides = array<i32>} : memref<8x128xf32, #tpu.memory_space<vmem>>, vector<8x128xf32>,
      %120 = arith.mulf %116, %114 : vector<8x128xf32>
      %cst_84 = arith.constant dense<0.000000e+00> : vector<8xf32>
      %121 = vector.multi_reduction <add>, %120, %cst_84 [1] : vector<8x128xf32> to vector<8xf32>
      %122 = vector.shape_cast %121 : vector<8xf32> to vector<8x1xf32>
      %c0_85 = arith.constant 0 : index
      %c0_86 = arith.constant 0 : index
      %123 = vector.load %arg13[%c0_85, %c0_86] : memref<8x1xf32, #tpu.memory_space<vmem>>, vector<8x1xf32>
      tpu.vector_store %arg13[%c0_85, %c0_86], %122 {strides = array<i32>} : memref<8x1xf32, #tpu.memory_space<vmem>>, vector<8x1xf32>,
    } else {
    }
    %c2_i32 = arith.constant 2 : i32
    %c0_i32_1 = arith.constant 0 : i32
    %3 = arith.cmpi eq, %c2_i32, %c0_i32_1 : i32
    %c1_i32 = arith.constant 1 : i32
    %4 = arith.select %3, %c1_i32, %c2_i32 : i32
    %5 = arith.remsi %arg0, %4 : i32
    %c0_i32_2 = arith.constant 0 : i32
    %6 = arith.cmpi ne, %5, %c0_i32_2 : i32
    %c0_i32_3 = arith.constant 0 : i32
    %7 = arith.cmpi slt, %5, %c0_i32_3 : i32
    %c0_i32_4 = arith.constant 0 : i32
    %8 = arith.cmpi slt, %4, %c0_i32_4 : i32
    %9 = arith.xori %7, %8 : i1
    %10 = arith.andi %9, %6 : i1
    %11 = arith.addi %5, %4 : i32
    %12 = arith.select %10, %11, %5 : i32
    %c0_i32_5 = arith.constant 0 : i32
    %c0_i32_6 = arith.constant 0 : i32
    %13 = tpu.memref_slice %arg12[%c0_i32_5, %c0_i32_6] : memref<256x128xf32, #tpu.memory_space<any>> -> memref<128x128xf32, #tpu.memory_space<any>>
    %c0_i32_7 = arith.constant 0 : i32
    %c0_i32_8 = arith.constant 0 : i32
    %14 = tpu.memref_slice %arg22[%12, %c0_i32_7, %c0_i32_8] : memref<2x128x128xf32, #tpu.memory_space<vmem>> -> memref<1x128x128xf32, #tpu.memory_space<vmem>>
    %15 = tpu.memref_squeeze %14 : memref<1x128x128xf32, #tpu.memory_space<vmem>> -> memref<128x128xf32, #tpu.memory_space<vmem>>
    %16 = tpu.memref_slice %arg23[%12] : memref<2x!tpu.dma_semaphore, #tpu.memory_space<semaphore_mem>> -> memref<1x!tpu.dma_semaphore, #tpu.memory_space<semaphore_mem>>
    %17 = tpu.memref_squeeze %16 : memref<1x!tpu.dma_semaphore, #tpu.memory_space<semaphore_mem>> -> memref<!tpu.dma_semaphore, #tpu.memory_space<semaphore_mem>>
    tpu.wait_dma2 semaphore(%17 : memref<!tpu.dma_semaphore, #tpu.memory_space<semaphore_mem>>) src(%13 : memref<128x128xf32, #tpu.memory_space<any>>) dst(%15 : memref<128x128xf32, #tpu.memory_space<vmem>>)
    %c1_i32_9 = arith.constant 1 : i32
    %18 = arith.addi %arg0, %c1_i32_9 : i32
    %c2_i32_10 = arith.constant 2 : i32
    %19 = arith.cmpi slt, %18, %c2_i32_10 : i32
    %20 = arith.extui %19 : i1 to i32
    %c0_i32_11 = arith.constant 0 : i32
    %21 = arith.cmpi ne, %20, %c0_i32_11 : i32
    scf.if %21 {
      %c1_i32_19 = arith.constant 1 : i32
      %32 = arith.addi %arg0, %c1_i32_19 : i32
      %c1_i32_20 = arith.constant 1 : i32
      %33 = arith.subi %c1_i32_20, %12 : i32
      %c128_i32 = arith.constant 128 : i32
      %34 = arith.muli %32, %c128_i32 : i32
      %c0_i32_21 = arith.constant 0 : i32
      %35 = tpu.memref_slice %arg12[%34, %c0_i32_21] : memref<256x128xf32, #tpu.memory_space<any>> -> memref<128x128xf32, #tpu.memory_space<any>>
      %c0_i32_22 = arith.constant 0 : i32
      %c0_i32_23 = arith.constant 0 : i32
      %36 = tpu.memref_slice %arg22[%33, %c0_i32_22, %c0_i32_23] : memref<2x128x128xf32, #tpu.memory_space<vmem>> -> memref<1x128x128xf32, #tpu.memory_space<vmem>>
      %37 = tpu.memref_squeeze %36 : memref<1x128x128xf32, #tpu.memory_space<vmem>> -> memref<128x128xf32, #tpu.memory_space<vmem>>
      %38 = tpu.memref_slice %arg23[%33] : memref<2x!tpu.dma_semaphore, #tpu.memory_space<semaphore_mem>> -> memref<1x!tpu.dma_semaphore, #tpu.memory_space<semaphore_mem>>
      %39 = tpu.memref_squeeze %38 : memref<1x!tpu.dma_semaphore, #tpu.memory_space<semaphore_mem>> -> memref<!tpu.dma_semaphore, #tpu.memory_space<semaphore_mem>>
      tpu.enqueue_dma source(%35 : memref<128x128xf32, #tpu.memory_space<any>>) target(%37 : memref<128x128xf32, #tpu.memory_space<vmem>>) target_semaphore(%39 : memref<!tpu.dma_semaphore, #tpu.memory_space<semaphore_mem>>)
    } else {
    }
    %c0 = arith.constant 0 : index
    %c0_12 = arith.constant 0 : index
    %22 = vector.load %arg20[%c0, %c0_12] : memref<8x128xbf16, #tpu.memory_space<vmem>>, vector<8x128xbf16>
    %23 = arith.index_cast %12 : i32 to index
    %c0_13 = arith.constant 0 : index
    %c0_14 = arith.constant 0 : index
    %24 = vector.load %arg22[%23, %c0_13, %c0_14] : memref<2x128x128xf32, #tpu.memory_space<vmem>>, vector<1x128x128xf32>
    %25 = vector.shape_cast %24 : vector<1x128x128xf32> to vector<128x128xf32>
    %26 = arith.truncf %25 : vector<128x128xf32> to vector<128x128xbf16>
    %cst = arith.constant dense<0.000000e+00> : vector<8x128xf32>
    %27 = tpu.matmul %22, %26, %cst {dimension_numbers = #tpu.dot_dimension_numbers<[1], [1], [0], [0], [0, 0, 1, 0], [], []>} : vector<8x128xbf16>, vector<128x128xbf16>, vector<8x128xf32> -> vector<8x128xf32>
    %c0_15 = arith.constant 0 : index
    %c0_16 = arith.constant 0 : index
    %28 = vector.load %arg14[%c0_15, %c0_16] : memref<8x128xf32, #tpu.memory_space<vmem>>, vector<8x128xf32>
    tpu.vector_store %arg14[%c0_15, %c0_16], %27 {strides = array<i32>} : memref<8x128xf32, #tpu.memory_space<vmem>>, vector<8x128xf32>,
    %c1_i32_17 = arith.constant 1 : i32
    %29 = arith.cmpi eq, %arg0, %c1_i32_17 : i32
    %30 = arith.extui %29 : i1 to i32
    %c0_i32_18 = arith.constant 0 : i32
    %31 = arith.cmpi ne, %30, %c0_i32_18 : i32
    scf.if %31 {
      %c0_19 = arith.constant 0 : index
      %32 = memref.load %arg3[%c0_19] : memref<1xi32, #tpu.memory_space<smem>>
      %c0_i32_20 = arith.constant 0 : i32
      %c0_i32_21 = arith.constant 0 : i32
      %33 = tpu.memref_slice %arg19[%32, %c0_i32_21] : memref<256x128xf32, #tpu.memory_space<any>> -> memref<8x128xf32, #tpu.memory_space<any>>
      %34 = tpu.memref_slice %arg24[%c0_i32_20] : memref<1x!tpu.dma_semaphore, #tpu.memory_space<semaphore_mem>> -> memref<1x!tpu.dma_semaphore, #tpu.memory_space<semaphore_mem>>
      %35 = tpu.memref_squeeze %34 : memref<1x!tpu.dma_semaphore, #tpu.memory_space<semaphore_mem>> -> memref<!tpu.dma_semaphore, #tpu.memory_space<semaphore_mem>>
      tpu.enqueue_dma source(%arg21 : memref<8x128xf32, #tpu.memory_space<vmem>>) target(%33 : memref<8x128xf32, #tpu.memory_space<any>>) target_semaphore(%35 : memref<!tpu.dma_semaphore, #tpu.memory_space<semaphore_mem>>)
      %c0_i32_22 = arith.constant 0 : i32
      %c0_i32_23 = arith.constant 0 : i32
      %36 = tpu.memref_slice %arg19[%32, %c0_i32_23] : memref<256x128xf32, #tpu.memory_space<any>> -> memref<8x128xf32, #tpu.memory_space<any>>
      %37 = tpu.memref_slice %arg24[%c0_i32_22] : memref<1x!tpu.dma_semaphore, #tpu.memory_space<semaphore_mem>> -> memref<1x!tpu.dma_semaphore, #tpu.memory_space<semaphore_mem>>
      %38 = tpu.memref_squeeze %37 : memref<1x!tpu.dma_semaphore, #tpu.memory_space<semaphore_mem>> -> memref<!tpu.dma_semaphore, #tpu.memory_space<semaphore_mem>>
      tpu.wait_dma2 semaphore(%38 : memref<!tpu.dma_semaphore, #tpu.memory_space<semaphore_mem>>) src(%arg21 : memref<8x128xf32, #tpu.memory_space<vmem>>) dst(%36 : memref<8x128xf32, #tpu.memory_space<any>>)
    } else {
    }
    return
  }
  func.func @transform_0(%arg0: i32) -> (i32, i32) {
    %c0_i32 = arith.constant 0 : i32
    %c0_i32_0 = arith.constant 0 : i32
    %c0_i32_1 = arith.constant 0 : i32
    return %c0_i32, %c0_i32_0 : i32, i32
  }
  func.func @transform_1(%arg0: i32) -> (i32, i32) {
    %c0_i32 = arith.constant 0 : i32
    %c0_i32_0 = arith.constant 0 : i32
    %c0_i32_1 = arith.constant 0 : i32
    return %c0_i32, %c0_i32_0 : i32, i32
  }
  func.func @transform_2(%arg0: i32) -> i32 {
    %c0_i32 = arith.constant 0 : i32
    %c0_i32_0 = arith.constant 0 : i32
    return %c0_i32 : i32
  }
  func.func @transform_3(%arg0: i32) -> (i32, i32) {
    %c0_i32 = arith.constant 0 : i32
    %c0_i32_0 = arith.constant 0 : i32
    %c0_i32_1 = arith.constant 0 : i32
    return %c0_i32, %c0_i32_0 : i32, i32
  }
  func.func @transform_4(%arg0: i32) -> (i32, i32) {
    %c0_i32 = arith.constant 0 : i32
    %c0_i32_0 = arith.constant 0 : i32
    %c0_i32_1 = arith.constant 0 : i32
    return %c0_i32, %c0_i32_0 : i32, i32
  }
  func.func @transform_5(%arg0: i32) -> (i32, i32) {
    %c0_i32 = arith.constant 0 : i32
    %c0_i32_0 = arith.constant 0 : i32
    %c0_i32_1 = arith.constant 0 : i32
    return %c0_i32, %c0_i32_0 : i32, i32
  }
  func.func @transform_6(%arg0: i32) -> (i32, i32) {
    %c0_i32 = arith.constant 0 : i32
    %c0_i32_0 = arith.constant 0 : i32
    %c0_i32_1 = arith.constant 0 : i32
    return %c0_i32, %c0_i32_0 : i32, i32
  }
  func.func @transform_7(%arg0: i32) -> (i32, i32) {
    %c0_i32 = arith.constant 0 : i32
    %c0_i32_0 = arith.constant 0 : i32
    %c0_i32_1 = arith.constant 0 : i32
    return %c0_i32, %c0_i32_0 : i32, i32
  }
  func.func @transform_8(%arg0: i32) -> (i32, i32) {
    %c0_i32 = arith.constant 0 : i32
    %c0_i32_0 = arith.constant 0 : i32
    %c0_i32_1 = arith.constant 0 : i32
    return %c0_i32, %c0_i32_0 : i32, i32
  }
  func.func @transform_9(%arg0: i32) -> (i32, i32) {
    %c0_i32 = arith.constant 0 : i32
    %c0_i32_0 = arith.constant 0 : i32
    %c0_i32_1 = arith.constant 0 : i32
    return %c0_i32, %c0_i32_0 : i32, i32
  }
  func.func @transform_10(%arg0: i32) -> (i32, i32) {
    %c0_i32 = arith.constant 0 : i32
    %c0_i32_0 = arith.constant 0 : i32
    %c0_i32_1 = arith.constant 0 : i32
    return %c0_i32, %c0_i32_0 : i32, i32
  }
  func.func @transform_12(%arg0: i32) -> (i32, i32) {
    %c0_i32 = arith.constant 0 : i32
    %c0_i32_0 = arith.constant 0 : i32
    %c0_i32_1 = arith.constant 0 : i32
    return %c0_i32, %c0_i32_0 : i32, i32
  }
  func.func @transform_13(%arg0: i32) -> (i32, i32) {
    %c0_i32 = arith.constant 0 : i32
    %c0_i32_0 = arith.constant 0 : i32
    return %c0_i32, %arg0 : i32, i32
  }
  func.func @transform_14(%arg0: i32) -> (i32, i32) {
    %c0_i32 = arith.constant 0 : i32
    %c0_i32_0 = arith.constant 0 : i32
    %c0_i32_1 = arith.constant 0 : i32
    return %c0_i32, %c0_i32_0 : i32, i32
  }
  func.func @transform_15(%arg0: i32) -> (i32, i32) {
    %c0_i32 = arith.constant 0 : i32
    %c0_i32_0 = arith.constant 0 : i32
    %c0_i32_1 = arith.constant 0 : i32
    return %c0_i32, %c0_i32_0 : i32, i32
  }
  func.func @transform_16(%arg0: i32) -> (i32, i32) {
    %c0_i32 = arith.constant 0 : i32
    %c0_i32_0 = arith.constant 0 : i32
    %c0_i32_1 = arith.constant 0 : i32
    return %c0_i32, %c0_i32_0 : i32, i32
  }
  func.func @transform_17(%arg0: i32) -> (i32, i32) {
    %c0_i32 = arith.constant 0 : i32
    %c0_i32_0 = arith.constant 0 : i32
    %c0_i32_1 = arith.constant 0 : i32
    return %c0_i32, %c0_i32_0 : i32, i32
  }
}

</mosaic_0001>

<llo_original>
// kernel: _moco_forward_impl.1
$region0: #{_moco_forward_impl.1}
  #allocation0 [shape = 'u32[]', space=smem, size = 0x4, offset = 0x4, fixed_abs, tag = 'smem constant byte address 0x4 - core index']
  #allocation1 [shape = 'u32[144,128]{1,0:T(1,128)}', space=vmem, size = 0x12000, scoped, tag = 'internal scratch']
  #allocation2 [shape = 'bf16[8,128]{1,0:T(8,128)(2,1)}', space=vmem, size = 0x800, scoped, tag = 'scratch operand']
  #allocation3 [shape = 'f32[8,128]{1,0:T(8,128)}', space=vmem, size = 0x1000, scoped, tag = 'scratch operand']
  #allocation4 [shape = 'f32[2,128,128]{2,1,0:T(8,128)}', space=vmem, size = 0x20000, scoped, tag = 'scratch operand']
  #allocation5 [shape = 's32[2]{0}', space=sflag, size = 0x8, scoped, tag = 'scratch operand']
  #allocation6 [shape = 's32[1]{0}', space=sflag, size = 0x4, scoped, tag = 'scratch operand']
  #allocation7 [shape = 's32[1]{0:T(128)S(6)}', space=smem, size = 0x200, scoped, tag = 'scoped memory for _moco_forward_impl.1']
  #allocation14 [shape = 's32[]', space=sflag, size = 0x4, offset = 0, fixed_abs, tag = 'sflag constant byte address 0x0 - dummy sync flag']
  #allocation15 [shape = 's32[]', space=sflag, size = 0x4, offset = 0, fixed_abs, tag = 'sflag constant byte address 0x0 - dummy sync flag']
  #allocation16 [shape = 'u32[]', space=smem, size = 0x4, offset = 0x44, fixed_abs, tag = 'smem constant byte address 0x44 - assertion arg 0']
  #allocation17 [shape = 'u32[]', space=smem, size = 0x4, offset = 0x48, fixed_abs, tag = 'smem constant byte address 0x48 - assertion arg 1']
  #allocation18 [shape = 's32[]', space=sflag, size = 0x4, offset = 0, fixed_abs, tag = 'sflag constant byte address 0x0 - dummy sync flag']
  #allocation19 [shape = 's32[]', space=sflag, size = 0x4, offset = 0, fixed_abs, tag = 'sflag constant byte address 0x0 - dummy sync flag']
  #allocation20 [shape = 's32[]', space=sflag, size = 0x4, offset = 0, fixed_abs, tag = 'sflag constant byte address 0x0 - dummy sync flag']
  #allocation21 [shape = 's32[]', space=sflag, size = 0x4, offset = 0, fixed_abs, tag = 'sflag constant byte address 0x0 - dummy sync flag']
  %s0 = inlined_call_operand.vmem [shape: f32[8,768], index: 0, kind: input, shape index: {}]
  %s1 = inlined_call_operand.vmem [shape: f32[8,768], index: 1, kind: input, shape index: {}]
  %s2 = inlined_call_operand.<no memory space> [shape: s32[1], index: 2, kind: input, shape index: {}]
  %s3 = inlined_call_operand.hbm [shape: f32[768,256], index: 3, kind: input, shape index: {}]
  %s4 = inlined_call_operand.vmem [shape: f32[1,256], index: 4, kind: input, shape index: {}]
  %s5 = inlined_call_operand.vmem [shape: f32[256,128], index: 5, kind: input, shape index: {}]
  %s6 = inlined_call_operand.vmem [shape: f32[1,128], index: 6, kind: input, shape index: {}]
  %s7 = inlined_call_operand.hbm [shape: f32[768,256], index: 7, kind: input, shape index: {}, may-alias: {7,14}]
  %s8 = inlined_call_operand.vmem [shape: f32[1,256], index: 8, kind: input, shape index: {}, may-alias: {8,15}]
  %s9 = inlined_call_operand.vmem [shape: f32[256,128], index: 9, kind: input, shape index: {}, may-alias: {9,16}]
  %s10 = inlined_call_operand.vmem [shape: f32[1,128], index: 10, kind: input, shape index: {}, may-alias: {10,17}]
  %s11 = inlined_call_operand.hbm [shape: f32[256,128], index: 11, kind: input, shape index: {}, may-alias: {11,18}]
  %s12 = inlined_call_operand.vmem [shape: f32[8,1], index: 12, kind: output, shape index: {0}]
  %s13 = inlined_call_operand.vmem [shape: f32[8,256], index: 13, kind: output, shape index: {1}]
  %s14 = inlined_call_operand.hbm [shape: f32[768,256], index: 14, kind: output, shape index: {2}, may-alias: {7,14}]
  %s15 = inlined_call_operand.vmem [shape: f32[1,256], index: 15, kind: output, shape index: {3}, may-alias: {8,15}]
  %s16 = inlined_call_operand.vmem [shape: f32[256,128], index: 16, kind: output, shape index: {4}, may-alias: {9,16}]
  %s17 = inlined_call_operand.vmem [shape: f32[1,128], index: 17, kind: output, shape index: {5}, may-alias: {10,17}]
  %s18 = inlined_call_operand.hbm [shape: f32[256,128], index: 18, kind: output, shape index: {6}, may-alias: {11,18}]
  %19 = xla_tuple %s12, %s13, %s14, %s15, %s16, %s17, %s18
  %s20 = sld [smem:[#allocation0]]
  $region149: #{_moco_forward_impl.1} parent=0
    _
  %s22 = ssub.s32 1, %s20
  %s23 = scalar_select 0, %s22, %s20
  %24 = sst [smem:[#allocation7]] %s2
  $region1: #{_moco_forward_impl.1} parent=0
    #allocation8 [shape = 'u8[786432]{0}', space=vmem, size = 0xc0000, scoped, tag = 'input window, operand 3, single buffered']
    #allocation9 [shape = 's32[2]{0}', space=sflag, size = 0x8, scoped, tag = 'scoped memory for _moco_forward_impl.1']
    #allocation10 [shape = 's32[2]{0}', space=sflag, size = 0x8, scoped, tag = 'scoped memory for _moco_forward_impl.1']
    #allocation11 [shape = 'u8[786432]{0}', space=vmem, size = 0xc0000, scoped, tag = 'input window, operand 7, single buffered']
    #allocation12 [shape = 's32[1]{0}', space=sflag, size = 0x4, scoped, tag = 'scoped memory for _moco_forward_impl.1']
    #allocation13 [shape = 'u8[786432]{0}', space=vmem, size = 0xc0000, scoped, tag = 'output window, operand 2, single buffered']
    %25 = vsyncpa [#allocation9], 0
    %26 = vsyncpa [#allocation12], 0
    %27 = vsyncpa [#allocation10], 0
    loop: start=0, step=1, limit=4
    $region2: #{_moco_forward_impl.1} parent=1 // loop_pre_header
      _
    $region3: #{_moco_forward_impl.1} parent=1 // loop_header
      %s29 = sphi 0, %s33
      %p30 = scmp.ge.s32.totalorder %s29, 4
      %s37 = sphi 0, %s37
      %s39 = sphi 0, %s37
      %s40 = sphi 0, %s39
      %s54 = sphi 0, %s40
      %s58 = sphi 0, %s58
      %s60 = sphi 0, %s58
      %s61 = sphi 0, %s60
      %s75 = sphi 0, %s61
      %s79 = sphi 0, %s79
      %s81 = sphi 0, %s79
      %s82 = sphi 0, %s81
      %s96 = sphi 0, %s82
      %s100 = sphi 0, %s100
      %s102 = sphi 0, %s100
      %s103 = sphi 0, %s102
      %s117 = sphi 0, %s103
      %s121 = sphi 0, %s121
      %s123 = sphi 0, %s121
      %s124 = sphi 0, %s123
      %s138 = sphi 0, %s124
      %s142 = sphi 0, %s142
      %s144 = sphi 0, %s142
      %s145 = sphi 0, %s144
      %s159 = sphi 0, %s145
      %s163 = sphi 0, %s163
      %s165 = sphi 0, %s163
      %s166 = sphi 0, %s165
      %s180 = sphi 0, %s166
      %s184 = sphi 0, %s184
      %s186 = sphi 0, %s184
      %s187 = sphi 0, %s186
      %s201 = sphi 0, %s187
      %s205 = sphi 0, %s205
      %s207 = sphi 0, %s205
      %s208 = sphi 0, %s207
      %s222 = sphi 0, %s208
      %s226 = sphi 0, %s226
      %s228 = sphi 0, %s226
      %s229 = sphi 0, %s228
      %s243 = sphi 0, %s229
      %s247 = sphi 0, %s247
      %s249 = sphi 0, %s247
      %s250 = sphi 0, %s249
      %s264 = sphi 0, %s250
      %s268 = sphi 0, %s268
      %s270 = sphi 0, %s268
      %s271 = sphi 0, %s270
      %s285 = sphi 0, %s271
      %s291 = sphi 0, %s293
      %s294 = sphi 0, %s291
      %s295 = sphi 0, %s294
      %s311 = sphi 0, %s295
      %s315 = sphi 0, %s315
      %s317 = sphi 0, %s315
      %s318 = sphi 0, %s317
      %s332 = sphi 0, %s318
      %s336 = sphi 0, %s336
      %s338 = sphi 0, %s336
      %s339 = sphi 0, %s338
      %s353 = sphi 0, %s339
      %s357 = sphi 0, %s357
      %s359 = sphi 0, %s357
      %s360 = sphi 0, %s359
      %s374 = sphi 0, %s360
      %s378 = sphi 0, %s378
      %s380 = sphi 0, %s378
      %s381 = sphi 0, %s380
      %s395 = sphi 0, %s381
    $region4: #{_moco_forward_impl.1} parent=1 // loop_header_branch
      %32 = sbr.rel (%p30) target = $region8
    $region5: #{_moco_forward_impl.1} parent=1 // loop_body
      %s34 = ssub.s32 %s29, 1
      %s35 = ssub.s32 %s29, 2
      %s36 = sadd.s32 %s29, 1
      %s38 = sadd.s32 %s37, 1
      %p41 = scmp.eq.s32.totalorder %s29, 1
      %p42 = scmp.ne.s32.totalorder %s37, %s39
      %p43 = scmp.eq.s32.totalorder %s29, 0
      %p44 = por %p42, %p43
      %p45 = scmp.ne.s32.totalorder %s37, %s39
      %p46 = scmp.eq.s32.totalorder %s34, 1
      %p47 = por %p45, %p46
      %p48 = scmp.ne.s32.totalorder %s39, %s40
      %p49 = scmp.eq.s32.totalorder %s34, 0
      %p50 = por %p48, %p49
      %p51 = scmp.ne.s32.totalorder %s39, %s40
      %p52 = scmp.eq.s32.totalorder %s35, 1
      %p53 = por %p51, %p52
      %p55 = scmp.ne.s32.totalorder %s40, %s54
      %p56 = scmp.eq.s32.totalorder %s35, 0
      %p57 = por %p55, %p56
      %s59 = sadd.s32 %s58, 1
      %p62 = scmp.eq.s32.totalorder %s29, 1
      %p63 = scmp.ne.s32.totalorder %s58, %s60
      %p64 = scmp.eq.s32.totalorder %s29, 0
      %p65 = por %p63, %p64
      %p66 = scmp.ne.s32.totalorder %s58, %s60
      %p67 = scmp.eq.s32.totalorder %s34, 1
      %p68 = por %p66, %p67
      %p69 = scmp.ne.s32.totalorder %s60, %s61
      %p70 = scmp.eq.s32.totalorder %s34, 0
      %p71 = por %p69, %p70
      %p72 = scmp.ne.s32.totalorder %s60, %s61
      %p73 = scmp.eq.s32.totalorder %s35, 1
      %p74 = por %p72, %p73
      %p76 = scmp.ne.s32.totalorder %s61, %s75
      %p77 = scmp.eq.s32.totalorder %s35, 0
      %p78 = por %p76, %p77
      %s80 = sadd.s32 %s79, 1
      %p83 = scmp.eq.s32.totalorder %s29, 1
      %p84 = scmp.ne.s32.totalorder %s79, %s81
      %p85 = scmp.eq.s32.totalorder %s29, 0
      %p86 = por %p84, %p85
      %p87 = scmp.ne.s32.totalorder %s79, %s81
      %p88 = scmp.eq.s32.totalorder %s34, 1
      %p89 = por %p87, %p88
      %p90 = scmp.ne.s32.totalorder %s81, %s82
      %p91 = scmp.eq.s32.totalorder %s34, 0
      %p92 = por %p90, %p91
      %p93 = scmp.ne.s32.totalorder %s81, %s82
      %p94 = scmp.eq.s32.totalorder %s35, 1
      %p95 = por %p93, %p94
      %p97 = scmp.ne.s32.totalorder %s82, %s96
      %p98 = scmp.eq.s32.totalorder %s35, 0
      %p99 = por %p97, %p98
      %s101 = sadd.s32 %s100, 1
      %p104 = scmp.eq.s32.totalorder %s29, 1
      %p105 = scmp.ne.s32.totalorder %s100, %s102
      %p106 = scmp.eq.s32.totalorder %s29, 0
      %p107 = por %p105, %p106
      %p108 = scmp.ne.s32.totalorder %s100, %s102
      %p109 = scmp.eq.s32.totalorder %s34, 1
      %p110 = por %p108, %p109
      %p111 = scmp.ne.s32.totalorder %s102, %s103
      %p112 = scmp.eq.s32.totalorder %s34, 0
      %p113 = por %p111, %p112
      %p114 = scmp.ne.s32.totalorder %s102, %s103
      %p115 = scmp.eq.s32.totalorder %s35, 1
      %p116 = por %p114, %p115
      %p118 = scmp.ne.s32.totalorder %s103, %s117
      %p119 = scmp.eq.s32.totalorder %s35, 0
      %p120 = por %p118, %p119
      %s122 = sadd.s32 %s121, 1
      %p125 = scmp.eq.s32.totalorder %s29, 1
      %p126 = scmp.ne.s32.totalorder %s121, %s123
      %p127 = scmp.eq.s32.totalorder %s29, 0
      %p128 = por %p126, %p127
      %p129 = scmp.ne.s32.totalorder %s121, %s123
      %p130 = scmp.eq.s32.totalorder %s34, 1
      %p131 = por %p129, %p130
      %p132 = scmp.ne.s32.totalorder %s123, %s124
      %p133 = scmp.eq.s32.totalorder %s34, 0
      %p134 = por %p132, %p133
      %p135 = scmp.ne.s32.totalorder %s123, %s124
      %p136 = scmp.eq.s32.totalorder %s35, 1
      %p137 = por %p135, %p136
      %p139 = scmp.ne.s32.totalorder %s124, %s138
      %p140 = scmp.eq.s32.totalorder %s35, 0
      %p141 = por %p139, %p140
      %s143 = sadd.s32 %s142, 1
      %p146 = scmp.eq.s32.totalorder %s29, 1
      %p147 = scmp.ne.s32.totalorder %s142, %s144
      %p148 = scmp.eq.s32.totalorder %s29, 0
      %p149 = por %p147, %p148
      %p150 = scmp.ne.s32.totalorder %s142, %s144
      %p151 = scmp.eq.s32.totalorder %s34, 1
      %p152 = por %p150, %p151
      %p153 = scmp.ne.s32.totalorder %s144, %s145
      %p154 = scmp.eq.s32.totalorder %s34, 0
      %p155 = por %p153, %p154
      %p156 = scmp.ne.s32.totalorder %s144, %s145
      %p157 = scmp.eq.s32.totalorder %s35, 1
      %p158 = por %p156, %p157
      %p160 = scmp.ne.s32.totalorder %s145, %s159
      %p161 = scmp.eq.s32.totalorder %s35, 0
      %p162 = por %p160, %p161
      %s164 = sadd.s32 %s163, 1
      %p167 = scmp.eq.s32.totalorder %s29, 1
      %p168 = scmp.ne.s32.totalorder %s163, %s165
      %p169 = scmp.eq.s32.totalorder %s29, 0
      %p170 = por %p168, %p169
      %p171 = scmp.ne.s32.totalorder %s163, %s165
      %p172 = scmp.eq.s32.totalorder %s34, 1
      %p173 = por %p171, %p172
      %p174 = scmp.ne.s32.totalorder %s165, %s166
      %p175 = scmp.eq.s32.totalorder %s34, 0
      %p176 = por %p174, %p175
      %p177 = scmp.ne.s32.totalorder %s165, %s166
      %p178 = scmp.eq.s32.totalorder %s35, 1
      %p179 = por %p177, %p178
      %p181 = scmp.ne.s32.totalorder %s166, %s180
      %p182 = scmp.eq.s32.totalorder %s35, 0
      %p183 = por %p181, %p182
      %s185 = sadd.s32 %s184, 1
      %p188 = scmp.eq.s32.totalorder %s29, 1
      %p189 = scmp.ne.s32.totalorder %s184, %s186
      %p190 = scmp.eq.s32.totalorder %s29, 0
      %p191 = por %p189, %p190
      %p192 = scmp.ne.s32.totalorder %s184, %s186
      %p193 = scmp.eq.s32.totalorder %s34, 1
      %p194 = por %p192, %p193
      %p195 = scmp.ne.s32.totalorder %s186, %s187
      %p196 = scmp.eq.s32.totalorder %s34, 0
      %p197 = por %p195, %p196
      %p198 = scmp.ne.s32.totalorder %s186, %s187
      %p199 = scmp.eq.s32.totalorder %s35, 1
      %p200 = por %p198, %p199
      %p202 = scmp.ne.s32.totalorder %s187, %s201
      %p203 = scmp.eq.s32.totalorder %s35, 0
      %p204 = por %p202, %p203
      %s206 = sadd.s32 %s205, 1
      %p209 = scmp.eq.s32.totalorder %s29, 1
      %p210 = scmp.ne.s32.totalorder %s205, %s207
      %p211 = scmp.eq.s32.totalorder %s29, 0
      %p212 = por %p210, %p211
      %p213 = scmp.ne.s32.totalorder %s205, %s207
      %p214 = scmp.eq.s32.totalorder %s34, 1
      %p215 = por %p213, %p214
      %p216 = scmp.ne.s32.totalorder %s207, %s208
      %p217 = scmp.eq.s32.totalorder %s34, 0
      %p218 = por %p216, %p217
      %p219 = scmp.ne.s32.totalorder %s207, %s208
      %p220 = scmp.eq.s32.totalorder %s35, 1
      %p221 = por %p219, %p220
      %p223 = scmp.ne.s32.totalorder %s208, %s222
      %p224 = scmp.eq.s32.totalorder %s35, 0
      %p225 = por %p223, %p224
      %s227 = sadd.s32 %s226, 1
      %p230 = scmp.eq.s32.totalorder %s29, 1
      %p231 = scmp.ne.s32.totalorder %s226, %s228
      %p232 = scmp.eq.s32.totalorder %s29, 0
      %p233 = por %p231, %p232
      %p234 = scmp.ne.s32.totalorder %s226, %s228
      %p235 = scmp.eq.s32.totalorder %s34, 1
      %p236 = por %p234, %p235
      %p237 = scmp.ne.s32.totalorder %s228, %s229
      %p238 = scmp.eq.s32.totalorder %s34, 0
      %p239 = por %p237, %p238
      %p240 = scmp.ne.s32.totalorder %s228, %s229
      %p241 = scmp.eq.s32.totalorder %s35, 1
      %p242 = por %p240, %p241
      %p244 = scmp.ne.s32.totalorder %s229, %s243
      %p245 = scmp.eq.s32.totalorder %s35, 0
      %p246 = por %p244, %p245
      %s248 = sadd.s32 %s247, 1
      %p251 = scmp.eq.s32.totalorder %s29, 1
      %p252 = scmp.ne.s32.totalorder %s247, %s249
      %p253 = scmp.eq.s32.totalorder %s29, 0
      %p254 = por %p252, %p253
      %p255 = scmp.ne.s32.totalorder %s247, %s249
      %p256 = scmp.eq.s32.totalorder %s34, 1
      %p257 = por %p255, %p256
      %p258 = scmp.ne.s32.totalorder %s249, %s250
      %p259 = scmp.eq.s32.totalorder %s34, 0
      %p260 = por %p258, %p259
      %p261 = scmp.ne.s32.totalorder %s249, %s250
      %p262 = scmp.eq.s32.totalorder %s35, 1
      %p263 = por %p261, %p262
      %p265 = scmp.ne.s32.totalorder %s250, %s264
      %p266 = scmp.eq.s32.totalorder %s35, 0
      %p267 = por %p265, %p266
      %s269 = sadd.s32 %s268, 1
      %p272 = scmp.eq.s32.totalorder %s29, 1
      %p273 = scmp.ne.s32.totalorder %s268, %s270
      %p274 = scmp.eq.s32.totalorder %s29, 0
      %p275 = por %p273, %p274
      %p276 = scmp.ne.s32.totalorder %s268, %s270
      %p277 = scmp.eq.s32.totalorder %s34, 1
      %p278 = por %p276, %p277
      %p279 = scmp.ne.s32.totalorder %s270, %s271
      %p280 = scmp.eq.s32.totalorder %s34, 0
      %p281 = por %p279, %p280
      %p282 = scmp.ne.s32.totalorder %s270, %s271
      %p283 = scmp.eq.s32.totalorder %s35, 1
      %p284 = por %p282, %p283
      %p286 = scmp.ne.s32.totalorder %s271, %s285
      %p287 = scmp.eq.s32.totalorder %s35, 0
      %p288 = por %p286, %p287
      %s289 = ssub.s32 %s29, %s36
      %p290 = scmp.eq.s32.totalorder %s289, 0
      %s292 = sadd.s32 %s291, 1
      %s293 = scalar_select %p290, %s291, %s292
      %p296 = pneg %p290
      %p297 = scmp.eq.s32.totalorder %s29, 1
      %p298 = por %p296, %p297
      %p299 = scmp.ne.s32.totalorder %s291, %s294
      %p300 = scmp.eq.s32.totalorder %s29, 0
      %p301 = por %p299, %p300
      %p302 = scmp.ne.s32.totalorder %s291, %s294
      %p303 = scmp.eq.s32.totalorder %s34, 1
      %p304 = por %p302, %p303
      %p305 = scmp.ne.s32.totalorder %s294, %s295
      %p306 = scmp.eq.s32.totalorder %s34, 0
      %p307 = por %p305, %p306
      %p308 = scmp.ne.s32.totalorder %s294, %s295
      %p309 = scmp.eq.s32.totalorder %s35, 1
      %p310 = por %p308, %p309
      %p312 = scmp.ne.s32.totalorder %s295, %s311
      %p313 = scmp.eq.s32.totalorder %s35, 0
      %p314 = por %p312, %p313
      %s316 = sadd.s32 %s315, 1
      %p319 = scmp.eq.s32.totalorder %s29, 1
      %p320 = scmp.ne.s32.totalorder %s315, %s317
      %p321 = scmp.eq.s32.totalorder %s29, 0
      %p322 = por %p320, %p321
      %p323 = scmp.ne.s32.totalorder %s315, %s317
      %p324 = scmp.eq.s32.totalorder %s34, 1
      %p325 = por %p323, %p324
      %p326 = scmp.ne.s32.totalorder %s317, %s318
      %p327 = scmp.eq.s32.totalorder %s34, 0
      %p328 = por %p326, %p327
      %p329 = scmp.ne.s32.totalorder %s317, %s318
      %p330 = scmp.eq.s32.totalorder %s35, 1
      %p331 = por %p329, %p330
      %p333 = scmp.ne.s32.totalorder %s318, %s332
      %p334 = scmp.eq.s32.totalorder %s35, 0
      %p335 = por %p333, %p334
      %s337 = sadd.s32 %s336, 1
      %p340 = scmp.eq.s32.totalorder %s29, 1
      %p341 = scmp.ne.s32.totalorder %s336, %s338
      %p342 = scmp.eq.s32.totalorder %s29, 0
      %p343 = por %p341, %p342
      %p344 = scmp.ne.s32.totalorder %s336, %s338
      %p345 = scmp.eq.s32.totalorder %s34, 1
      %p346 = por %p344, %p345
      %p347 = scmp.ne.s32.totalorder %s338, %s339
      %p348 = scmp.eq.s32.totalorder %s34, 0
      %p349 = por %p347, %p348
      %p350 = scmp.ne.s32.totalorder %s338, %s339
      %p351 = scmp.eq.s32.totalorder %s35, 1
      %p352 = por %p350, %p351
      %p354 = scmp.ne.s32.totalorder %s339, %s353
      %p355 = scmp.eq.s32.totalorder %s35, 0
      %p356 = por %p354, %p355
      %s358 = sadd.s32 %s357, 1
      %p361 = scmp.eq.s32.totalorder %s29, 1
      %p362 = scmp.ne.s32.totalorder %s357, %s359
      %p363 = scmp.eq.s32.totalorder %s29, 0
      %p364 = por %p362, %p363
      %p365 = scmp.ne.s32.totalorder %s357, %s359
      %p366 = scmp.eq.s32.totalorder %s34, 1
      %p367 = por %p365, %p366
      %p368 = scmp.ne.s32.totalorder %s359, %s360
      %p369 = scmp.eq.s32.totalorder %s34, 0
      %p370 = por %p368, %p369
      %p371 = scmp.ne.s32.totalorder %s359, %s360
      %p372 = scmp.eq.s32.totalorder %s35, 1
      %p373 = por %p371, %p372
      %p375 = scmp.ne.s32.totalorder %s360, %s374
      %p376 = scmp.eq.s32.totalorder %s35, 0
      %p377 = por %p375, %p376
      %s379 = sadd.s32 %s378, 1
      %p382 = scmp.eq.s32.totalorder %s29, 1
      %p383 = scmp.ne.s32.totalorder %s378, %s380
      %p384 = scmp.eq.s32.totalorder %s29, 0
      %p385 = por %p383, %p384
      %p386 = scmp.ne.s32.totalorder %s378, %s380
      %p387 = scmp.eq.s32.totalorder %s34, 1
      %p388 = por %p386, %p387
      %p389 = scmp.ne.s32.totalorder %s380, %s381
      %p390 = scmp.eq.s32.totalorder %s34, 0
      %p391 = por %p389, %p390
      %p392 = scmp.ne.s32.totalorder %s380, %s381
      %p393 = scmp.eq.s32.totalorder %s35, 1
      %p394 = por %p392, %p393
      %p396 = scmp.ne.s32.totalorder %s381, %s395
      %p397 = scmp.eq.s32.totalorder %s35, 0
      %p398 = por %p396, %p397
      %p399 = scmp.le.s32.totalorder 1, %s29
      %p400 = scmp.lt.s32.totalorder %s29, 3
      %p401 = pnand %p399, %p400
      %p402 = pneg %p401
      // Predicated region
      $region9: #{_moco_forward_impl.1} parent=5 // pred_check
        _
      $region10: #{_moco_forward_impl.1} parent=5 // pred_check_branch
        %404 = sbr.rel (%p401) target = $region12
      $region11: #{_moco_forward_impl.1} parent=5 // pred_region
        %s405 = ssub.s32 %s29, 1
        // Predicated region
        $region13: #{_moco_forward_impl.1} parent=11 // pred_check
          %p406 = pneg %p50
        $region14: #{_moco_forward_impl.1} parent=11 // pred_check_branch
          %408 = sbr.rel (%p406) target = $region16
        $region15: #{_moco_forward_impl.1} parent=11 // pred_region
          _
        $region16: #{_moco_forward_impl.1} parent=11 // pred_fallthru
          _
        // Predicated region
        $region17: #{_moco_forward_impl.1} parent=11 // pred_check
          %p409 = pneg %p71
        $region18: #{_moco_forward_impl.1} parent=11 // pred_check_branch
          %411 = sbr.rel (%p409) target = $region20
        $region19: #{_moco_forward_impl.1} parent=11 // pred_region
          _
        $region20: #{_moco_forward_impl.1} parent=11 // pred_fallthru
          _
        // Predicated region
        $region21: #{_moco_forward_impl.1} parent=11 // pred_check
          %p412 = pneg %p92
        $region22: #{_moco_forward_impl.1} parent=11 // pred_check_branch
          %414 = sbr.rel (%p412) target = $region24
        $region23: #{_moco_forward_impl.1} parent=11 // pred_region
          _
        $region24: #{_moco_forward_impl.1} parent=11 // pred_fallthru
          _
        // Predicated region
        $region25: #{_moco_forward_impl.1} parent=11 // pred_check
          %p415 = pneg %p113
        $region26: #{_moco_forward_impl.1} parent=11 // pred_check_branch
          %417 = sbr.rel (%p415) target = $region28
        $region27: #{_moco_forward_impl.1} parent=11 // pred_region
          %s419 = ssub.s32 24576, 24576
          %420 = vsyncadd [#allocation9], %s419
          %s421 = sshll.u32 [#allocation8], 4
          %s422 = int_to_ptr.vmem [resolvable:$true] %s421
          %427 = dma.hbm_to_vmem [thread:$0]  %s3, 24576, %s422, [#allocation9], 256, 256, 16
        $region28: #{_moco_forward_impl.1} parent=11 // pred_fallthru
          _
        // Predicated region
        $region29: #{_moco_forward_impl.1} parent=11 // pred_check
          %p428 = pneg %p134
        $region30: #{_moco_forward_impl.1} parent=11 // pred_check_branch
          %430 = sbr.rel (%p428) target = $region32
        $region31: #{_moco_forward_impl.1} parent=11 // pred_region
          _
        $region32: #{_moco_forward_impl.1} parent=11 // pred_fallthru
          _
        // Predicated region
        $region33: #{_moco_forward_impl.1} parent=11 // pred_check
          %p431 = pneg %p155
        $region34: #{_moco_forward_impl.1} parent=11 // pred_check_branch
          %433 = sbr.rel (%p431) target = $region36
        $region35: #{_moco_forward_impl.1} parent=11 // pred_region
          _
        $region36: #{_moco_forward_impl.1} parent=11 // pred_fallthru
          _
        // Predicated region
        $region37: #{_moco_forward_impl.1} parent=11 // pred_check
          %p434 = pneg %p176
        $region38: #{_moco_forward_impl.1} parent=11 // pred_check_branch
          %436 = sbr.rel (%p434) target = $region40
        $region39: #{_moco_forward_impl.1} parent=11 // pred_region
          _
        $region40: #{_moco_forward_impl.1} parent=11 // pred_fallthru
          _
        // Predicated region
        $region41: #{_moco_forward_impl.1} parent=11 // pred_check
          %p437 = pneg %p197
        $region42: #{_moco_forward_impl.1} parent=11 // pred_check_branch
          %439 = sbr.rel (%p437) target = $region44
        $region43: #{_moco_forward_impl.1} parent=11 // pred_region
          %s441 = ssub.s32 24576, 24576
          %442 = vsyncadd [#allocation12], %s441
          %s443 = sshll.u32 [#allocation11], 4
          %s444 = int_to_ptr.vmem [resolvable:$true] %s443
          %449 = dma.hbm_to_vmem [thread:$0]  %s7, 24576, %s444, [#allocation12], 256, 256, 16
        $region44: #{_moco_forward_impl.1} parent=11 // pred_fallthru
          _
        // Predicated region
        $region45: #{_moco_forward_impl.1} parent=11 // pred_check
          %p450 = pneg %p218
        $region46: #{_moco_forward_impl.1} parent=11 // pred_check_branch
          %452 = sbr.rel (%p450) target = $region48
        $region47: #{_moco_forward_impl.1} parent=11 // pred_region
          _
        $region48: #{_moco_forward_impl.1} parent=11 // pred_fallthru
          _
        // Predicated region
        $region49: #{_moco_forward_impl.1} parent=11 // pred_check
          %p453 = pneg %p239
        $region50: #{_moco_forward_impl.1} parent=11 // pred_check_branch
          %455 = sbr.rel (%p453) target = $region52
        $region51: #{_moco_forward_impl.1} parent=11 // pred_region
          _
        $region52: #{_moco_forward_impl.1} parent=11 // pred_fallthru
          _
        // Predicated region
        $region53: #{_moco_forward_impl.1} parent=11 // pred_check
          %p456 = pneg %p260
        $region54: #{_moco_forward_impl.1} parent=11 // pred_check_branch
          %458 = sbr.rel (%p456) target = $region56
        $region55: #{_moco_forward_impl.1} parent=11 // pred_region
          _
        $region56: #{_moco_forward_impl.1} parent=11 // pred_fallthru
          _
      $region12: #{_moco_forward_impl.1} parent=5 // pred_fallthru
        _
      %p459 = scmp.lt.s32.totalorder %s29, 2
      // Predicated region
      $region57: #{_moco_forward_impl.1} parent=5 // pred_check
        %p460 = pneg %p459
      $region58: #{_moco_forward_impl.1} parent=5 // pred_check_branch
        %462 = sbr.rel (%p460) target = $region60
      $region59: #{_moco_forward_impl.1} parent=5 // pred_region
        _
      $region60: #{_moco_forward_impl.1} parent=5 // pred_fallthru
        _
      %p463 = scmp.le.s32.totalorder 1, %s29
      %p464 = scmp.lt.s32.totalorder %s29, 3
      %p465 = pnand %p463, %p464
      %p466 = pneg %p465
      // Predicated region
      $region61: #{_moco_forward_impl.1} parent=5 // pred_check
        _
      $region62: #{_moco_forward_impl.1} parent=5 // pred_check_branch
        %468 = sbr.rel (%p465) target = $region64
      $region63: #{_moco_forward_impl.1} parent=5 // pred_region
        %s469 = ssub.s32 %s29, 1
        // Predicated region
        $region65: #{_moco_forward_impl.1} parent=63 // pred_check
          %p470 = pneg %p113
        $region66: #{_moco_forward_impl.1} parent=63 // pred_check_branch
          %472 = sbr.rel (%p470) target = $region68
        $region67: #{_moco_forward_impl.1} parent=63 // pred_region
          %473 = dma.done [#allocation9], 24576
        $region68: #{_moco_forward_impl.1} parent=63 // pred_fallthru
          _
        // Predicated region
        $region69: #{_moco_forward_impl.1} parent=63 // pred_check
          %p474 = pneg %p197
        $region70: #{_moco_forward_impl.1} parent=63 // pred_check_branch
          %476 = sbr.rel (%p474) target = $region72
        $region71: #{_moco_forward_impl.1} parent=63 // pred_region
          %477 = dma.done [#allocation12], 24576
        $region72: #{_moco_forward_impl.1} parent=63 // pred_fallthru
          _
        %p478 = pneg %p50
        %p479 = pneg %p47
        %p480 = pneg %p71
        %p481 = pneg %p68
        %p482 = pneg %p92
        %p483 = pneg %p89
        %p484 = pneg %p113
        %p485 = pneg %p110
        %p486 = pneg %p134
        %p487 = pneg %p131
        %p488 = pneg %p155
        %p489 = pneg %p152
        %p490 = pneg %p176
        %p491 = pneg %p173
        %p492 = pneg %p197
        %p493 = pneg %p194
        %p494 = pneg %p218
        %p495 = pneg %p215
        %p496 = pneg %p239
        %p497 = pneg %p236
        %p498 = pneg %p260
        %p499 = pneg %p257
        %p500 = pneg %p281
        %p501 = pneg %p278
        %p502 = pneg %p307
        %p503 = pneg %p304
        %p504 = scmp.lt.s32.totalorder %s34, 1
        %s505 = scalar_select %p504, %s34, 1
        %s506 = smul.addr %s505, 8
        %s507 = scalar_lea.vmem %s13, %s506
        %p508 = pneg %p328
        %p509 = pneg %p325
        %p510 = pneg %p349
        %p511 = pneg %p346
        %p512 = pneg %p370
        %p513 = pneg %p367
        %p514 = pneg %p391
        %p515 = pneg %p388
        %p516 = scmp.lt.s32.totalorder %s34, 1
        %s517 = scalar_select %p516, %s34, 1
        %s518 = smul.addr %s517, 8
        %s519 = scalar_lea.vmem %s13, %s518
        %p521 = scmp.eq.s32.totalorder %s34, 0
        // Predicated region
        $region73: #{_moco_forward_impl.1} parent=63 // pred_check
          %p522 = pneg %p521
        $region74: #{_moco_forward_impl.1} parent=63 // pred_check_branch
          %524 = sbr.rel (%p522) target = $region76
        $region75: #{_moco_forward_impl.1} parent=63 // pred_region
          // Predicated region
          $region77: #{_moco_forward_impl.1} parent=75 // pred_check
            _
          $region78: #{_moco_forward_impl.1} parent=75 // pred_check_branch
            %526 = sbr.rel target = $region80
          $region79: #{_moco_forward_impl.1} parent=75 // pred_region
            %527 = sst [smem:[#allocation16]] [#allocation15]
            %528 = sst [smem:[#allocation17]] [#allocation14]
          $region80: #{_moco_forward_impl.1} parent=75 // pred_fallthru
            _
          %530 = shalt.err (0)
          %s532 = sshll.u32 [#allocation4], 4
          %s533 = int_to_ptr.vmem [resolvable:$true] %s532
          %535 = dma.hbm_to_vmem [thread:$0]  %s11, 2048, %s533, [#allocation5]
          %v536 = vld [vmem:[#allocation11] sm:$0xff]
          %v537 = vld [vmem:[#allocation11 + $0x8] sm:$0xff]
          %v538 = vld [vmem:[#allocation11 + $0x10] sm:$0xff]
          %v539 = vld [vmem:[#allocation11 + $0x18] sm:$0xff]
          %v540 = vld [vmem:[#allocation11 + $0x20] sm:$0xff]
          %v541 = vld [vmem:[#allocation11 + $0x28] sm:$0xff]
          %v542 = vld [vmem:[#allocation11 + $0x30] sm:$0xff]
          %v543 = vld [vmem:[#allocation11 + $0x38] sm:$0xff]
          %v544 = vld [vmem:[#allocation11 + $0x40] sm:$0xff]
          %v545 = vld [vmem:[#allocation11 + $0x48] sm:$0xff]
          %v546 = vld [vmem:[#allocation11 + $0x50] sm:$0xff]
          %v547 = vld [vmem:[#allocation11 + $0x58] sm:$0xff]
          %v548 = vld [vmem:[#allocation11 + $0x60] sm:$0xff]
          %v549 = vld [vmem:[#allocation11 + $0x68] sm:$0xff]
          %v550 = vld [vmem:[#allocation11 + $0x70] sm:$0xff]
          %v551 = vld [vmem:[#allocation11 + $0x78] sm:$0xff]
          %v552 = vld [vmem:[#allocation11 + $0x80] sm:$0xff]
          %v553 = vld [vmem:[#allocation11 + $0x88] sm:$0xff]
          %v554 = vld [vmem:[#allocation11 + $0x90] sm:$0xff]
          %v555 = vld [vmem:[#allocation11 + $0x98] sm:$0xff]
          %v556 = vld [vmem:[#allocation11 + $0xa0] sm:$0xff]
          %v557 = vld [vmem:[#allocation11 + $0xa8] sm:$0xff]
          %v558 = vld [vmem:[#allocation11 + $0xb0] sm:$0xff]
          %v559 = vld [vmem:[#allocation11 + $0xb8] sm:$0xff]
          %v560 = vld [vmem:[#allocation11 + $0xc0] sm:$0xff]
          %v561 = vld [vmem:[#allocation11 + $0xc8] sm:$0xff]
          %v562 = vld [vmem:[#allocation11 + $0xd0] sm:$0xff]
          %v563 = vld [vmem:[#allocation11 + $0xd8] sm:$0xff]
          %v564 = vld [vmem:[#allocation11 + $0xe0] sm:$0xff]
          %v565 = vld [vmem:[#allocation11 + $0xe8] sm:$0xff]
          %v566 = vld [vmem:[#allocation11 + $0xf0] sm:$0xff]
          %v567 = vld [vmem:[#allocation11 + $0xf8] sm:$0xff]
          %v568 = vld [vmem:[#allocation11 + $0x100] sm:$0xff]
          %v569 = vld [vmem:[#allocation11 + $0x108] sm:$0xff]
          %v570 = vld [vmem:[#allocation11 + $0x110] sm:$0xff]
          %v571 = vld [vmem:[#allocation11 + $0x118] sm:$0xff]
          %v572 = vld [vmem:[#allocation11 + $0x120] sm:$0xff]
          %v573 = vld [vmem:[#allocation11 + $0x128] sm:$0xff]
          %v574 = vld [vmem:[#allocation11 + $0x130] sm:$0xff]
          %v575 = vld [vmem:[#allocation11 + $0x138] sm:$0xff]
          %v576 = vld [vmem:[#allocation11 + $0x140] sm:$0xff]
          %v577 = vld [vmem:[#allocation11 + $0x148] sm:$0xff]
          %v578 = vld [vmem:[#allocation11 + $0x150] sm:$0xff]
          %v579 = vld [vmem:[#allocation11 + $0x158] sm:$0xff]
          %v580 = vld [vmem:[#allocation11 + $0x160] sm:$0xff]
          %v581 = vld [vmem:[#allocation11 + $0x168] sm:$0xff]
          %v582 = vld [vmem:[#allocation11 + $0x170] sm:$0xff]
          %v583 = vld [vmem:[#allocation11 + $0x178] sm:$0xff]
          %v584 = vld [vmem:[#allocation11 + $0x180] sm:$0xff]
          %v585 = vld [vmem:[#allocation11 + $0x188] sm:$0xff]
          %v586 = vld [vmem:[#allocation11 + $0x190] sm:$0xff]
          %v587 = vld [vmem:[#allocation11 + $0x198] sm:$0xff]
          %v588 = vld [vmem:[#allocation11 + $0x1a0] sm:$0xff]
          %v589 = vld [vmem:[#allocation11 + $0x1a8] sm:$0xff]
          %v590 = vld [vmem:[#allocation11 + $0x1b0] sm:$0xff]
          %v591 = vld [vmem:[#allocation11 + $0x1b8] sm:$0xff]
          %v592 = vld [vmem:[#allocation11 + $0x1c0] sm:$0xff]
          %v593 = vld [vmem:[#allocation11 + $0x1c8] sm:$0xff]
          %v594 = vld [vmem:[#allocation11 + $0x1d0] sm:$0xff]
          %v595 = vld [vmem:[#allocation11 + $0x1d8] sm:$0xff]
          %v596 = vld [vmem:[#allocation11 + $0x1e0] sm:$0xff]
          %v597 = vld [vmem:[#allocation11 + $0x1e8] sm:$0xff]
          %v598 = vld [vmem:[#allocation11 + $0x1f0] sm:$0xff]
          %v599 = vld [vmem:[#allocation11 + $0x1f8] sm:$0xff]
          %v600 = vld [vmem:[#allocation11 + $0x200] sm:$0xff]
          %v601 = vld [vmem:[#allocation11 + $0x208] sm:$0xff]
          %v602 = vld [vmem:[#allocation11 + $0x210] sm:$0xff]
          %v603 = vld [vmem:[#allocation11 + $0x218] sm:$0xff]
          %v604 = vld [vmem:[#allocation11 + $0x220] sm:$0xff]
          %v605 = vld [vmem:[#allocation11 + $0x228] sm:$0xff]
          %v606 = vld [vmem:[#allocation11 + $0x230] sm:$0xff]
          %v607 = vld [vmem:[#allocation11 + $0x238] sm:$0xff]
          %v608 = vld [vmem:[#allocation11 + $0x240] sm:$0xff]
          %v609 = vld [vmem:[#allocation11 + $0x248] sm:$0xff]
          %v610 = vld [vmem:[#allocation11 + $0x250] sm:$0xff]
          %v611 = vld [vmem:[#allocation11 + $0x258] sm:$0xff]
          %v612 = vld [vmem:[#allocation11 + $0x260] sm:$0xff]
          %v613 = vld [vmem:[#allocation11 + $0x268] sm:$0xff]
          %v614 = vld [vmem:[#allocation11 + $0x270] sm:$0xff]
          %v615 = vld [vmem:[#allocation11 + $0x278] sm:$0xff]
          %v616 = vld [vmem:[#allocation11 + $0x280] sm:$0xff]
          %v617 = vld [vmem:[#allocation11 + $0x288] sm:$0xff]
          %v618 = vld [vmem:[#allocation11 + $0x290] sm:$0xff]
          %v619 = vld [vmem:[#allocation11 + $0x298] sm:$0xff]
          %v620 = vld [vmem:[#allocation11 + $0x2a0] sm:$0xff]
          %v621 = vld [vmem:[#allocation11 + $0x2a8] sm:$0xff]
          %v622 = vld [vmem:[#allocation11 + $0x2b0] sm:$0xff]
          %v623 = vld [vmem:[#allocation11 + $0x2b8] sm:$0xff]
          %v624 = vld [vmem:[#allocation11 + $0x2c0] sm:$0xff]
          %v625 = vld [vmem:[#allocation11 + $0x2c8] sm:$0xff]
          %v626 = vld [vmem:[#allocation11 + $0x2d0] sm:$0xff]
          %v627 = vld [vmem:[#allocation11 + $0x2d8] sm:$0xff]
          %v628 = vld [vmem:[#allocation11 + $0x2e0] sm:$0xff]
          %v629 = vld [vmem:[#allocation11 + $0x2e8] sm:$0xff]
          %v630 = vld [vmem:[#allocation11 + $0x2f0] sm:$0xff]
          %v631 = vld [vmem:[#allocation11 + $0x2f8] sm:$0xff]
          %v632 = vld [vmem:[#allocation11 + $0x300] sm:$0xff]
          %v633 = vld [vmem:[#allocation11 + $0x308] sm:$0xff]
          %v634 = vld [vmem:[#allocation11 + $0x310] sm:$0xff]
          %v635 = vld [vmem:[#allocation11 + $0x318] sm:$0xff]
          %v636 = vld [vmem:[#allocation11 + $0x320] sm:$0xff]
          %v637 = vld [vmem:[#allocation11 + $0x328] sm:$0xff]
          %v638 = vld [vmem:[#allocation11 + $0x330] sm:$0xff]
          %v639 = vld [vmem:[#allocation11 + $0x338] sm:$0xff]
          %v640 = vld [vmem:[#allocation11 + $0x340] sm:$0xff]
          %v641 = vld [vmem:[#allocation11 + $0x348] sm:$0xff]
          %v642 = vld [vmem:[#allocation11 + $0x350] sm:$0xff]
          %v643 = vld [vmem:[#allocation11 + $0x358] sm:$0xff]
          %v644 = vld [vmem:[#allocation11 + $0x360] sm:$0xff]
          %v645 = vld [vmem:[#allocation11 + $0x368] sm:$0xff]
          %v646 = vld [vmem:[#allocation11 + $0x370] sm:$0xff]
          %v647 = vld [vmem:[#allocation11 + $0x378] sm:$0xff]
          %v648 = vld [vmem:[#allocation11 + $0x380] sm:$0xff]
          %v649 = vld [vmem:[#allocation11 + $0x388] sm:$0xff]
          %v650 = vld [vmem:[#allocation11 + $0x390] sm:$0xff]
          %v651 = vld [vmem:[#allocation11 + $0x398] sm:$0xff]
          %v652 = vld [vmem:[#allocation11 + $0x3a0] sm:$0xff]
          %v653 = vld [vmem:[#allocation11 + $0x3a8] sm:$0xff]
          %v654 = vld [vmem:[#allocation11 + $0x3b0] sm:$0xff]
          %v655 = vld [vmem:[#allocation11 + $0x3b8] sm:$0xff]
          %v656 = vld [vmem:[#allocation11 + $0x3c0] sm:$0xff]
          %v657 = vld [vmem:[#allocation11 + $0x3c8] sm:$0xff]
          %v658 = vld [vmem:[#allocation11 + $0x3d0] sm:$0xff]
          %v659 = vld [vmem:[#allocation11 + $0x3d8] sm:$0xff]
          %v660 = vld [vmem:[#allocation11 + $0x3e0] sm:$0xff]
          %v661 = vld [vmem:[#allocation11 + $0x3e8] sm:$0xff]
          %v662 = vld [vmem:[#allocation11 + $0x3f0] sm:$0xff]
          %v663 = vld [vmem:[#allocation11 + $0x3f8] sm:$0xff]
          %v664 = vld [vmem:[#allocation11 + $0x400] sm:$0xff]
          %v665 = vld [vmem:[#allocation11 + $0x408] sm:$0xff]
          %v666 = vld [vmem:[#allocation11 + $0x410] sm:$0xff]
          %v667 = vld [vmem:[#allocation11 + $0x418] sm:$0xff]
          %v668 = vld [vmem:[#allocation11 + $0x420] sm:$0xff]
          %v669 = vld [vmem:[#allocation11 + $0x428] sm:$0xff]
          %v670 = vld [vmem:[#allocation11 + $0x430] sm:$0xff]
          %v671 = vld [vmem:[#allocation11 + $0x438] sm:$0xff]
          %v672 = vld [vmem:[#allocation11 + $0x440] sm:$0xff]
          %v673 = vld [vmem:[#allocation11 + $0x448] sm:$0xff]
          %v674 = vld [vmem:[#allocation11 + $0x450] sm:$0xff]
          %v675 = vld [vmem:[#allocation11 + $0x458] sm:$0xff]
          %v676 = vld [vmem:[#allocation11 + $0x460] sm:$0xff]
          %v677 = vld [vmem:[#allocation11 + $0x468] sm:$0xff]
          %v678 = vld [vmem:[#allocation11 + $0x470] sm:$0xff]
          %v679 = vld [vmem:[#allocation11 + $0x478] sm:$0xff]
          %v680 = vld [vmem:[#allocation11 + $0x480] sm:$0xff]
          %v681 = vld [vmem:[#allocation11 + $0x488] sm:$0xff]
          %v682 = vld [vmem:[#allocation11 + $0x490] sm:$0xff]
          %v683 = vld [vmem:[#allocation11 + $0x498] sm:$0xff]
          %v684 = vld [vmem:[#allocation11 + $0x4a0] sm:$0xff]
          %v685 = vld [vmem:[#allocation11 + $0x4a8] sm:$0xff]
          %v686 = vld [vmem:[#allocation11 + $0x4b0] sm:$0xff]
          %v687 = vld [vmem:[#allocation11 + $0x4b8] sm:$0xff]
          %v688 = vld [vmem:[#allocation11 + $0x4c0] sm:$0xff]
          %v689 = vld [vmem:[#allocation11 + $0x4c8] sm:$0xff]
          %v690 = vld [vmem:[#allocation11 + $0x4d0] sm:$0xff]
          %v691 = vld [vmem:[#allocation11 + $0x4d8] sm:$0xff]
          %v692 = vld [vmem:[#allocation11 + $0x4e0] sm:$0xff]
          %v693 = vld [vmem:[#allocation11 + $0x4e8] sm:$0xff]
          %v694 = vld [vmem:[#allocation11 + $0x4f0] sm:$0xff]
          %v695 = vld [vmem:[#allocation11 + $0x4f8] sm:$0xff]
          %v696 = vld [vmem:[#allocation11 + $0x500] sm:$0xff]
          %v697 = vld [vmem:[#allocation11 + $0x508] sm:$0xff]
          %v698 = vld [vmem:[#allocation11 + $0x510] sm:$0xff]
          %v699 = vld [vmem:[#allocation11 + $0x518] sm:$0xff]
          %v700 = vld [vmem:[#allocation11 + $0x520] sm:$0xff]
          %v701 = vld [vmem:[#allocation11 + $0x528] sm:$0xff]
          %v702 = vld [vmem:[#allocation11 + $0x530] sm:$0xff]
          %v703 = vld [vmem:[#allocation11 + $0x538] sm:$0xff]
          %v704 = vld [vmem:[#allocation11 + $0x540] sm:$0xff]
          %v705 = vld [vmem:[#allocation11 + $0x548] sm:$0xff]
          %v706 = vld [vmem:[#allocation11 + $0x550] sm:$0xff]
          %v707 = vld [vmem:[#allocation11 + $0x558] sm:$0xff]
          %v708 = vld [vmem:[#allocation11 + $0x560] sm:$0xff]
          %v709 = vld [vmem:[#allocation11 + $0x568] sm:$0xff]
          %v710 = vld [vmem:[#allocation11 + $0x570] sm:$0xff]
          %v711 = vld [vmem:[#allocation11 + $0x578] sm:$0xff]
          %v712 = vld [vmem:[#allocation11 + $0x580] sm:$0xff]
          %v713 = vld [vmem:[#allocation11 + $0x588] sm:$0xff]
          %v714 = vld [vmem:[#allocation11 + $0x590] sm:$0xff]
          %v715 = vld [vmem:[#allocation11 + $0x598] sm:$0xff]
          %v716 = vld [vmem:[#allocation11 + $0x5a0] sm:$0xff]
          %v717 = vld [vmem:[#allocation11 + $0x5a8] sm:$0xff]
          %v718 = vld [vmem:[#allocation11 + $0x5b0] sm:$0xff]
          %v719 = vld [vmem:[#allocation11 + $0x5b8] sm:$0xff]
          %v720 = vld [vmem:[#allocation11 + $0x5c0] sm:$0xff]
          %v721 = vld [vmem:[#allocation11 + $0x5c8] sm:$0xff]
          %v722 = vld [vmem:[#allocation11 + $0x5d0] sm:$0xff]
          %v723 = vld [vmem:[#allocation11 + $0x5d8] sm:$0xff]
          %v724 = vld [vmem:[#allocation11 + $0x5e0] sm:$0xff]
          %v725 = vld [vmem:[#allocation11 + $0x5e8] sm:$0xff]
          %v726 = vld [vmem:[#allocation11 + $0x5f0] sm:$0xff]
          %v727 = vld [vmem:[#allocation11 + $0x5f8] sm:$0xff]
          %v728 = vmul.f32 %v536, 0.999
          %v729 = vmul.f32 %v537, 0.999
          %v730 = vmul.f32 %v538, 0.999
          %v731 = vmul.f32 %v539, 0.999
          %v732 = vmul.f32 %v540, 0.999
          %v733 = vmul.f32 %v541, 0.999
          %v734 = vmul.f32 %v542, 0.999
          %v735 = vmul.f32 %v543, 0.999
          %v736 = vmul.f32 %v544, 0.999
          %v737 = vmul.f32 %v545, 0.999
          %v738 = vmul.f32 %v546, 0.999
          %v739 = vmul.f32 %v547, 0.999
          %v740 = vmul.f32 %v548, 0.999
          %v741 = vmul.f32 %v549, 0.999
          %v742 = vmul.f32 %v550, 0.999
          %v743 = vmul.f32 %v551, 0.999
          %v744 = vmul.f32 %v552, 0.999
          %v745 = vmul.f32 %v553, 0.999
          %v746 = vmul.f32 %v554, 0.999
          %v747 = vmul.f32 %v555, 0.999
          %v748 = vmul.f32 %v556, 0.999
          %v749 = vmul.f32 %v557, 0.999
          %v750 = vmul.f32 %v558, 0.999
          %v751 = vmul.f32 %v559, 0.999
          %v752 = vmul.f32 %v560, 0.999
          %v753 = vmul.f32 %v561, 0.999
          %v754 = vmul.f32 %v562, 0.999
          %v755 = vmul.f32 %v563, 0.999
          %v756 = vmul.f32 %v564, 0.999
          %v757 = vmul.f32 %v565, 0.999
          %v758 = vmul.f32 %v566, 0.999
          %v759 = vmul.f32 %v567, 0.999
          %v760 = vmul.f32 %v568, 0.999
          %v761 = vmul.f32 %v569, 0.999
          %v762 = vmul.f32 %v570, 0.999
          %v763 = vmul.f32 %v571, 0.999
          %v764 = vmul.f32 %v572, 0.999
          %v765 = vmul.f32 %v573, 0.999
          %v766 = vmul.f32 %v574, 0.999
          %v767 = vmul.f32 %v575, 0.999
          %v768 = vmul.f32 %v576, 0.999
          %v769 = vmul.f32 %v577, 0.999
          %v770 = vmul.f32 %v578, 0.999
          %v771 = vmul.f32 %v579, 0.999
          %v772 = vmul.f32 %v580, 0.999
          %v773 = vmul.f32 %v581, 0.999
          %v774 = vmul.f32 %v582, 0.999
          %v775 = vmul.f32 %v583, 0.999
          %v776 = vmul.f32 %v584, 0.999
          %v777 = vmul.f32 %v585, 0.999
          %v778 = vmul.f32 %v586, 0.999
          %v779 = vmul.f32 %v587, 0.999
          %v780 = vmul.f32 %v588, 0.999
          %v781 = vmul.f32 %v589, 0.999
          %v782 = vmul.f32 %v590, 0.999
          %v783 = vmul.f32 %v591, 0.999
          %v784 = vmul.f32 %v592, 0.999
          %v785 = vmul.f32 %v593, 0.999
          %v786 = vmul.f32 %v594, 0.999
          %v787 = vmul.f32 %v595, 0.999
          %v788 = vmul.f32 %v596, 0.999
          %v789 = vmul.f32 %v597, 0.999
          %v790 = vmul.f32 %v598, 0.999
          %v791 = vmul.f32 %v599, 0.999
          %v792 = vmul.f32 %v600, 0.999
          %v793 = vmul.f32 %v601, 0.999
          %v794 = vmul.f32 %v602, 0.999
          %v795 = vmul.f32 %v603, 0.999
          %v796 = vmul.f32 %v604, 0.999
          %v797 = vmul.f32 %v605, 0.999
          %v798 = vmul.f32 %v606, 0.999
          %v799 = vmul.f32 %v607, 0.999
          %v800 = vmul.f32 %v608, 0.999
          %v801 = vmul.f32 %v609, 0.999
          %v802 = vmul.f32 %v610, 0.999
          %v803 = vmul.f32 %v611, 0.999
          %v804 = vmul.f32 %v612, 0.999
          %v805 = vmul.f32 %v613, 0.999
          %v806 = vmul.f32 %v614, 0.999
          %v807 = vmul.f32 %v615, 0.999
          %v808 = vmul.f32 %v616, 0.999
          %v809 = vmul.f32 %v617, 0.999
          %v810 = vmul.f32 %v618, 0.999
          %v811 = vmul.f32 %v619, 0.999
          %v812 = vmul.f32 %v620, 0.999
          %v813 = vmul.f32 %v621, 0.999
          %v814 = vmul.f32 %v622, 0.999
          %v815 = vmul.f32 %v623, 0.999
          %v816 = vmul.f32 %v624, 0.999
          %v817 = vmul.f32 %v625, 0.999
          %v818 = vmul.f32 %v626, 0.999
          %v819 = vmul.f32 %v627, 0.999
          %v820 = vmul.f32 %v628, 0.999
          %v821 = vmul.f32 %v629, 0.999
          %v822 = vmul.f32 %v630, 0.999
          %v823 = vmul.f32 %v631, 0.999
          %v824 = vmul.f32 %v632, 0.999
          %v825 = vmul.f32 %v633, 0.999
          %v826 = vmul.f32 %v634, 0.999
          %v827 = vmul.f32 %v635, 0.999
          %v828 = vmul.f32 %v636, 0.999
          %v829 = vmul.f32 %v637, 0.999
          %v830 = vmul.f32 %v638, 0.999
          %v831 = vmul.f32 %v639, 0.999
          %v832 = vmul.f32 %v640, 0.999
          %v833 = vmul.f32 %v641, 0.999
          %v834 = vmul.f32 %v642, 0.999
          %v835 = vmul.f32 %v643, 0.999
          %v836 = vmul.f32 %v644, 0.999
          %v837 = vmul.f32 %v645, 0.999
          %v838 = vmul.f32 %v646, 0.999
          %v839 = vmul.f32 %v647, 0.999
          %v840 = vmul.f32 %v648, 0.999
          %v841 = vmul.f32 %v649, 0.999
          %v842 = vmul.f32 %v650, 0.999
          %v843 = vmul.f32 %v651, 0.999
          %v844 = vmul.f32 %v652, 0.999
          %v845 = vmul.f32 %v653, 0.999
          %v846 = vmul.f32 %v654, 0.999
          %v847 = vmul.f32 %v655, 0.999
          %v848 = vmul.f32 %v656, 0.999
          %v849 = vmul.f32 %v657, 0.999
          %v850 = vmul.f32 %v658, 0.999
          %v851 = vmul.f32 %v659, 0.999
          %v852 = vmul.f32 %v660, 0.999
          %v853 = vmul.f32 %v661, 0.999
          %v854 = vmul.f32 %v662, 0.999
          %v855 = vmul.f32 %v663, 0.999
          %v856 = vmul.f32 %v664, 0.999
          %v857 = vmul.f32 %v665, 0.999
          %v858 = vmul.f32 %v666, 0.999
          %v859 = vmul.f32 %v667, 0.999
          %v860 = vmul.f32 %v668, 0.999
          %v861 = vmul.f32 %v669, 0.999
          %v862 = vmul.f32 %v670, 0.999
          %v863 = vmul.f32 %v671, 0.999
          %v864 = vmul.f32 %v672, 0.999
          %v865 = vmul.f32 %v673, 0.999
          %v866 = vmul.f32 %v674, 0.999
          %v867 = vmul.f32 %v675, 0.999
          %v868 = vmul.f32 %v676, 0.999
          %v869 = vmul.f32 %v677, 0.999
          %v870 = vmul.f32 %v678, 0.999
          %v871 = vmul.f32 %v679, 0.999
          %v872 = vmul.f32 %v680, 0.999
          %v873 = vmul.f32 %v681, 0.999
          %v874 = vmul.f32 %v682, 0.999
          %v875 = vmul.f32 %v683, 0.999
          %v876 = vmul.f32 %v684, 0.999
          %v877 = vmul.f32 %v685, 0.999
          %v878 = vmul.f32 %v686, 0.999
          %v879 = vmul.f32 %v687, 0.999
          %v880 = vmul.f32 %v688, 0.999
          %v881 = vmul.f32 %v689, 0.999
          %v882 = vmul.f32 %v690, 0.999
          %v883 = vmul.f32 %v691, 0.999
          %v884 = vmul.f32 %v692, 0.999
          %v885 = vmul.f32 %v693, 0.999
          %v886 = vmul.f32 %v694, 0.999
          %v887 = vmul.f32 %v695, 0.999
          %v888 = vmul.f32 %v696, 0.999
          %v889 = vmul.f32 %v697, 0.999
          %v890 = vmul.f32 %v698, 0.999
          %v891 = vmul.f32 %v699, 0.999
          %v892 = vmul.f32 %v700, 0.999
          %v893 = vmul.f32 %v701, 0.999
          %v894 = vmul.f32 %v702, 0.999
          %v895 = vmul.f32 %v703, 0.999
          %v896 = vmul.f32 %v704, 0.999
          %v897 = vmul.f32 %v705, 0.999
          %v898 = vmul.f32 %v706, 0.999
          %v899 = vmul.f32 %v707, 0.999
          %v900 = vmul.f32 %v708, 0.999
          %v901 = vmul.f32 %v709, 0.999
          %v902 = vmul.f32 %v710, 0.999
          %v903 = vmul.f32 %v711, 0.999
          %v904 = vmul.f32 %v712, 0.999
          %v905 = vmul.f32 %v713, 0.999
          %v906 = vmul.f32 %v714, 0.999
          %v907 = vmul.f32 %v715, 0.999
          %v908 = vmul.f32 %v716, 0.999
          %v909 = vmul.f32 %v717, 0.999
          %v910 = vmul.f32 %v718, 0.999
          %v911 = vmul.f32 %v719, 0.999
          %v912 = vmul.f32 %v720, 0.999
          %v913 = vmul.f32 %v721, 0.999
          %v914 = vmul.f32 %v722, 0.999
          %v915 = vmul.f32 %v723, 0.999
          %v916 = vmul.f32 %v724, 0.999
          %v917 = vmul.f32 %v725, 0.999
          %v918 = vmul.f32 %v726, 0.999
          %v919 = vmul.f32 %v727, 0.999
          %v920 = vld [vmem:[#allocation8] sm:$0xff]
          %v921 = vld [vmem:[#allocation8 + $0x8] sm:$0xff]
          %v922 = vld [vmem:[#allocation8 + $0x10] sm:$0xff]
          %v923 = vld [vmem:[#allocation8 + $0x18] sm:$0xff]
          %v924 = vld [vmem:[#allocation8 + $0x20] sm:$0xff]
          %v925 = vld [vmem:[#allocation8 + $0x28] sm:$0xff]
          %v926 = vld [vmem:[#allocation8 + $0x30] sm:$0xff]
          %v927 = vld [vmem:[#allocation8 + $0x38] sm:$0xff]
          %v928 = vld [vmem:[#allocation8 + $0x40] sm:$0xff]
          %v929 = vld [vmem:[#allocation8 + $0x48] sm:$0xff]
          %v930 = vld [vmem:[#allocation8 + $0x50] sm:$0xff]
          %v931 = vld [vmem:[#allocation8 + $0x58] sm:$0xff]
          %v932 = vld [vmem:[#allocation8 + $0x60] sm:$0xff]
          %v933 = vld [vmem:[#allocation8 + $0x68] sm:$0xff]
          %v934 = vld [vmem:[#allocation8 + $0x70] sm:$0xff]
          %v935 = vld [vmem:[#allocation8 + $0x78] sm:$0xff]
          %v936 = vld [vmem:[#allocation8 + $0x80] sm:$0xff]
          %v937 = vld [vmem:[#allocation8 + $0x88] sm:$0xff]
          %v938 = vld [vmem:[#allocation8 + $0x90] sm:$0xff]
          %v939 = vld [vmem:[#allocation8 + $0x98] sm:$0xff]
          %v940 = vld [vmem:[#allocation8 + $0xa0] sm:$0xff]
          %v941 = vld [vmem:[#allocation8 + $0xa8] sm:$0xff]
          %v942 = vld [vmem:[#allocation8 + $0xb0] sm:$0xff]
          %v943 = vld [vmem:[#allocation8 + $0xb8] sm:$0xff]
          %v944 = vld [vmem:[#allocation8 + $0xc0] sm:$0xff]
          %v945 = vld [vmem:[#allocation8 + $0xc8] sm:$0xff]
          %v946 = vld [vmem:[#allocation8 + $0xd0] sm:$0xff]
          %v947 = vld [vmem:[#allocation8 + $0xd8] sm:$0xff]
          %v948 = vld [vmem:[#allocation8 + $0xe0] sm:$0xff]
          %v949 = vld [vmem:[#allocation8 + $0xe8] sm:$0xff]
          %v950 = vld [vmem:[#allocation8 + $0xf0] sm:$0xff]
          %v951 = vld [vmem:[#allocation8 + $0xf8] sm:$0xff]
          %v952 = vld [vmem:[#allocation8 + $0x100] sm:$0xff]
          %v953 = vld [vmem:[#allocation8 + $0x108] sm:$0xff]
          %v954 = vld [vmem:[#allocation8 + $0x110] sm:$0xff]
          %v955 = vld [vmem:[#allocation8 + $0x118] sm:$0xff]
          %v956 = vld [vmem:[#allocation8 + $0x120] sm:$0xff]
          %v957 = vld [vmem:[#allocation8 + $0x128] sm:$0xff]
          %v958 = vld [vmem:[#allocation8 + $0x130] sm:$0xff]
          %v959 = vld [vmem:[#allocation8 + $0x138] sm:$0xff]
          %v960 = vld [vmem:[#allocation8 + $0x140] sm:$0xff]
          %v961 = vld [vmem:[#allocation8 + $0x148] sm:$0xff]
          %v962 = vld [vmem:[#allocation8 + $0x150] sm:$0xff]
          %v963 = vld [vmem:[#allocation8 + $0x158] sm:$0xff]
          %v964 = vld [vmem:[#allocation8 + $0x160] sm:$0xff]
          %v965 = vld [vmem:[#allocation8 + $0x168] sm:$0xff]
          %v966 = vld [vmem:[#allocation8 + $0x170] sm:$0xff]
          %v967 = vld [vmem:[#allocation8 + $0x178] sm:$0xff]
          %v968 = vld [vmem:[#allocation8 + $0x180] sm:$0xff]
          %v969 = vld [vmem:[#allocation8 + $0x188] sm:$0xff]
          %v970 = vld [vmem:[#allocation8 + $0x190] sm:$0xff]
          %v971 = vld [vmem:[#allocation8 + $0x198] sm:$0xff]
          %v972 = vld [vmem:[#allocation8 + $0x1a0] sm:$0xff]
          %v973 = vld [vmem:[#allocation8 + $0x1a8] sm:$0xff]
          %v974 = vld [vmem:[#allocation8 + $0x1b0] sm:$0xff]
          %v975 = vld [vmem:[#allocation8 + $0x1b8] sm:$0xff]
          %v976 = vld [vmem:[#allocation8 + $0x1c0] sm:$0xff]
          %v977 = vld [vmem:[#allocation8 + $0x1c8] sm:$0xff]
          %v978 = vld [vmem:[#allocation8 + $0x1d0] sm:$0xff]
          %v979 = vld [vmem:[#allocation8 + $0x1d8] sm:$0xff]
          %v980 = vld [vmem:[#allocation8 + $0x1e0] sm:$0xff]
          %v981 = vld [vmem:[#allocation8 + $0x1e8] sm:$0xff]
          %v982 = vld [vmem:[#allocation8 + $0x1f0] sm:$0xff]
          %v983 = vld [vmem:[#allocation8 + $0x1f8] sm:$0xff]
          %v984 = vld [vmem:[#allocation8 + $0x200] sm:$0xff]
          %v985 = vld [vmem:[#allocation8 + $0x208] sm:$0xff]
          %v986 = vld [vmem:[#allocation8 + $0x210] sm:$0xff]
          %v987 = vld [vmem:[#allocation8 + $0x218] sm:$0xff]
          %v988 = vld [vmem:[#allocation8 + $0x220] sm:$0xff]
          %v989 = vld [vmem:[#allocation8 + $0x228] sm:$0xff]
          %v990 = vld [vmem:[#allocation8 + $0x230] sm:$0xff]
          %v991 = vld [vmem:[#allocation8 + $0x238] sm:$0xff]
          %v992 = vld [vmem:[#allocation8 + $0x240] sm:$0xff]
          %v993 = vld [vmem:[#allocation8 + $0x248] sm:$0xff]
          %v994 = vld [vmem:[#allocation8 + $0x250] sm:$0xff]
          %v995 = vld [vmem:[#allocation8 + $0x258] sm:$0xff]
          %v996 = vld [vmem:[#allocation8 + $0x260] sm:$0xff]
          %v997 = vld [vmem:[#allocation8 + $0x268] sm:$0xff]
          %v998 = vld [vmem:[#allocation8 + $0x270] sm:$0xff]
          %v999 = vld [vmem:[#allocation8 + $0x278] sm:$0xff]
          %v1000 = vld [vmem:[#allocation8 + $0x280] sm:$0xff]
          %v1001 = vld [vmem:[#allocation8 + $0x288] sm:$0xff]
          %v1002 = vld [vmem:[#allocation8 + $0x290] sm:$0xff]
          %v1003 = vld [vmem:[#allocation8 + $0x298] sm:$0xff]
          %v1004 = vld [vmem:[#allocation8 + $0x2a0] sm:$0xff]
          %v1005 = vld [vmem:[#allocation8 + $0x2a8] sm:$0xff]
          %v1006 = vld [vmem:[#allocation8 + $0x2b0] sm:$0xff]
          %v1007 = vld [vmem:[#allocation8 + $0x2b8] sm:$0xff]
          %v1008 = vld [vmem:[#allocation8 + $0x2c0] sm:$0xff]
          %v1009 = vld [vmem:[#allocation8 + $0x2c8] sm:$0xff]
          %v1010 = vld [vmem:[#allocation8 + $0x2d0] sm:$0xff]
          %v1011 = vld [vmem:[#allocation8 + $0x2d8] sm:$0xff]
          %v1012 = vld [vmem:[#allocation8 + $0x2e0] sm:$0xff]
          %v1013 = vld [vmem:[#allocation8 + $0x2e8] sm:$0xff]
          %v1014 = vld [vmem:[#allocation8 + $0x2f0] sm:$0xff]
          %v1015 = vld [vmem:[#allocation8 + $0x2f8] sm:$0xff]
          %v1016 = vld [vmem:[#allocation8 + $0x300] sm:$0xff]
          %v1017 = vld [vmem:[#allocation8 + $0x308] sm:$0xff]
          %v1018 = vld [vmem:[#allocation8 + $0x310] sm:$0xff]
          %v1019 = vld [vmem:[#allocation8 + $0x318] sm:$0xff]
          %v1020 = vld [vmem:[#allocation8 + $0x320] sm:$0xff]
          %v1021 = vld [vmem:[#allocation8 + $0x328] sm:$0xff]
          %v1022 = vld [vmem:[#allocation8 + $0x330] sm:$0xff]
          %v1023 = vld [vmem:[#allocation8 + $0x338] sm:$0xff]
          %v1024 = vld [vmem:[#allocation8 + $0x340] sm:$0xff]
          %v1025 = vld [vmem:[#allocation8 + $0x348] sm:$0xff]
          %v1026 = vld [vmem:[#allocation8 + $0x350] sm:$0xff]
          %v1027 = vld [vmem:[#allocation8 + $0x358] sm:$0xff]
          %v1028 = vld [vmem:[#allocation8 + $0x360] sm:$0xff]
          %v1029 = vld [vmem:[#allocation8 + $0x368] sm:$0xff]
          %v1030 = vld [vmem:[#allocation8 + $0x370] sm:$0xff]
          %v1031 = vld [vmem:[#allocation8 + $0x378] sm:$0xff]
          %v1032 = vld [vmem:[#allocation8 + $0x380] sm:$0xff]
          %v1033 = vld [vmem:[#allocation8 + $0x388] sm:$0xff]
          %v1034 = vld [vmem:[#allocation8 + $0x390] sm:$0xff]
          %v1035 = vld [vmem:[#allocation8 + $0x398] sm:$0xff]
          %v1036 = vld [vmem:[#allocation8 + $0x3a0] sm:$0xff]
          %v1037 = vld [vmem:[#allocation8 + $0x3a8] sm:$0xff]
          %v1038 = vld [vmem:[#allocation8 + $0x3b0] sm:$0xff]
          %v1039 = vld [vmem:[#allocation8 + $0x3b8] sm:$0xff]
          %v1040 = vld [vmem:[#allocation8 + $0x3c0] sm:$0xff]
          %v1041 = vld [vmem:[#allocation8 + $0x3c8] sm:$0xff]
          %v1042 = vld [vmem:[#allocation8 + $0x3d0] sm:$0xff]
          %v1043 = vld [vmem:[#allocation8 + $0x3d8] sm:$0xff]
          %v1044 = vld [vmem:[#allocation8 + $0x3e0] sm:$0xff]
          %v1045 = vld [vmem:[#allocation8 + $0x3e8] sm:$0xff]
          %v1046 = vld [vmem:[#allocation8 + $0x3f0] sm:$0xff]
          %v1047 = vld [vmem:[#allocation8 + $0x3f8] sm:$0xff]
          %v1048 = vld [vmem:[#allocation8 + $0x400] sm:$0xff]
          %v1049 = vld [vmem:[#allocation8 + $0x408] sm:$0xff]
          %v1050 = vld [vmem:[#allocation8 + $0x410] sm:$0xff]
          %v1051 = vld [vmem:[#allocation8 + $0x418] sm:$0xff]
          %v1052 = vld [vmem:[#allocation8 + $0x420] sm:$0xff]
          %v1053 = vld [vmem:[#allocation8 + $0x428] sm:$0xff]
          %v1054 = vld [vmem:[#allocation8 + $0x430] sm:$0xff]
          %v1055 = vld [vmem:[#allocation8 + $0x438] sm:$0xff]
          %v1056 = vld [vmem:[#allocation8 + $0x440] sm:$0xff]
          %v1057 = vld [vmem:[#allocation8 + $0x448] sm:$0xff]
          %v1058 = vld [vmem:[#allocation8 + $0x450] sm:$0xff]
          %v1059 = vld [vmem:[#allocation8 + $0x458] sm:$0xff]
          %v1060 = vld [vmem:[#allocation8 + $0x460] sm:$0xff]
          %v1061 = vld [vmem:[#allocation8 + $0x468] sm:$0xff]
          %v1062 = vld [vmem:[#allocation8 + $0x470] sm:$0xff]
          %v1063 = vld [vmem:[#allocation8 + $0x478] sm:$0xff]
          %v1064 = vld [vmem:[#allocation8 + $0x480] sm:$0xff]
          %v1065 = vld [vmem:[#allocation8 + $0x488] sm:$0xff]
          %v1066 = vld [vmem:[#allocation8 + $0x490] sm:$0xff]
          %v1067 = vld [vmem:[#allocation8 + $0x498] sm:$0xff]
          %v1068 = vld [vmem:[#allocation8 + $0x4a0] sm:$0xff]
          %v1069 = vld [vmem:[#allocation8 + $0x4a8] sm:$0xff]
          %v1070 = vld [vmem:[#allocation8 + $0x4b0] sm:$0xff]
          %v1071 = vld [vmem:[#allocation8 + $0x4b8] sm:$0xff]
          %v1072 = vld [vmem:[#allocation8 + $0x4c0] sm:$0xff]
          %v1073 = vld [vmem:[#allocation8 + $0x4c8] sm:$0xff]
          %v1074 = vld [vmem:[#allocation8 + $0x4d0] sm:$0xff]
          %v1075 = vld [vmem:[#allocation8 + $0x4d8] sm:$0xff]
          %v1076 = vld [vmem:[#allocation8 + $0x4e0] sm:$0xff]
          %v1077 = vld [vmem:[#allocation8 + $0x4e8] sm:$0xff]
          %v1078 = vld [vmem:[#allocation8 + $0x4f0] sm:$0xff]
          %v1079 = vld [vmem:[#allocation8 + $0x4f8] sm:$0xff]
          %v1080 = vld [vmem:[#allocation8 + $0x500] sm:$0xff]
          %v1081 = vld [vmem:[#allocation8 + $0x508] sm:$0xff]
          %v1082 = vld [vmem:[#allocation8 + $0x510] sm:$0xff]
          %v1083 = vld [vmem:[#allocation8 + $0x518] sm:$0xff]
          %v1084 = vld [vmem:[#allocation8 + $0x520] sm:$0xff]
          %v1085 = vld [vmem:[#allocation8 + $0x528] sm:$0xff]
          %v1086 = vld [vmem:[#allocation8 + $0x530] sm:$0xff]
          %v1087 = vld [vmem:[#allocation8 + $0x538] sm:$0xff]
          %v1088 = vld [vmem:[#allocation8 + $0x540] sm:$0xff]
          %v1089 = vld [vmem:[#allocation8 + $0x548] sm:$0xff]
          %v1090 = vld [vmem:[#allocation8 + $0x550] sm:$0xff]
          %v1091 = vld [vmem:[#allocation8 + $0x558] sm:$0xff]
          %v1092 = vld [vmem:[#allocation8 + $0x560] sm:$0xff]
          %v1093 = vld [vmem:[#allocation8 + $0x568] sm:$0xff]
          %v1094 = vld [vmem:[#allocation8 + $0x570] sm:$0xff]
          %v1095 = vld [vmem:[#allocation8 + $0x578] sm:$0xff]
          %v1096 = vld [vmem:[#allocation8 + $0x580] sm:$0xff]
          %v1097 = vld [vmem:[#allocation8 + $0x588] sm:$0xff]
          %v1098 = vld [vmem:[#allocation8 + $0x590] sm:$0xff]
          %v1099 = vld [vmem:[#allocation8 + $0x598] sm:$0xff]
          %v1100 = vld [vmem:[#allocation8 + $0x5a0] sm:$0xff]
          %v1101 = vld [vmem:[#allocation8 + $0x5a8] sm:$0xff]
          %v1102 = vld [vmem:[#allocation8 + $0x5b0] sm:$0xff]
          %v1103 = vld [vmem:[#allocation8 + $0x5b8] sm:$0xff]
          %v1104 = vld [vmem:[#allocation8 + $0x5c0] sm:$0xff]
          %v1105 = vld [vmem:[#allocation8 + $0x5c8] sm:$0xff]
          %v1106 = vld [vmem:[#allocation8 + $0x5d0] sm:$0xff]
          %v1107 = vld [vmem:[#allocation8 + $0x5d8] sm:$0xff]
          %v1108 = vld [vmem:[#allocation8 + $0x5e0] sm:$0xff]
          %v1109 = vld [vmem:[#allocation8 + $0x5e8] sm:$0xff]
          %v1110 = vld [vmem:[#allocation8 + $0x5f0] sm:$0xff]
          %v1111 = vld [vmem:[#allocation8 + $0x5f8] sm:$0xff]
          %v1112 = vmul.f32 %v920, 0.001
          %v1113 = vmul.f32 %v921, 0.001
          %v1114 = vmul.f32 %v922, 0.001
          %v1115 = vmul.f32 %v923, 0.001
          %v1116 = vmul.f32 %v924, 0.001
          %v1117 = vmul.f32 %v925, 0.001
          %v1118 = vmul.f32 %v926, 0.001
          %v1119 = vmul.f32 %v927, 0.001
          %v1120 = vmul.f32 %v928, 0.001
          %v1121 = vmul.f32 %v929, 0.001
          %v1122 = vmul.f32 %v930, 0.001
          %v1123 = vmul.f32 %v931, 0.001
          %v1124 = vmul.f32 %v932, 0.001
          %v1125 = vmul.f32 %v933, 0.001
          %v1126 = vmul.f32 %v934, 0.001
          %v1127 = vmul.f32 %v935, 0.001
          %v1128 = vmul.f32 %v936, 0.001
          %v1129 = vmul.f32 %v937, 0.001
          %v1130 = vmul.f32 %v938, 0.001
          %v1131 = vmul.f32 %v939, 0.001
          %v1132 = vmul.f32 %v940, 0.001
          %v1133 = vmul.f32 %v941, 0.001
          %v1134 = vmul.f32 %v942, 0.001
          %v1135 = vmul.f32 %v943, 0.001
          %v1136 = vmul.f32 %v944, 0.001
          %v1137 = vmul.f32 %v945, 0.001
          %v1138 = vmul.f32 %v946, 0.001
          %v1139 = vmul.f32 %v947, 0.001
          %v1140 = vmul.f32 %v948, 0.001
          %v1141 = vmul.f32 %v949, 0.001
          %v1142 = vmul.f32 %v950, 0.001
          %v1143 = vmul.f32 %v951, 0.001
          %v1144 = vmul.f32 %v952, 0.001
          %v1145 = vmul.f32 %v953, 0.001
          %v1146 = vmul.f32 %v954, 0.001
          %v1147 = vmul.f32 %v955, 0.001
          %v1148 = vmul.f32 %v956, 0.001
          %v1149 = vmul.f32 %v957, 0.001
          %v1150 = vmul.f32 %v958, 0.001
          %v1151 = vmul.f32 %v959, 0.001
          %v1152 = vmul.f32 %v960, 0.001
          %v1153 = vmul.f32 %v961, 0.001
          %v1154 = vmul.f32 %v962, 0.001
          %v1155 = vmul.f32 %v963, 0.001
          %v1156 = vmul.f32 %v964, 0.001
          %v1157 = vmul.f32 %v965, 0.001
          %v1158 = vmul.f32 %v966, 0.001
          %v1159 = vmul.f32 %v967, 0.001
          %v1160 = vmul.f32 %v968, 0.001
          %v1161 = vmul.f32 %v969, 0.001
          %v1162 = vmul.f32 %v970, 0.001
          %v1163 = vmul.f32 %v971, 0.001
          %v1164 = vmul.f32 %v972, 0.001
          %v1165 = vmul.f32 %v973, 0.001
          %v1166 = vmul.f32 %v974, 0.001
          %v1167 = vmul.f32 %v975, 0.001
          %v1168 = vmul.f32 %v976, 0.001
          %v1169 = vmul.f32 %v977, 0.001
          %v1170 = vmul.f32 %v978, 0.001
          %v1171 = vmul.f32 %v979, 0.001
          %v1172 = vmul.f32 %v980, 0.001
          %v1173 = vmul.f32 %v981, 0.001
          %v1174 = vmul.f32 %v982, 0.001
          %v1175 = vmul.f32 %v983, 0.001
          %v1176 = vmul.f32 %v984, 0.001
          %v1177 = vmul.f32 %v985, 0.001
          %v1178 = vmul.f32 %v986, 0.001
          %v1179 = vmul.f32 %v987, 0.001
          %v1180 = vmul.f32 %v988, 0.001
          %v1181 = vmul.f32 %v989, 0.001
          %v1182 = vmul.f32 %v990, 0.001
          %v1183 = vmul.f32 %v991, 0.001
          %v1184 = vmul.f32 %v992, 0.001
          %v1185 = vmul.f32 %v993, 0.001
          %v1186 = vmul.f32 %v994, 0.001
          %v1187 = vmul.f32 %v995, 0.001
          %v1188 = vmul.f32 %v996, 0.001
          %v1189 = vmul.f32 %v997, 0.001
          %v1190 = vmul.f32 %v998, 0.001
          %v1191 = vmul.f32 %v999, 0.001
          %v1192 = vmul.f32 %v1000, 0.001
          %v1193 = vmul.f32 %v1001, 0.001
          %v1194 = vmul.f32 %v1002, 0.001
          %v1195 = vmul.f32 %v1003, 0.001
          %v1196 = vmul.f32 %v1004, 0.001
          %v1197 = vmul.f32 %v1005, 0.001
          %v1198 = vmul.f32 %v1006, 0.001
          %v1199 = vmul.f32 %v1007, 0.001
          %v1200 = vmul.f32 %v1008, 0.001
          %v1201 = vmul.f32 %v1009, 0.001
          %v1202 = vmul.f32 %v1010, 0.001
          %v1203 = vmul.f32 %v1011, 0.001
          %v1204 = vmul.f32 %v1012, 0.001
          %v1205 = vmul.f32 %v1013, 0.001
          %v1206 = vmul.f32 %v1014, 0.001
          %v1207 = vmul.f32 %v1015, 0.001
          %v1208 = vmul.f32 %v1016, 0.001
          %v1209 = vmul.f32 %v1017, 0.001
          %v1210 = vmul.f32 %v1018, 0.001
          %v1211 = vmul.f32 %v1019, 0.001
          %v1212 = vmul.f32 %v1020, 0.001
          %v1213 = vmul.f32 %v1021, 0.001
          %v1214 = vmul.f32 %v1022, 0.001
          %v1215 = vmul.f32 %v1023, 0.001
          %v1216 = vmul.f32 %v1024, 0.001
          %v1217 = vmul.f32 %v1025, 0.001
          %v1218 = vmul.f32 %v1026, 0.001
          %v1219 = vmul.f32 %v1027, 0.001
          %v1220 = vmul.f32 %v1028, 0.001
          %v1221 = vmul.f32 %v1029, 0.001
          %v1222 = vmul.f32 %v1030, 0.001
          %v1223 = vmul.f32 %v1031, 0.001
          %v1224 = vmul.f32 %v1032, 0.001
          %v1225 = vmul.f32 %v1033, 0.001
          %v1226 = vmul.f32 %v1034, 0.001
          %v1227 = vmul.f32 %v1035, 0.001
          %v1228 = vmul.f32 %v1036, 0.001
          %v1229 = vmul.f32 %v1037, 0.001
          %v1230 = vmul.f32 %v1038, 0.001
          %v1231 = vmul.f32 %v1039, 0.001
          %v1232 = vmul.f32 %v1040, 0.001
          %v1233 = vmul.f32 %v1041, 0.001
          %v1234 = vmul.f32 %v1042, 0.001
          %v1235 = vmul.f32 %v1043, 0.001
          %v1236 = vmul.f32 %v1044, 0.001
          %v1237 = vmul.f32 %v1045, 0.001
          %v1238 = vmul.f32 %v1046, 0.001
          %v1239 = vmul.f32 %v1047, 0.001
          %v1240 = vmul.f32 %v1048, 0.001
          %v1241 = vmul.f32 %v1049, 0.001
          %v1242 = vmul.f32 %v1050, 0.001
          %v1243 = vmul.f32 %v1051, 0.001
          %v1244 = vmul.f32 %v1052, 0.001
          %v1245 = vmul.f32 %v1053, 0.001
          %v1246 = vmul.f32 %v1054, 0.001
          %v1247 = vmul.f32 %v1055, 0.001
          %v1248 = vmul.f32 %v1056, 0.001
          %v1249 = vmul.f32 %v1057, 0.001
          %v1250 = vmul.f32 %v1058, 0.001
          %v1251 = vmul.f32 %v1059, 0.001
          %v1252 = vmul.f32 %v1060, 0.001
          %v1253 = vmul.f32 %v1061, 0.001
          %v1254 = vmul.f32 %v1062, 0.001
          %v1255 = vmul.f32 %v1063, 0.001
          %v1256 = vmul.f32 %v1064, 0.001
          %v1257 = vmul.f32 %v1065, 0.001
          %v1258 = vmul.f32 %v1066, 0.001
          %v1259 = vmul.f32 %v1067, 0.001
          %v1260 = vmul.f32 %v1068, 0.001
          %v1261 = vmul.f32 %v1069, 0.001
          %v1262 = vmul.f32 %v1070, 0.001
          %v1263 = vmul.f32 %v1071, 0.001
          %v1264 = vmul.f32 %v1072, 0.001
          %v1265 = vmul.f32 %v1073, 0.001
          %v1266 = vmul.f32 %v1074, 0.001
          %v1267 = vmul.f32 %v1075, 0.001
          %v1268 = vmul.f32 %v1076, 0.001
          %v1269 = vmul.f32 %v1077, 0.001
          %v1270 = vmul.f32 %v1078, 0.001
          %v1271 = vmul.f32 %v1079, 0.001
          %v1272 = vmul.f32 %v1080, 0.001
          %v1273 = vmul.f32 %v1081, 0.001
          %v1274 = vmul.f32 %v1082, 0.001
          %v1275 = vmul.f32 %v1083, 0.001
          %v1276 = vmul.f32 %v1084, 0.001
          %v1277 = vmul.f32 %v1085, 0.001
          %v1278 = vmul.f32 %v1086, 0.001
          %v1279 = vmul.f32 %v1087, 0.001
          %v1280 = vmul.f32 %v1088, 0.001
          %v1281 = vmul.f32 %v1089, 0.001
          %v1282 = vmul.f32 %v1090, 0.001
          %v1283 = vmul.f32 %v1091, 0.001
          %v1284 = vmul.f32 %v1092, 0.001
          %v1285 = vmul.f32 %v1093, 0.001
          %v1286 = vmul.f32 %v1094, 0.001
          %v1287 = vmul.f32 %v1095, 0.001
          %v1288 = vmul.f32 %v1096, 0.001
          %v1289 = vmul.f32 %v1097, 0.001
          %v1290 = vmul.f32 %v1098, 0.001
          %v1291 = vmul.f32 %v1099, 0.001
          %v1292 = vmul.f32 %v1100, 0.001
          %v1293 = vmul.f32 %v1101, 0.001
          %v1294 = vmul.f32 %v1102, 0.001
          %v1295 = vmul.f32 %v1103, 0.001
          %v1296 = vmul.f32 %v1104, 0.001
          %v1297 = vmul.f32 %v1105, 0.001
          %v1298 = vmul.f32 %v1106, 0.001
          %v1299 = vmul.f32 %v1107, 0.001
          %v1300 = vmul.f32 %v1108, 0.001
          %v1301 = vmul.f32 %v1109, 0.001
          %v1302 = vmul.f32 %v1110, 0.001
          %v1303 = vmul.f32 %v1111, 0.001
          %v1304 = vadd.f32 %v728, %v1112
          %v1305 = vadd.f32 %v729, %v1113
          %v1306 = vadd.f32 %v730, %v1114
          %v1307 = vadd.f32 %v731, %v1115
          %v1308 = vadd.f32 %v732, %v1116
          %v1309 = vadd.f32 %v733, %v1117
          %v1310 = vadd.f32 %v734, %v1118
          %v1311 = vadd.f32 %v735, %v1119
          %v1312 = vadd.f32 %v736, %v1120
          %v1313 = vadd.f32 %v737, %v1121
          %v1314 = vadd.f32 %v738, %v1122
          %v1315 = vadd.f32 %v739, %v1123
          %v1316 = vadd.f32 %v740, %v1124
          %v1317 = vadd.f32 %v741, %v1125
          %v1318 = vadd.f32 %v742, %v1126
          %v1319 = vadd.f32 %v743, %v1127
          %v1320 = vadd.f32 %v744, %v1128
          %v1321 = vadd.f32 %v745, %v1129
          %v1322 = vadd.f32 %v746, %v1130
          %v1323 = vadd.f32 %v747, %v1131
          %v1324 = vadd.f32 %v748, %v1132
          %v1325 = vadd.f32 %v749, %v1133
          %v1326 = vadd.f32 %v750, %v1134
          %v1327 = vadd.f32 %v751, %v1135
          %v1328 = vadd.f32 %v752, %v1136
          %v1329 = vadd.f32 %v753, %v1137
          %v1330 = vadd.f32 %v754, %v1138
          %v1331 = vadd.f32 %v755, %v1139
          %v1332 = vadd.f32 %v756, %v1140
          %v1333 = vadd.f32 %v757, %v1141
          %v1334 = vadd.f32 %v758, %v1142
          %v1335 = vadd.f32 %v759, %v1143
          %v1336 = vadd.f32 %v760, %v1144
          %v1337 = vadd.f32 %v761, %v1145
          %v1338 = vadd.f32 %v762, %v1146
          %v1339 = vadd.f32 %v763, %v1147
          %v1340 = vadd.f32 %v764, %v1148
          %v1341 = vadd.f32 %v765, %v1149
          %v1342 = vadd.f32 %v766, %v1150
          %v1343 = vadd.f32 %v767, %v1151
          %v1344 = vadd.f32 %v768, %v1152
          %v1345 = vadd.f32 %v769, %v1153
          %v1346 = vadd.f32 %v770, %v1154
          %v1347 = vadd.f32 %v771, %v1155
          %v1348 = vadd.f32 %v772, %v1156
          %v1349 = vadd.f32 %v773, %v1157
          %v1350 = vadd.f32 %v774, %v1158
          %v1351 = vadd.f32 %v775, %v1159
          %v1352 = vadd.f32 %v776, %v1160
          %v1353 = vadd.f32 %v777, %v1161
          %v1354 = vadd.f32 %v778, %v1162
          %v1355 = vadd.f32 %v779, %v1163
          %v1356 = vadd.f32 %v780, %v1164
          %v1357 = vadd.f32 %v781, %v1165
          %v1358 = vadd.f32 %v782, %v1166
          %v1359 = vadd.f32 %v783, %v1167
          %v1360 = vadd.f32 %v784, %v1168
          %v1361 = vadd.f32 %v785, %v1169
          %v1362 = vadd.f32 %v786, %v1170
          %v1363 = vadd.f32 %v787, %v1171
          %v1364 = vadd.f32 %v788, %v1172
          %v1365 = vadd.f32 %v789, %v1173
          %v1366 = vadd.f32 %v790, %v1174
          %v1367 = vadd.f32 %v791, %v1175
          %v1368 = vadd.f32 %v792, %v1176
          %v1369 = vadd.f32 %v793, %v1177
          %v1370 = vadd.f32 %v794, %v1178
          %v1371 = vadd.f32 %v795, %v1179
          %v1372 = vadd.f32 %v796, %v1180
          %v1373 = vadd.f32 %v797, %v1181
          %v1374 = vadd.f32 %v798, %v1182
          %v1375 = vadd.f32 %v799, %v1183
          %v1376 = vadd.f32 %v800, %v1184
          %v1377 = vadd.f32 %v801, %v1185
          %v1378 = vadd.f32 %v802, %v1186
          %v1379 = vadd.f32 %v803, %v1187
          %v1380 = vadd.f32 %v804, %v1188
          %v1381 = vadd.f32 %v805, %v1189
          %v1382 = vadd.f32 %v806, %v1190
          %v1383 = vadd.f32 %v807, %v1191
          %v1384 = vadd.f32 %v808, %v1192
          %v1385 = vadd.f32 %v809, %v1193
          %v1386 = vadd.f32 %v810, %v1194
          %v1387 = vadd.f32 %v811, %v1195
          %v1388 = vadd.f32 %v812, %v1196
          %v1389 = vadd.f32 %v813, %v1197
          %v1390 = vadd.f32 %v814, %v1198
          %v1391 = vadd.f32 %v815, %v1199
          %v1392 = vadd.f32 %v816, %v1200
          %v1393 = vadd.f32 %v817, %v1201
          %v1394 = vadd.f32 %v818, %v1202
          %v1395 = vadd.f32 %v819, %v1203
          %v1396 = vadd.f32 %v820, %v1204
          %v1397 = vadd.f32 %v821, %v1205
          %v1398 = vadd.f32 %v822, %v1206
          %v1399 = vadd.f32 %v823, %v1207
          %v1400 = vadd.f32 %v824, %v1208
          %v1401 = vadd.f32 %v825, %v1209
          %v1402 = vadd.f32 %v826, %v1210
          %v1403 = vadd.f32 %v827, %v1211
          %v1404 = vadd.f32 %v828, %v1212
          %v1405 = vadd.f32 %v829, %v1213
          %v1406 = vadd.f32 %v830, %v1214
          %v1407 = vadd.f32 %v831, %v1215
          %v1408 = vadd.f32 %v832, %v1216
          %v1409 = vadd.f32 %v833, %v1217
          %v1410 = vadd.f32 %v834, %v1218
          %v1411 = vadd.f32 %v835, %v1219
          %v1412 = vadd.f32 %v836, %v1220
          %v1413 = vadd.f32 %v837, %v1221
          %v1414 = vadd.f32 %v838, %v1222
          %v1415 = vadd.f32 %v839, %v1223
          %v1416 = vadd.f32 %v840, %v1224
          %v1417 = vadd.f32 %v841, %v1225
          %v1418 = vadd.f32 %v842, %v1226
          %v1419 = vadd.f32 %v843, %v1227
          %v1420 = vadd.f32 %v844, %v1228
          %v1421 = vadd.f32 %v845, %v1229
          %v1422 = vadd.f32 %v846, %v1230
          %v1423 = vadd.f32 %v847, %v1231
          %v1424 = vadd.f32 %v848, %v1232
          %v1425 = vadd.f32 %v849, %v1233
          %v1426 = vadd.f32 %v850, %v1234
          %v1427 = vadd.f32 %v851, %v1235
          %v1428 = vadd.f32 %v852, %v1236
          %v1429 = vadd.f32 %v853, %v1237
          %v1430 = vadd.f32 %v854, %v1238
          %v1431 = vadd.f32 %v855, %v1239
          %v1432 = vadd.f32 %v856, %v1240
          %v1433 = vadd.f32 %v857, %v1241
          %v1434 = vadd.f32 %v858, %v1242
          %v1435 = vadd.f32 %v859, %v1243
          %v1436 = vadd.f32 %v860, %v1244
          %v1437 = vadd.f32 %v861, %v1245
          %v1438 = vadd.f32 %v862, %v1246
          %v1439 = vadd.f32 %v863, %v1247
          %v1440 = vadd.f32 %v864, %v1248
          %v1441 = vadd.f32 %v865, %v1249
          %v1442 = vadd.f32 %v866, %v1250
          %v1443 = vadd.f32 %v867, %v1251
          %v1444 = vadd.f32 %v868, %v1252
          %v1445 = vadd.f32 %v869, %v1253
          %v1446 = vadd.f32 %v870, %v1254
          %v1447 = vadd.f32 %v871, %v1255
          %v1448 = vadd.f32 %v872, %v1256
          %v1449 = vadd.f32 %v873, %v1257
          %v1450 = vadd.f32 %v874, %v1258
          %v1451 = vadd.f32 %v875, %v1259
          %v1452 = vadd.f32 %v876, %v1260
          %v1453 = vadd.f32 %v877, %v1261
          %v1454 = vadd.f32 %v878, %v1262
          %v1455 = vadd.f32 %v879, %v1263
          %v1456 = vadd.f32 %v880, %v1264
          %v1457 = vadd.f32 %v881, %v1265
          %v1458 = vadd.f32 %v882, %v1266
          %v1459 = vadd.f32 %v883, %v1267
          %v1460 = vadd.f32 %v884, %v1268
          %v1461 = vadd.f32 %v885, %v1269
          %v1462 = vadd.f32 %v886, %v1270
          %v1463 = vadd.f32 %v887, %v1271
          %v1464 = vadd.f32 %v888, %v1272
          %v1465 = vadd.f32 %v889, %v1273
          %v1466 = vadd.f32 %v890, %v1274
          %v1467 = vadd.f32 %v891, %v1275
          %v1468 = vadd.f32 %v892, %v1276
          %v1469 = vadd.f32 %v893, %v1277
          %v1470 = vadd.f32 %v894, %v1278
          %v1471 = vadd.f32 %v895, %v1279
          %v1472 = vadd.f32 %v896, %v1280
          %v1473 = vadd.f32 %v897, %v1281
          %v1474 = vadd.f32 %v898, %v1282
          %v1475 = vadd.f32 %v899, %v1283
          %v1476 = vadd.f32 %v900, %v1284
          %v1477 = vadd.f32 %v901, %v1285
          %v1478 = vadd.f32 %v902, %v1286
          %v1479 = vadd.f32 %v903, %v1287
          %v1480 = vadd.f32 %v904, %v1288
          %v1481 = vadd.f32 %v905, %v1289
          %v1482 = vadd.f32 %v906, %v1290
          %v1483 = vadd.f32 %v907, %v1291
          %v1484 = vadd.f32 %v908, %v1292
          %v1485 = vadd.f32 %v909, %v1293
          %v1486 = vadd.f32 %v910, %v1294
          %v1487 = vadd.f32 %v911, %v1295
          %v1488 = vadd.f32 %v912, %v1296
          %v1489 = vadd.f32 %v913, %v1297
          %v1490 = vadd.f32 %v914, %v1298
          %v1491 = vadd.f32 %v915, %v1299
          %v1492 = vadd.f32 %v916, %v1300
          %v1493 = vadd.f32 %v917, %v1301
          %v1494 = vadd.f32 %v918, %v1302
          %v1495 = vadd.f32 %v919, %v1303
          %v1496 = vld [vmem:[%s8] sm:$0x3]
          %v1497 = vmul.f32 %v1496, 0.999
          %v1498 = vld [vmem:[%s4] sm:$0x3]
          %v1499 = vmul.f32 %v1498, 0.001
          %v1500 = vadd.f32 %v1497, %v1499
          %v1501 = vld [vmem:[%s9] sm:$0xff]
          %v1502 = vld [vmem:[%s9 + $0x8] sm:$0xff]
          %v1503 = vld [vmem:[%s9 + $0x10] sm:$0xff]
          %v1504 = vld [vmem:[%s9 + $0x18] sm:$0xff]
          %v1505 = vld [vmem:[%s9 + $0x20] sm:$0xff]
          %v1506 = vld [vmem:[%s9 + $0x28] sm:$0xff]
          %v1507 = vld [vmem:[%s9 + $0x30] sm:$0xff]
          %v1508 = vld [vmem:[%s9 + $0x38] sm:$0xff]
          %v1509 = vld [vmem:[%s9 + $0x40] sm:$0xff]
          %v1510 = vld [vmem:[%s9 + $0x48] sm:$0xff]
          %v1511 = vld [vmem:[%s9 + $0x50] sm:$0xff]
          %v1512 = vld [vmem:[%s9 + $0x58] sm:$0xff]
          %v1513 = vld [vmem:[%s9 + $0x60] sm:$0xff]
          %v1514 = vld [vmem:[%s9 + $0x68] sm:$0xff]
          %v1515 = vld [vmem:[%s9 + $0x70] sm:$0xff]
          %v1516 = vld [vmem:[%s9 + $0x78] sm:$0xff]
          %v1517 = vld [vmem:[%s9 + $0x80] sm:$0xff]
          %v1518 = vld [vmem:[%s9 + $0x88] sm:$0xff]
          %v1519 = vld [vmem:[%s9 + $0x90] sm:$0xff]
          %v1520 = vld [vmem:[%s9 + $0x98] sm:$0xff]
          %v1521 = vld [vmem:[%s9 + $0xa0] sm:$0xff]
          %v1522 = vld [vmem:[%s9 + $0xa8] sm:$0xff]
          %v1523 = vld [vmem:[%s9 + $0xb0] sm:$0xff]
          %v1524 = vld [vmem:[%s9 + $0xb8] sm:$0xff]
          %v1525 = vld [vmem:[%s9 + $0xc0] sm:$0xff]
          %v1526 = vld [vmem:[%s9 + $0xc8] sm:$0xff]
          %v1527 = vld [vmem:[%s9 + $0xd0] sm:$0xff]
          %v1528 = vld [vmem:[%s9 + $0xd8] sm:$0xff]
          %v1529 = vld [vmem:[%s9 + $0xe0] sm:$0xff]
          %v1530 = vld [vmem:[%s9 + $0xe8] sm:$0xff]
          %v1531 = vld [vmem:[%s9 + $0xf0] sm:$0xff]
          %v1532 = vld [vmem:[%s9 + $0xf8] sm:$0xff]
          %v1533 = vmul.f32 %v1501, 0.999
          %v1534 = vmul.f32 %v1502, 0.999
          %v1535 = vmul.f32 %v1503, 0.999
          %v1536 = vmul.f32 %v1504, 0.999
          %v1537 = vmul.f32 %v1505, 0.999
          %v1538 = vmul.f32 %v1506, 0.999
          %v1539 = vmul.f32 %v1507, 0.999
          %v1540 = vmul.f32 %v1508, 0.999
          %v1541 = vmul.f32 %v1509, 0.999
          %v1542 = vmul.f32 %v1510, 0.999
          %v1543 = vmul.f32 %v1511, 0.999
          %v1544 = vmul.f32 %v1512, 0.999
          %v1545 = vmul.f32 %v1513, 0.999
          %v1546 = vmul.f32 %v1514, 0.999
          %v1547 = vmul.f32 %v1515, 0.999
          %v1548 = vmul.f32 %v1516, 0.999
          %v1549 = vmul.f32 %v1517, 0.999
          %v1550 = vmul.f32 %v1518, 0.999
          %v1551 = vmul.f32 %v1519, 0.999
          %v1552 = vmul.f32 %v1520, 0.999
          %v1553 = vmul.f32 %v1521, 0.999
          %v1554 = vmul.f32 %v1522, 0.999
          %v1555 = vmul.f32 %v1523, 0.999
          %v1556 = vmul.f32 %v1524, 0.999
          %v1557 = vmul.f32 %v1525, 0.999
          %v1558 = vmul.f32 %v1526, 0.999
          %v1559 = vmul.f32 %v1527, 0.999
          %v1560 = vmul.f32 %v1528, 0.999
          %v1561 = vmul.f32 %v1529, 0.999
          %v1562 = vmul.f32 %v1530, 0.999
          %v1563 = vmul.f32 %v1531, 0.999
          %v1564 = vmul.f32 %v1532, 0.999
          %v1565 = vld [vmem:[%s5] sm:$0xff]
          %v1566 = vld [vmem:[%s5 + $0x8] sm:$0xff]
          %v1567 = vld [vmem:[%s5 + $0x10] sm:$0xff]
          %v1568 = vld [vmem:[%s5 + $0x18] sm:$0xff]
          %v1569 = vld [vmem:[%s5 + $0x20] sm:$0xff]
          %v1570 = vld [vmem:[%s5 + $0x28] sm:$0xff]
          %v1571 = vld [vmem:[%s5 + $0x30] sm:$0xff]
          %v1572 = vld [vmem:[%s5 + $0x38] sm:$0xff]
          %v1573 = vld [vmem:[%s5 + $0x40] sm:$0xff]
          %v1574 = vld [vmem:[%s5 + $0x48] sm:$0xff]
          %v1575 = vld [vmem:[%s5 + $0x50] sm:$0xff]
          %v1576 = vld [vmem:[%s5 + $0x58] sm:$0xff]
          %v1577 = vld [vmem:[%s5 + $0x60] sm:$0xff]
          %v1578 = vld [vmem:[%s5 + $0x68] sm:$0xff]
          %v1579 = vld [vmem:[%s5 + $0x70] sm:$0xff]
          %v1580 = vld [vmem:[%s5 + $0x78] sm:$0xff]
          %v1581 = vld [vmem:[%s5 + $0x80] sm:$0xff]
          %v1582 = vld [vmem:[%s5 + $0x88] sm:$0xff]
          %v1583 = vld [vmem:[%s5 + $0x90] sm:$0xff]
          %v1584 = vld [vmem:[%s5 + $0x98] sm:$0xff]
          %v1585 = vld [vmem:[%s5 + $0xa0] sm:$0xff]
          %v1586 = vld [vmem:[%s5 + $0xa8] sm:$0xff]
          %v1587 = vld [vmem:[%s5 + $0xb0] sm:$0xff]
          %v1588 = vld [vmem:[%s5 + $0xb8] sm:$0xff]
          %v1589 = vld [vmem:[%s5 + $0xc0] sm:$0xff]
          %v1590 = vld [vmem:[%s5 + $0xc8] sm:$0xff]
          %v1591 = vld [vmem:[%s5 + $0xd0] sm:$0xff]
          %v1592 = vld [vmem:[%s5 + $0xd8] sm:$0xff]
          %v1593 = vld [vmem:[%s5 + $0xe0] sm:$0xff]
          %v1594 = vld [vmem:[%s5 + $0xe8] sm:$0xff]
          %v1595 = vld [vmem:[%s5 + $0xf0] sm:$0xff]
          %v1596 = vld [vmem:[%s5 + $0xf8] sm:$0xff]
          %v1597 = vmul.f32 %v1565, 0.001
          %v1598 = vmul.f32 %v1566, 0.001
          %v1599 = vmul.f32 %v1567, 0.001
          %v1600 = vmul.f32 %v1568, 0.001
          %v1601 = vmul.f32 %v1569, 0.001
          %v1602 = vmul.f32 %v1570, 0.001
          %v1603 = vmul.f32 %v1571, 0.001
          %v1604 = vmul.f32 %v1572, 0.001
          %v1605 = vmul.f32 %v1573, 0.001
          %v1606 = vmul.f32 %v1574, 0.001
          %v1607 = vmul.f32 %v1575, 0.001
          %v1608 = vmul.f32 %v1576, 0.001
          %v1609 = vmul.f32 %v1577, 0.001
          %v1610 = vmul.f32 %v1578, 0.001
          %v1611 = vmul.f32 %v1579, 0.001
          %v1612 = vmul.f32 %v1580, 0.001
          %v1613 = vmul.f32 %v1581, 0.001
          %v1614 = vmul.f32 %v1582, 0.001
          %v1615 = vmul.f32 %v1583, 0.001
          %v1616 = vmul.f32 %v1584, 0.001
          %v1617 = vmul.f32 %v1585, 0.001
          %v1618 = vmul.f32 %v1586, 0.001
          %v1619 = vmul.f32 %v1587, 0.001
          %v1620 = vmul.f32 %v1588, 0.001
          %v1621 = vmul.f32 %v1589, 0.001
          %v1622 = vmul.f32 %v1590, 0.001
          %v1623 = vmul.f32 %v1591, 0.001
          %v1624 = vmul.f32 %v1592, 0.001
          %v1625 = vmul.f32 %v1593, 0.001
          %v1626 = vmul.f32 %v1594, 0.001
          %v1627 = vmul.f32 %v1595, 0.001
          %v1628 = vmul.f32 %v1596, 0.001
          %v1629 = vadd.f32 %v1533, %v1597
          %v1630 = vadd.f32 %v1534, %v1598
          %v1631 = vadd.f32 %v1535, %v1599
          %v1632 = vadd.f32 %v1536, %v1600
          %v1633 = vadd.f32 %v1537, %v1601
          %v1634 = vadd.f32 %v1538, %v1602
          %v1635 = vadd.f32 %v1539, %v1603
          %v1636 = vadd.f32 %v1540, %v1604
          %v1637 = vadd.f32 %v1541, %v1605
          %v1638 = vadd.f32 %v1542, %v1606
          %v1639 = vadd.f32 %v1543, %v1607
          %v1640 = vadd.f32 %v1544, %v1608
          %v1641 = vadd.f32 %v1545, %v1609
          %v1642 = vadd.f32 %v1546, %v1610
          %v1643 = vadd.f32 %v1547, %v1611
          %v1644 = vadd.f32 %v1548, %v1612
          %v1645 = vadd.f32 %v1549, %v1613
          %v1646 = vadd.f32 %v1550, %v1614
          %v1647 = vadd.f32 %v1551, %v1615
          %v1648 = vadd.f32 %v1552, %v1616
          %v1649 = vadd.f32 %v1553, %v1617
          %v1650 = vadd.f32 %v1554, %v1618
          %v1651 = vadd.f32 %v1555, %v1619
          %v1652 = vadd.f32 %v1556, %v1620
          %v1653 = vadd.f32 %v1557, %v1621
          %v1654 = vadd.f32 %v1558, %v1622
          %v1655 = vadd.f32 %v1559, %v1623
          %v1656 = vadd.f32 %v1560, %v1624
          %v1657 = vadd.f32 %v1561, %v1625
          %v1658 = vadd.f32 %v1562, %v1626
          %v1659 = vadd.f32 %v1563, %v1627
          %v1660 = vadd.f32 %v1564, %v1628
          %v1661 = vld [vmem:[%s10] sm:$0x1]
          %v1662 = vmul.f32 %v1661, 0.999
          %v1663 = vld [vmem:[%s6] sm:$0x1]
          %v1664 = vmul.f32 %v1663, 0.001
          %v1665 = vadd.f32 %v1662, %v1664
          %1666 = vst [vmem:[#allocation13] sm:$0xff] %v1304
          %1667 = vst [vmem:[#allocation13 + $0x8] sm:$0xff] %v1305
          %1668 = vst [vmem:[#allocation13 + $0x10] sm:$0xff] %v1306
          %1669 = vst [vmem:[#allocation13 + $0x18] sm:$0xff] %v1307
          %1670 = vst [vmem:[#allocation13 + $0x20] sm:$0xff] %v1308
          %1671 = vst [vmem:[#allocation13 + $0x28] sm:$0xff] %v1309
          %1672 = vst [vmem:[#allocation13 + $0x30] sm:$0xff] %v1310
          %1673 = vst [vmem:[#allocation13 + $0x38] sm:$0xff] %v1311
          %1674 = vst [vmem:[#allocation13 + $0x40] sm:$0xff] %v1312
          %1675 = vst [vmem:[#allocation13 + $0x48] sm:$0xff] %v1313
          %1676 = vst [vmem:[#allocation13 + $0x50] sm:$0xff] %v1314
          %1677 = vst [vmem:[#allocation13 + $0x58] sm:$0xff] %v1315
          %1678 = vst [vmem:[#allocation13 + $0x60] sm:$0xff] %v1316
          %1679 = vst [vmem:[#allocation13 + $0x68] sm:$0xff] %v1317
          %1680 = vst [vmem:[#allocation13 + $0x70] sm:$0xff] %v1318
          %1681 = vst [vmem:[#allocation13 + $0x78] sm:$0xff] %v1319
          %1682 = vst [vmem:[#allocation13 + $0x80] sm:$0xff] %v1320
          %1683 = vst [vmem:[#allocation13 + $0x88] sm:$0xff] %v1321
          %1684 = vst [vmem:[#allocation13 + $0x90] sm:$0xff] %v1322
          %1685 = vst [vmem:[#allocation13 + $0x98] sm:$0xff] %v1323
          %1686 = vst [vmem:[#allocation13 + $0xa0] sm:$0xff] %v1324
          %1687 = vst [vmem:[#allocation13 + $0xa8] sm:$0xff] %v1325
          %1688 = vst [vmem:[#allocation13 + $0xb0] sm:$0xff] %v1326
          %1689 = vst [vmem:[#allocation13 + $0xb8] sm:$0xff] %v1327
          %1690 = vst [vmem:[#allocation13 + $0xc0] sm:$0xff] %v1328
          %1691 = vst [vmem:[#allocation13 + $0xc8] sm:$0xff] %v1329
          %1692 = vst [vmem:[#allocation13 + $0xd0] sm:$0xff] %v1330
          %1693 = vst [vmem:[#allocation13 + $0xd8] sm:$0xff] %v1331
          %1694 = vst [vmem:[#allocation13 + $0xe0] sm:$0xff] %v1332
          %1695 = vst [vmem:[#allocation13 + $0xe8] sm:$0xff] %v1333
          %1696 = vst [vmem:[#allocation13 + $0xf0] sm:$0xff] %v1334
          %1697 = vst [vmem:[#allocation13 + $0xf8] sm:$0xff] %v1335
          %1698 = vst [vmem:[#allocation13 + $0x100] sm:$0xff] %v1336
          %1699 = vst [vmem:[#allocation13 + $0x108] sm:$0xff] %v1337
          %1700 = vst [vmem:[#allocation13 + $0x110] sm:$0xff] %v1338
          %1701 = vst [vmem:[#allocation13 + $0x118] sm:$0xff] %v1339
          %1702 = vst [vmem:[#allocation13 + $0x120] sm:$0xff] %v1340
          %1703 = vst [vmem:[#allocation13 + $0x128] sm:$0xff] %v1341
          %1704 = vst [vmem:[#allocation13 + $0x130] sm:$0xff] %v1342
          %1705 = vst [vmem:[#allocation13 + $0x138] sm:$0xff] %v1343
          %1706 = vst [vmem:[#allocation13 + $0x140] sm:$0xff] %v1344
          %1707 = vst [vmem:[#allocation13 + $0x148] sm:$0xff] %v1345
          %1708 = vst [vmem:[#allocation13 + $0x150] sm:$0xff] %v1346
          %1709 = vst [vmem:[#allocation13 + $0x158] sm:$0xff] %v1347
          %1710 = vst [vmem:[#allocation13 + $0x160] sm:$0xff] %v1348
          %1711 = vst [vmem:[#allocation13 + $0x168] sm:$0xff] %v1349
          %1712 = vst [vmem:[#allocation13 + $0x170] sm:$0xff] %v1350
          %1713 = vst [vmem:[#allocation13 + $0x178] sm:$0xff] %v1351
          %1714 = vst [vmem:[#allocation13 + $0x180] sm:$0xff] %v1352
          %1715 = vst [vmem:[#allocation13 + $0x188] sm:$0xff] %v1353
          %1716 = vst [vmem:[#allocation13 + $0x190] sm:$0xff] %v1354
          %1717 = vst [vmem:[#allocation13 + $0x198] sm:$0xff] %v1355
          %1718 = vst [vmem:[#allocation13 + $0x1a0] sm:$0xff] %v1356
          %1719 = vst [vmem:[#allocation13 + $0x1a8] sm:$0xff] %v1357
          %1720 = vst [vmem:[#allocation13 + $0x1b0] sm:$0xff] %v1358
          %1721 = vst [vmem:[#allocation13 + $0x1b8] sm:$0xff] %v1359
          %1722 = vst [vmem:[#allocation13 + $0x1c0] sm:$0xff] %v1360
          %1723 = vst [vmem:[#allocation13 + $0x1c8] sm:$0xff] %v1361
          %1724 = vst [vmem:[#allocation13 + $0x1d0] sm:$0xff] %v1362
          %1725 = vst [vmem:[#allocation13 + $0x1d8] sm:$0xff] %v1363
          %1726 = vst [vmem:[#allocation13 + $0x1e0] sm:$0xff] %v1364
          %1727 = vst [vmem:[#allocation13 + $0x1e8] sm:$0xff] %v1365
          %1728 = vst [vmem:[#allocation13 + $0x1f0] sm:$0xff] %v1366
          %1729 = vst [vmem:[#allocation13 + $0x1f8] sm:$0xff] %v1367
          %1730 = vst [vmem:[#allocation13 + $0x200] sm:$0xff] %v1368
          %1731 = vst [vmem:[#allocation13 + $0x208] sm:$0xff] %v1369
          %1732 = vst [vmem:[#allocation13 + $0x210] sm:$0xff] %v1370
          %1733 = vst [vmem:[#allocation13 + $0x218] sm:$0xff] %v1371
          %1734 = vst [vmem:[#allocation13 + $0x220] sm:$0xff] %v1372
          %1735 = vst [vmem:[#allocation13 + $0x228] sm:$0xff] %v1373
          %1736 = vst [vmem:[#allocation13 + $0x230] sm:$0xff] %v1374
          %1737 = vst [vmem:[#allocation13 + $0x238] sm:$0xff] %v1375
          %1738 = vst [vmem:[#allocation13 + $0x240] sm:$0xff] %v1376
          %1739 = vst [vmem:[#allocation13 + $0x248] sm:$0xff] %v1377
          %1740 = vst [vmem:[#allocation13 + $0x250] sm:$0xff] %v1378
          %1741 = vst [vmem:[#allocation13 + $0x258] sm:$0xff] %v1379
          %1742 = vst [vmem:[#allocation13 + $0x260] sm:$0xff] %v1380
          %1743 = vst [vmem:[#allocation13 + $0x268] sm:$0xff] %v1381
          %1744 = vst [vmem:[#allocation13 + $0x270] sm:$0xff] %v1382
          %1745 = vst [vmem:[#allocation13 + $0x278] sm:$0xff] %v1383
          %1746 = vst [vmem:[#allocation13 + $0x280] sm:$0xff] %v1384
          %1747 = vst [vmem:[#allocation13 + $0x288] sm:$0xff] %v1385
          %1748 = vst [vmem:[#allocation13 + $0x290] sm:$0xff] %v1386
          %1749 = vst [vmem:[#allocation13 + $0x298] sm:$0xff] %v1387
          %1750 = vst [vmem:[#allocation13 + $0x2a0] sm:$0xff] %v1388
          %1751 = vst [vmem:[#allocation13 + $0x2a8] sm:$0xff] %v1389
          %1752 = vst [vmem:[#allocation13 + $0x2b0] sm:$0xff] %v1390
          %1753 = vst [vmem:[#allocation13 + $0x2b8] sm:$0xff] %v1391
          %1754 = vst [vmem:[#allocation13 + $0x2c0] sm:$0xff] %v1392
          %1755 = vst [vmem:[#allocation13 + $0x2c8] sm:$0xff] %v1393
          %1756 = vst [vmem:[#allocation13 + $0x2d0] sm:$0xff] %v1394
          %1757 = vst [vmem:[#allocation13 + $0x2d8] sm:$0xff] %v1395
          %1758 = vst [vmem:[#allocation13 + $0x2e0] sm:$0xff] %v1396
          %1759 = vst [vmem:[#allocation13 + $0x2e8] sm:$0xff] %v1397
          %1760 = vst [vmem:[#allocation13 + $0x2f0] sm:$0xff] %v1398
          %1761 = vst [vmem:[#allocation13 + $0x2f8] sm:$0xff] %v1399
          %1762 = vst [vmem:[#allocation13 + $0x300] sm:$0xff] %v1400
          %1763 = vst [vmem:[#allocation13 + $0x308] sm:$0xff] %v1401
          %1764 = vst [vmem:[#allocation13 + $0x310] sm:$0xff] %v1402
          %1765 = vst [vmem:[#allocation13 + $0x318] sm:$0xff] %v1403
          %1766 = vst [vmem:[#allocation13 + $0x320] sm:$0xff] %v1404
          %1767 = vst [vmem:[#allocation13 + $0x328] sm:$0xff] %v1405
          %1768 = vst [vmem:[#allocation13 + $0x330] sm:$0xff] %v1406
          %1769 = vst [vmem:[#allocation13 + $0x338] sm:$0xff] %v1407
          %1770 = vst [vmem:[#allocation13 + $0x340] sm:$0xff] %v1408
          %1771 = vst [vmem:[#allocation13 + $0x348] sm:$0xff] %v1409
          %1772 = vst [vmem:[#allocation13 + $0x350] sm:$0xff] %v1410
          %1773 = vst [vmem:[#allocation13 + $0x358] sm:$0xff] %v1411
          %1774 = vst [vmem:[#allocation13 + $0x360] sm:$0xff] %v1412
          %1775 = vst [vmem:[#allocation13 + $0x368] sm:$0xff] %v1413
          %1776 = vst [vmem:[#allocation13 + $0x370] sm:$0xff] %v1414
          %1777 = vst [vmem:[#allocation13 + $0x378] sm:$0xff] %v1415
          %1778 = vst [vmem:[#allocation13 + $0x380] sm:$0xff] %v1416
          %1779 = vst [vmem:[#allocation13 + $0x388] sm:$0xff] %v1417
          %1780 = vst [vmem:[#allocation13 + $0x390] sm:$0xff] %v1418
          %1781 = vst [vmem:[#allocation13 + $0x398] sm:$0xff] %v1419
          %1782 = vst [vmem:[#allocation13 + $0x3a0] sm:$0xff] %v1420
          %1783 = vst [vmem:[#allocation13 + $0x3a8] sm:$0xff] %v1421
          %1784 = vst [vmem:[#allocation13 + $0x3b0] sm:$0xff] %v1422
          %1785 = vst [vmem:[#allocation13 + $0x3b8] sm:$0xff] %v1423
          %1786 = vst [vmem:[#allocation13 + $0x3c0] sm:$0xff] %v1424
          %1787 = vst [vmem:[#allocation13 + $0x3c8] sm:$0xff] %v1425
          %1788 = vst [vmem:[#allocation13 + $0x3d0] sm:$0xff] %v1426
          %1789 = vst [vmem:[#allocation13 + $0x3d8] sm:$0xff] %v1427
          %1790 = vst [vmem:[#allocation13 + $0x3e0] sm:$0xff] %v1428
          %1791 = vst [vmem:[#allocation13 + $0x3e8] sm:$0xff] %v1429
          %1792 = vst [vmem:[#allocation13 + $0x3f0] sm:$0xff] %v1430
          %1793 = vst [vmem:[#allocation13 + $0x3f8] sm:$0xff] %v1431
          %1794 = vst [vmem:[#allocation13 + $0x400] sm:$0xff] %v1432
          %1795 = vst [vmem:[#allocation13 + $0x408] sm:$0xff] %v1433
          %1796 = vst [vmem:[#allocation13 + $0x410] sm:$0xff] %v1434
          %1797 = vst [vmem:[#allocation13 + $0x418] sm:$0xff] %v1435
          %1798 = vst [vmem:[#allocation13 + $0x420] sm:$0xff] %v1436
          %1799 = vst [vmem:[#allocation13 + $0x428] sm:$0xff] %v1437
          %1800 = vst [vmem:[#allocation13 + $0x430] sm:$0xff] %v1438
          %1801 = vst [vmem:[#allocation13 + $0x438] sm:$0xff] %v1439
          %1802 = vst [vmem:[#allocation13 + $0x440] sm:$0xff] %v1440
          %1803 = vst [vmem:[#allocation13 + $0x448] sm:$0xff] %v1441
          %1804 = vst [vmem:[#allocation13 + $0x450] sm:$0xff] %v1442
          %1805 = vst [vmem:[#allocation13 + $0x458] sm:$0xff] %v1443
          %1806 = vst [vmem:[#allocation13 + $0x460] sm:$0xff] %v1444
          %1807 = vst [vmem:[#allocation13 + $0x468] sm:$0xff] %v1445
          %1808 = vst [vmem:[#allocation13 + $0x470] sm:$0xff] %v1446
          %1809 = vst [vmem:[#allocation13 + $0x478] sm:$0xff] %v1447
          %1810 = vst [vmem:[#allocation13 + $0x480] sm:$0xff] %v1448
          %1811 = vst [vmem:[#allocation13 + $0x488] sm:$0xff] %v1449
          %1812 = vst [vmem:[#allocation13 + $0x490] sm:$0xff] %v1450
          %1813 = vst [vmem:[#allocation13 + $0x498] sm:$0xff] %v1451
          %1814 = vst [vmem:[#allocation13 + $0x4a0] sm:$0xff] %v1452
          %1815 = vst [vmem:[#allocation13 + $0x4a8] sm:$0xff] %v1453
          %1816 = vst [vmem:[#allocation13 + $0x4b0] sm:$0xff] %v1454
          %1817 = vst [vmem:[#allocation13 + $0x4b8] sm:$0xff] %v1455
          %1818 = vst [vmem:[#allocation13 + $0x4c0] sm:$0xff] %v1456
          %1819 = vst [vmem:[#allocation13 + $0x4c8] sm:$0xff] %v1457
          %1820 = vst [vmem:[#allocation13 + $0x4d0] sm:$0xff] %v1458
          %1821 = vst [vmem:[#allocation13 + $0x4d8] sm:$0xff] %v1459
          %1822 = vst [vmem:[#allocation13 + $0x4e0] sm:$0xff] %v1460
          %1823 = vst [vmem:[#allocation13 + $0x4e8] sm:$0xff] %v1461
          %1824 = vst [vmem:[#allocation13 + $0x4f0] sm:$0xff] %v1462
          %1825 = vst [vmem:[#allocation13 + $0x4f8] sm:$0xff] %v1463
          %1826 = vst [vmem:[#allocation13 + $0x500] sm:$0xff] %v1464
          %1827 = vst [vmem:[#allocation13 + $0x508] sm:$0xff] %v1465
          %1828 = vst [vmem:[#allocation13 + $0x510] sm:$0xff] %v1466
          %1829 = vst [vmem:[#allocation13 + $0x518] sm:$0xff] %v1467
          %1830 = vst [vmem:[#allocation13 + $0x520] sm:$0xff] %v1468
          %1831 = vst [vmem:[#allocation13 + $0x528] sm:$0xff] %v1469
          %1832 = vst [vmem:[#allocation13 + $0x530] sm:$0xff] %v1470
          %1833 = vst [vmem:[#allocation13 + $0x538] sm:$0xff] %v1471
          %1834 = vst [vmem:[#allocation13 + $0x540] sm:$0xff] %v1472
          %1835 = vst [vmem:[#allocation13 + $0x548] sm:$0xff] %v1473
          %1836 = vst [vmem:[#allocation13 + $0x550] sm:$0xff] %v1474
          %1837 = vst [vmem:[#allocation13 + $0x558] sm:$0xff] %v1475
          %1838 = vst [vmem:[#allocation13 + $0x560] sm:$0xff] %v1476
          %1839 = vst [vmem:[#allocation13 + $0x568] sm:$0xff] %v1477
          %1840 = vst [vmem:[#allocation13 + $0x570] sm:$0xff] %v1478
          %1841 = vst [vmem:[#allocation13 + $0x578] sm:$0xff] %v1479
          %1842 = vst [vmem:[#allocation13 + $0x580] sm:$0xff] %v1480
          %1843 = vst [vmem:[#allocation13 + $0x588] sm:$0xff] %v1481
          %1844 = vst [vmem:[#allocation13 + $0x590] sm:$0xff] %v1482
          %1845 = vst [vmem:[#allocation13 + $0x598] sm:$0xff] %v1483
          %1846 = vst [vmem:[#allocation13 + $0x5a0] sm:$0xff] %v1484
          %1847 = vst [vmem:[#allocation13 + $0x5a8] sm:$0xff] %v1485
          %1848 = vst [vmem:[#allocation13 + $0x5b0] sm:$0xff] %v1486
          %1849 = vst [vmem:[#allocation13 + $0x5b8] sm:$0xff] %v1487
          %1850 = vst [vmem:[#allocation13 + $0x5c0] sm:$0xff] %v1488
          %1851 = vst [vmem:[#allocation13 + $0x5c8] sm:$0xff] %v1489
          %1852 = vst [vmem:[#allocation13 + $0x5d0] sm:$0xff] %v1490
          %1853 = vst [vmem:[#allocation13 + $0x5d8] sm:$0xff] %v1491
          %1854 = vst [vmem:[#allocation13 + $0x5e0] sm:$0xff] %v1492
          %1855 = vst [vmem:[#allocation13 + $0x5e8] sm:$0xff] %v1493
          %1856 = vst [vmem:[#allocation13 + $0x5f0] sm:$0xff] %v1494
          %1857 = vst [vmem:[#allocation13 + $0x5f8] sm:$0xff] %v1495
          %v1858 = vlaneseq
          %vm1859 = vcmp.ge.s32.totalorder %v1858, 0
          %vm1860 = vcmp.lt.s32.totalorder %v1858, 256
          %vm1861 = vmand %vm1859, %vm1860
          %1862 = vst.msk [vmem:[%s15] sm:$0x3] %vm1861, %v1500
          %1863 = vst [vmem:[%s16] sm:$0xff] %v1629
          %1864 = vst [vmem:[%s16 + $0x8] sm:$0xff] %v1630
          %1865 = vst [vmem:[%s16 + $0x10] sm:$0xff] %v1631
          %1866 = vst [vmem:[%s16 + $0x18] sm:$0xff] %v1632
          %1867 = vst [vmem:[%s16 + $0x20] sm:$0xff] %v1633
          %1868 = vst [vmem:[%s16 + $0x28] sm:$0xff] %v1634
          %1869 = vst [vmem:[%s16 + $0x30] sm:$0xff] %v1635
          %1870 = vst [vmem:[%s16 + $0x38] sm:$0xff] %v1636
          %1871 = vst [vmem:[%s16 + $0x40] sm:$0xff] %v1637
          %1872 = vst [vmem:[%s16 + $0x48] sm:$0xff] %v1638
          %1873 = vst [vmem:[%s16 + $0x50] sm:$0xff] %v1639
          %1874 = vst [vmem:[%s16 + $0x58] sm:$0xff] %v1640
          %1875 = vst [vmem:[%s16 + $0x60] sm:$0xff] %v1641
          %1876 = vst [vmem:[%s16 + $0x68] sm:$0xff] %v1642
          %1877 = vst [vmem:[%s16 + $0x70] sm:$0xff] %v1643
          %1878 = vst [vmem:[%s16 + $0x78] sm:$0xff] %v1644
          %1879 = vst [vmem:[%s16 + $0x80] sm:$0xff] %v1645
          %1880 = vst [vmem:[%s16 + $0x88] sm:$0xff] %v1646
          %1881 = vst [vmem:[%s16 + $0x90] sm:$0xff] %v1647
          %1882 = vst [vmem:[%s16 + $0x98] sm:$0xff] %v1648
          %1883 = vst [vmem:[%s16 + $0xa0] sm:$0xff] %v1649
          %1884 = vst [vmem:[%s16 + $0xa8] sm:$0xff] %v1650
          %1885 = vst [vmem:[%s16 + $0xb0] sm:$0xff] %v1651
          %1886 = vst [vmem:[%s16 + $0xb8] sm:$0xff] %v1652
          %1887 = vst [vmem:[%s16 + $0xc0] sm:$0xff] %v1653
          %1888 = vst [vmem:[%s16 + $0xc8] sm:$0xff] %v1654
          %1889 = vst [vmem:[%s16 + $0xd0] sm:$0xff] %v1655
          %1890 = vst [vmem:[%s16 + $0xd8] sm:$0xff] %v1656
          %1891 = vst [vmem:[%s16 + $0xe0] sm:$0xff] %v1657
          %1892 = vst [vmem:[%s16 + $0xe8] sm:$0xff] %v1658
          %1893 = vst [vmem:[%s16 + $0xf0] sm:$0xff] %v1659
          %1894 = vst [vmem:[%s16 + $0xf8] sm:$0xff] %v1660
          %1895 = vst [vmem:[%s17] sm:$0x1] %v1665
          %v1896 = vld [vmem:[%s0] sm:$0xff]
          %v1897 = vld [vmem:[%s0 + $0x8] sm:$0xff]
          %v1898 = vld [vmem:[%s0 + $0x10] sm:$0xff]
          %v1899 = vld [vmem:[%s0 + $0x18] sm:$0xff]
          %v1900 = vld [vmem:[%s0 + $0x20] sm:$0xff]
          %v1901 = vld [vmem:[%s0 + $0x28] sm:$0xff]
          %v1902 = vld [vmem:[#allocation8] sm:$0xff]
          %v1903 = vld [vmem:[#allocation8 + $0x8] sm:$0xff]
          %v1904 = vld [vmem:[#allocation8 + $0x10] sm:$0xff]
          %v1905 = vld [vmem:[#allocation8 + $0x18] sm:$0xff]
          %v1906 = vld [vmem:[#allocation8 + $0x20] sm:$0xff]
          %v1907 = vld [vmem:[#allocation8 + $0x28] sm:$0xff]
          %v1908 = vld [vmem:[#allocation8 + $0x30] sm:$0xff]
          %v1909 = vld [vmem:[#allocation8 + $0x38] sm:$0xff]
          %v1910 = vld [vmem:[#allocation8 + $0x40] sm:$0xff]
          %v1911 = vld [vmem:[#allocation8 + $0x48] sm:$0xff]
          %v1912 = vld [vmem:[#allocation8 + $0x50] sm:$0xff]
          %v1913 = vld [vmem:[#allocation8 + $0x58] sm:$0xff]
          %v1914 = vld [vmem:[#allocation8 + $0x60] sm:$0xff]
          %v1915 = vld [vmem:[#allocation8 + $0x68] sm:$0xff]
          %v1916 = vld [vmem:[#allocation8 + $0x70] sm:$0xff]
          %v1917 = vld [vmem:[#allocation8 + $0x78] sm:$0xff]
          %v1918 = vld [vmem:[#allocation8 + $0x80] sm:$0xff]
          %v1919 = vld [vmem:[#allocation8 + $0x88] sm:$0xff]
          %v1920 = vld [vmem:[#allocation8 + $0x90] sm:$0xff]
          %v1921 = vld [vmem:[#allocation8 + $0x98] sm:$0xff]
          %v1922 = vld [vmem:[#allocation8 + $0xa0] sm:$0xff]
          %v1923 = vld [vmem:[#allocation8 + $0xa8] sm:$0xff]
          %v1924 = vld [vmem:[#allocation8 + $0xb0] sm:$0xff]
          %v1925 = vld [vmem:[#allocation8 + $0xb8] sm:$0xff]
          %v1926 = vld [vmem:[#allocation8 + $0xc0] sm:$0xff]
          %v1927 = vld [vmem:[#allocation8 + $0xc8] sm:$0xff]
          %v1928 = vld [vmem:[#allocation8 + $0xd0] sm:$0xff]
          %v1929 = vld [vmem:[#allocation8 + $0xd8] sm:$0xff]
          %v1930 = vld [vmem:[#allocation8 + $0xe0] sm:$0xff]
          %v1931 = vld [vmem:[#allocation8 + $0xe8] sm:$0xff]
          %v1932 = vld [vmem:[#allocation8 + $0xf0] sm:$0xff]
          %v1933 = vld [vmem:[#allocation8 + $0xf8] sm:$0xff]
          %v1934 = vld [vmem:[#allocation8 + $0x100] sm:$0xff]
          %v1935 = vld [vmem:[#allocation8 + $0x108] sm:$0xff]
          %v1936 = vld [vmem:[#allocation8 + $0x110] sm:$0xff]
          %v1937 = vld [vmem:[#allocation8 + $0x118] sm:$0xff]
          %v1938 = vld [vmem:[#allocation8 + $0x120] sm:$0xff]
          %v1939 = vld [vmem:[#allocation8 + $0x128] sm:$0xff]
          %v1940 = vld [vmem:[#allocation8 + $0x130] sm:$0xff]
          %v1941 = vld [vmem:[#allocation8 + $0x138] sm:$0xff]
          %v1942 = vld [vmem:[#allocation8 + $0x140] sm:$0xff]
          %v1943 = vld [vmem:[#allocation8 + $0x148] sm:$0xff]
          %v1944 = vld [vmem:[#allocation8 + $0x150] sm:$0xff]
          %v1945 = vld [vmem:[#allocation8 + $0x158] sm:$0xff]
          %v1946 = vld [vmem:[#allocation8 + $0x160] sm:$0xff]
          %v1947 = vld [vmem:[#allocation8 + $0x168] sm:$0xff]
          %v1948 = vld [vmem:[#allocation8 + $0x170] sm:$0xff]
          %v1949 = vld [vmem:[#allocation8 + $0x178] sm:$0xff]
          %v1950 = vld [vmem:[#allocation8 + $0x180] sm:$0xff]
          %v1951 = vld [vmem:[#allocation8 + $0x188] sm:$0xff]
          %v1952 = vld [vmem:[#allocation8 + $0x190] sm:$0xff]
          %v1953 = vld [vmem:[#allocation8 + $0x198] sm:$0xff]
          %v1954 = vld [vmem:[#allocation8 + $0x1a0] sm:$0xff]
          %v1955 = vld [vmem:[#allocation8 + $0x1a8] sm:$0xff]
          %v1956 = vld [vmem:[#allocation8 + $0x1b0] sm:$0xff]
          %v1957 = vld [vmem:[#allocation8 + $0x1b8] sm:$0xff]
          %v1958 = vld [vmem:[#allocation8 + $0x1c0] sm:$0xff]
          %v1959 = vld [vmem:[#allocation8 + $0x1c8] sm:$0xff]
          %v1960 = vld [vmem:[#allocation8 + $0x1d0] sm:$0xff]
          %v1961 = vld [vmem:[#allocation8 + $0x1d8] sm:$0xff]
          %v1962 = vld [vmem:[#allocation8 + $0x1e0] sm:$0xff]
          %v1963 = vld [vmem:[#allocation8 + $0x1e8] sm:$0xff]
          %v1964 = vld [vmem:[#allocation8 + $0x1f0] sm:$0xff]
          %v1965 = vld [vmem:[#allocation8 + $0x1f8] sm:$0xff]
          %v1966 = vld [vmem:[#allocation8 + $0x200] sm:$0xff]
          %v1967 = vld [vmem:[#allocation8 + $0x208] sm:$0xff]
          %v1968 = vld [vmem:[#allocation8 + $0x210] sm:$0xff]
          %v1969 = vld [vmem:[#allocation8 + $0x218] sm:$0xff]
          %v1970 = vld [vmem:[#allocation8 + $0x220] sm:$0xff]
          %v1971 = vld [vmem:[#allocation8 + $0x228] sm:$0xff]
          %v1972 = vld [vmem:[#allocation8 + $0x230] sm:$0xff]
          %v1973 = vld [vmem:[#allocation8 + $0x238] sm:$0xff]
          %v1974 = vld [vmem:[#allocation8 + $0x240] sm:$0xff]
          %v1975 = vld [vmem:[#allocation8 + $0x248] sm:$0xff]
          %v1976 = vld [vmem:[#allocation8 + $0x250] sm:$0xff]
          %v1977 = vld [vmem:[#allocation8 + $0x258] sm:$0xff]
          %v1978 = vld [vmem:[#allocation8 + $0x260] sm:$0xff]
          %v1979 = vld [vmem:[#allocation8 + $0x268] sm:$0xff]
          %v1980 = vld [vmem:[#allocation8 + $0x270] sm:$0xff]
          %v1981 = vld [vmem:[#allocation8 + $0x278] sm:$0xff]
          %v1982 = vld [vmem:[#allocation8 + $0x280] sm:$0xff]
          %v1983 = vld [vmem:[#allocation8 + $0x288] sm:$0xff]
          %v1984 = vld [vmem:[#allocation8 + $0x290] sm:$0xff]
          %v1985 = vld [vmem:[#allocation8 + $0x298] sm:$0xff]
          %v1986 = vld [vmem:[#allocation8 + $0x2a0] sm:$0xff]
          %v1987 = vld [vmem:[#allocation8 + $0x2a8] sm:$0xff]
          %v1988 = vld [vmem:[#allocation8 + $0x2b0] sm:$0xff]
          %v1989 = vld [vmem:[#allocation8 + $0x2b8] sm:$0xff]
          %v1990 = vld [vmem:[#allocation8 + $0x2c0] sm:$0xff]
          %v1991 = vld [vmem:[#allocation8 + $0x2c8] sm:$0xff]
          %v1992 = vld [vmem:[#allocation8 + $0x2d0] sm:$0xff]
          %v1993 = vld [vmem:[#allocation8 + $0x2d8] sm:$0xff]
          %v1994 = vld [vmem:[#allocation8 + $0x2e0] sm:$0xff]
          %v1995 = vld [vmem:[#allocation8 + $0x2e8] sm:$0xff]
          %v1996 = vld [vmem:[#allocation8 + $0x2f0] sm:$0xff]
          %v1997 = vld [vmem:[#allocation8 + $0x2f8] sm:$0xff]
          %v1998 = vld [vmem:[#allocation8 + $0x300] sm:$0xff]
          %v1999 = vld [vmem:[#allocation8 + $0x308] sm:$0xff]
          %v2000 = vld [vmem:[#allocation8 + $0x310] sm:$0xff]
          %v2001 = vld [vmem:[#allocation8 + $0x318] sm:$0xff]
          %v2002 = vld [vmem:[#allocation8 + $0x320] sm:$0xff]
          %v2003 = vld [vmem:[#allocation8 + $0x328] sm:$0xff]
          %v2004 = vld [vmem:[#allocation8 + $0x330] sm:$0xff]
          %v2005 = vld [vmem:[#allocation8 + $0x338] sm:$0xff]
          %v2006 = vld [vmem:[#allocation8 + $0x340] sm:$0xff]
          %v2007 = vld [vmem:[#allocation8 + $0x348] sm:$0xff]
          %v2008 = vld [vmem:[#allocation8 + $0x350] sm:$0xff]
          %v2009 = vld [vmem:[#allocation8 + $0x358] sm:$0xff]
          %v2010 = vld [vmem:[#allocation8 + $0x360] sm:$0xff]
          %v2011 = vld [vmem:[#allocation8 + $0x368] sm:$0xff]
          %v2012 = vld [vmem:[#allocation8 + $0x370] sm:$0xff]
          %v2013 = vld [vmem:[#allocation8 + $0x378] sm:$0xff]
          %v2014 = vld [vmem:[#allocation8 + $0x380] sm:$0xff]
          %v2015 = vld [vmem:[#allocation8 + $0x388] sm:$0xff]
          %v2016 = vld [vmem:[#allocation8 + $0x390] sm:$0xff]
          %v2017 = vld [vmem:[#allocation8 + $0x398] sm:$0xff]
          %v2018 = vld [vmem:[#allocation8 + $0x3a0] sm:$0xff]
          %v2019 = vld [vmem:[#allocation8 + $0x3a8] sm:$0xff]
          %v2020 = vld [vmem:[#allocation8 + $0x3b0] sm:$0xff]
          %v2021 = vld [vmem:[#allocation8 + $0x3b8] sm:$0xff]
          %v2022 = vld [vmem:[#allocation8 + $0x3c0] sm:$0xff]
          %v2023 = vld [vmem:[#allocation8 + $0x3c8] sm:$0xff]
          %v2024 = vld [vmem:[#allocation8 + $0x3d0] sm:$0xff]
          %v2025 = vld [vmem:[#allocation8 + $0x3d8] sm:$0xff]
          %v2026 = vld [vmem:[#allocation8 + $0x3e0] sm:$0xff]
          %v2027 = vld [vmem:[#allocation8 + $0x3e8] sm:$0xff]
          %v2028 = vld [vmem:[#allocation8 + $0x3f0] sm:$0xff]
          %v2029 = vld [vmem:[#allocation8 + $0x3f8] sm:$0xff]
          %v2030 = vld [vmem:[#allocation8 + $0x400] sm:$0xff]
          %v2031 = vld [vmem:[#allocation8 + $0x408] sm:$0xff]
          %v2032 = vld [vmem:[#allocation8 + $0x410] sm:$0xff]
          %v2033 = vld [vmem:[#allocation8 + $0x418] sm:$0xff]
          %v2034 = vld [vmem:[#allocation8 + $0x420] sm:$0xff]
          %v2035 = vld [vmem:[#allocation8 + $0x428] sm:$0xff]
          %v2036 = vld [vmem:[#allocation8 + $0x430] sm:$0xff]
          %v2037 = vld [vmem:[#allocation8 + $0x438] sm:$0xff]
          %v2038 = vld [vmem:[#allocation8 + $0x440] sm:$0xff]
          %v2039 = vld [vmem:[#allocation8 + $0x448] sm:$0xff]
          %v2040 = vld [vmem:[#allocation8 + $0x450] sm:$0xff]
          %v2041 = vld [vmem:[#allocation8 + $0x458] sm:$0xff]
          %v2042 = vld [vmem:[#allocation8 + $0x460] sm:$0xff]
          %v2043 = vld [vmem:[#allocation8 + $0x468] sm:$0xff]
          %v2044 = vld [vmem:[#allocation8 + $0x470] sm:$0xff]
          %v2045 = vld [vmem:[#allocation8 + $0x478] sm:$0xff]
          %v2046 = vld [vmem:[#allocation8 + $0x480] sm:$0xff]
          %v2047 = vld [vmem:[#allocation8 + $0x488] sm:$0xff]
          %v2048 = vld [vmem:[#allocation8 + $0x490] sm:$0xff]
          %v2049 = vld [vmem:[#allocation8 + $0x498] sm:$0xff]
          %v2050 = vld [vmem:[#allocation8 + $0x4a0] sm:$0xff]
          %v2051 = vld [vmem:[#allocation8 + $0x4a8] sm:$0xff]
          %v2052 = vld [vmem:[#allocation8 + $0x4b0] sm:$0xff]
          %v2053 = vld [vmem:[#allocation8 + $0x4b8] sm:$0xff]
          %v2054 = vld [vmem:[#allocation8 + $0x4c0] sm:$0xff]
          %v2055 = vld [vmem:[#allocation8 + $0x4c8] sm:$0xff]
          %v2056 = vld [vmem:[#allocation8 + $0x4d0] sm:$0xff]
          %v2057 = vld [vmem:[#allocation8 + $0x4d8] sm:$0xff]
          %v2058 = vld [vmem:[#allocation8 + $0x4e0] sm:$0xff]
          %v2059 = vld [vmem:[#allocation8 + $0x4e8] sm:$0xff]
          %v2060 = vld [vmem:[#allocation8 + $0x4f0] sm:$0xff]
          %v2061 = vld [vmem:[#allocation8 + $0x4f8] sm:$0xff]
          %v2062 = vld [vmem:[#allocation8 + $0x500] sm:$0xff]
          %v2063 = vld [vmem:[#allocation8 + $0x508] sm:$0xff]
          %v2064 = vld [vmem:[#allocation8 + $0x510] sm:$0xff]
          %v2065 = vld [vmem:[#allocation8 + $0x518] sm:$0xff]
          %v2066 = vld [vmem:[#allocation8 + $0x520] sm:$0xff]
          %v2067 = vld [vmem:[#allocation8 + $0x528] sm:$0xff]
          %v2068 = vld [vmem:[#allocation8 + $0x530] sm:$0xff]
          %v2069 = vld [vmem:[#allocation8 + $0x538] sm:$0xff]
          %v2070 = vld [vmem:[#allocation8 + $0x540] sm:$0xff]
          %v2071 = vld [vmem:[#allocation8 + $0x548] sm:$0xff]
          %v2072 = vld [vmem:[#allocation8 + $0x550] sm:$0xff]
          %v2073 = vld [vmem:[#allocation8 + $0x558] sm:$0xff]
          %v2074 = vld [vmem:[#allocation8 + $0x560] sm:$0xff]
          %v2075 = vld [vmem:[#allocation8 + $0x568] sm:$0xff]
          %v2076 = vld [vmem:[#allocation8 + $0x570] sm:$0xff]
          %v2077 = vld [vmem:[#allocation8 + $0x578] sm:$0xff]
          %v2078 = vld [vmem:[#allocation8 + $0x580] sm:$0xff]
          %v2079 = vld [vmem:[#allocation8 + $0x588] sm:$0xff]
          %v2080 = vld [vmem:[#allocation8 + $0x590] sm:$0xff]
          %v2081 = vld [vmem:[#allocation8 + $0x598] sm:$0xff]
          %v2082 = vld [vmem:[#allocation8 + $0x5a0] sm:$0xff]
          %v2083 = vld [vmem:[#allocation8 + $0x5a8] sm:$0xff]
          %v2084 = vld [vmem:[#allocation8 + $0x5b0] sm:$0xff]
          %v2085 = vld [vmem:[#allocation8 + $0x5b8] sm:$0xff]
          %v2086 = vld [vmem:[#allocation8 + $0x5c0] sm:$0xff]
          %v2087 = vld [vmem:[#allocation8 + $0x5c8] sm:$0xff]
          %v2088 = vld [vmem:[#allocation8 + $0x5d0] sm:$0xff]
          %v2089 = vld [vmem:[#allocation8 + $0x5d8] sm:$0xff]
          %v2090 = vld [vmem:[#allocation8 + $0x5e0] sm:$0xff]
          %v2091 = vld [vmem:[#allocation8 + $0x5e8] sm:$0xff]
          %v2092 = vld [vmem:[#allocation8 + $0x5f0] sm:$0xff]
          %v2093 = vld [vmem:[#allocation8 + $0x5f8] sm:$0xff]
          %v2094 = vld [vmem:[%s4] sm:$0x3]
          %v2095 = vld [vmem:[%s5] sm:$0xff]
          %v2096 = vld [vmem:[%s5 + $0x8] sm:$0xff]
          %v2097 = vld [vmem:[%s5 + $0x10] sm:$0xff]
          %v2098 = vld [vmem:[%s5 + $0x18] sm:$0xff]
          %v2099 = vld [vmem:[%s5 + $0x20] sm:$0xff]
          %v2100 = vld [vmem:[%s5 + $0x28] sm:$0xff]
          %v2101 = vld [vmem:[%s5 + $0x30] sm:$0xff]
          %v2102 = vld [vmem:[%s5 + $0x38] sm:$0xff]
          %v2103 = vld [vmem:[%s5 + $0x40] sm:$0xff]
          %v2104 = vld [vmem:[%s5 + $0x48] sm:$0xff]
          %v2105 = vld [vmem:[%s5 + $0x50] sm:$0xff]
          %v2106 = vld [vmem:[%s5 + $0x58] sm:$0xff]
          %v2107 = vld [vmem:[%s5 + $0x60] sm:$0xff]
          %v2108 = vld [vmem:[%s5 + $0x68] sm:$0xff]
          %v2109 = vld [vmem:[%s5 + $0x70] sm:$0xff]
          %v2110 = vld [vmem:[%s5 + $0x78] sm:$0xff]
          %v2111 = vld [vmem:[%s5 + $0x80] sm:$0xff]
          %v2112 = vld [vmem:[%s5 + $0x88] sm:$0xff]
          %v2113 = vld [vmem:[%s5 + $0x90] sm:$0xff]
          %v2114 = vld [vmem:[%s5 + $0x98] sm:$0xff]
          %v2115 = vld [vmem:[%s5 + $0xa0] sm:$0xff]
          %v2116 = vld [vmem:[%s5 + $0xa8] sm:$0xff]
          %v2117 = vld [vmem:[%s5 + $0xb0] sm:$0xff]
          %v2118 = vld [vmem:[%s5 + $0xb8] sm:$0xff]
          %v2119 = vld [vmem:[%s5 + $0xc0] sm:$0xff]
          %v2120 = vld [vmem:[%s5 + $0xc8] sm:$0xff]
          %v2121 = vld [vmem:[%s5 + $0xd0] sm:$0xff]
          %v2122 = vld [vmem:[%s5 + $0xd8] sm:$0xff]
          %v2123 = vld [vmem:[%s5 + $0xe0] sm:$0xff]
          %v2124 = vld [vmem:[%s5 + $0xe8] sm:$0xff]
          %v2125 = vld [vmem:[%s5 + $0xf0] sm:$0xff]
          %v2126 = vld [vmem:[%s5 + $0xf8] sm:$0xff]
          %v2127 = vld [vmem:[%s6] sm:$0x1]
          %v2128 = vpack.c.bf16 %v1896, %v1896
          %v2129 = vpack.c.bf16 %v1897, %v1897
          %v2130 = vpack.c.bf16 %v1898, %v1898
          %v2131 = vpack.c.bf16 %v1899, %v1899
          %v2132 = vpack.c.bf16 %v1900, %v1900
          %v2133 = vpack.c.bf16 %v1901, %v1901
          %v2134 = vpack.c.bf16 %v1904, %v1902
          %v2135 = vpack.c.bf16 %v1905, %v1903
          %v2136 = vpack.c.bf16 %v1908, %v1906
          %v2137 = vpack.c.bf16 %v1909, %v1907
          %v2138 = vpack.c.bf16 %v1912, %v1910
          %v2139 = vpack.c.bf16 %v1913, %v1911
          %v2140 = vpack.c.bf16 %v1916, %v1914
          %v2141 = vpack.c.bf16 %v1917, %v1915
          %v2142 = vpack.c.bf16 %v1920, %v1918
          %v2143 = vpack.c.bf16 %v1921, %v1919
          %v2144 = vpack.c.bf16 %v1924, %v1922
          %v2145 = vpack.c.bf16 %v1925, %v1923
          %v2146 = vpack.c.bf16 %v1928, %v1926
          %v2147 = vpack.c.bf16 %v1929, %v1927
          %v2148 = vpack.c.bf16 %v1932, %v1930
          %v2149 = vpack.c.bf16 %v1933, %v1931
          %v2150 = vpack.c.bf16 %v1936, %v1934
          %v2151 = vpack.c.bf16 %v1937, %v1935
          %v2152 = vpack.c.bf16 %v1940, %v1938
          %v2153 = vpack.c.bf16 %v1941, %v1939
          %v2154 = vpack.c.bf16 %v1944, %v1942
          %v2155 = vpack.c.bf16 %v1945, %v1943
          %v2156 = vpack.c.bf16 %v1948, %v1946
          %v2157 = vpack.c.bf16 %v1949, %v1947
          %v2158 = vpack.c.bf16 %v1952, %v1950
          %v2159 = vpack.c.bf16 %v1953, %v1951
          %v2160 = vpack.c.bf16 %v1956, %v1954
          %v2161 = vpack.c.bf16 %v1957, %v1955
          %v2162 = vpack.c.bf16 %v1960, %v1958
          %v2163 = vpack.c.bf16 %v1961, %v1959
          %v2164 = vpack.c.bf16 %v1964, %v1962
          %v2165 = vpack.c.bf16 %v1965, %v1963
          %v2166 = vpack.c.bf16 %v1968, %v1966
          %v2167 = vpack.c.bf16 %v1969, %v1967
          %v2168 = vpack.c.bf16 %v1972, %v1970
          %v2169 = vpack.c.bf16 %v1973, %v1971
          %v2170 = vpack.c.bf16 %v1976, %v1974
          %v2171 = vpack.c.bf16 %v1977, %v1975
          %v2172 = vpack.c.bf16 %v1980, %v1978
          %v2173 = vpack.c.bf16 %v1981, %v1979
          %v2174 = vpack.c.bf16 %v1984, %v1982
          %v2175 = vpack.c.bf16 %v1985, %v1983
          %v2176 = vpack.c.bf16 %v1988, %v1986
          %v2177 = vpack.c.bf16 %v1989, %v1987
          %v2178 = vpack.c.bf16 %v1992, %v1990
          %v2179 = vpack.c.bf16 %v1993, %v1991
          %v2180 = vpack.c.bf16 %v1996, %v1994
          %v2181 = vpack.c.bf16 %v1997, %v1995
          %v2182 = vpack.c.bf16 %v2000, %v1998
          %v2183 = vpack.c.bf16 %v2001, %v1999
          %v2184 = vpack.c.bf16 %v2004, %v2002
          %v2185 = vpack.c.bf16 %v2005, %v2003
          %v2186 = vpack.c.bf16 %v2008, %v2006
          %v2187 = vpack.c.bf16 %v2009, %v2007
          %v2188 = vpack.c.bf16 %v2012, %v2010
          %v2189 = vpack.c.bf16 %v2013, %v2011
          %v2190 = vpack.c.bf16 %v2016, %v2014
          %v2191 = vpack.c.bf16 %v2017, %v2015
          %v2192 = vpack.c.bf16 %v2020, %v2018
          %v2193 = vpack.c.bf16 %v2021, %v2019
          %v2194 = vpack.c.bf16 %v2024, %v2022
          %v2195 = vpack.c.bf16 %v2025, %v2023
          %v2196 = vpack.c.bf16 %v2028, %v2026
          %v2197 = vpack.c.bf16 %v2029, %v2027
          %v2198 = vpack.c.bf16 %v2032, %v2030
          %v2199 = vpack.c.bf16 %v2033, %v2031
          %v2200 = vpack.c.bf16 %v2036, %v2034
          %v2201 = vpack.c.bf16 %v2037, %v2035
          %v2202 = vpack.c.bf16 %v2040, %v2038
          %v2203 = vpack.c.bf16 %v2041, %v2039
          %v2204 = vpack.c.bf16 %v2044, %v2042
          %v2205 = vpack.c.bf16 %v2045, %v2043
          %v2206 = vpack.c.bf16 %v2048, %v2046
          %v2207 = vpack.c.bf16 %v2049, %v2047
          %v2208 = vpack.c.bf16 %v2052, %v2050
          %v2209 = vpack.c.bf16 %v2053, %v2051
          %v2210 = vpack.c.bf16 %v2056, %v2054
          %v2211 = vpack.c.bf16 %v2057, %v2055
          %v2212 = vpack.c.bf16 %v2060, %v2058
          %v2213 = vpack.c.bf16 %v2061, %v2059
          %v2214 = vpack.c.bf16 %v2064, %v2062
          %v2215 = vpack.c.bf16 %v2065, %v2063
          %v2216 = vpack.c.bf16 %v2068, %v2066
          %v2217 = vpack.c.bf16 %v2069, %v2067
          %v2218 = vpack.c.bf16 %v2072, %v2070
          %v2219 = vpack.c.bf16 %v2073, %v2071
          %v2220 = vpack.c.bf16 %v2076, %v2074
          %v2221 = vpack.c.bf16 %v2077, %v2075
          %v2222 = vpack.c.bf16 %v2080, %v2078
          %v2223 = vpack.c.bf16 %v2081, %v2079
          %v2224 = vpack.c.bf16 %v2084, %v2082
          %v2225 = vpack.c.bf16 %v2085, %v2083
          %v2226 = vpack.c.bf16 %v2088, %v2086
          %v2227 = vpack.c.bf16 %v2089, %v2087
          %v2228 = vpack.c.bf16 %v2092, %v2090
          %v2229 = vpack.c.bf16 %v2093, %v2091
          %v2231 = vlaneseq
          %v2232 = vshrl.u32 %v2231, 7
          %v2233 = vsub.s32 0, %v2232
          %v2234 = vrot.slane %v2094, %v2233
          %v2235 = vlaneseq
          %v2236 = vshrl.u32 %v2235, 7
          %v2237 = vsub.s32 1, %v2236
          %v2238 = vrot.slane %v2094, %v2237
          %2241 = vmatprep.subr.bf16.mxu0 %v2135
          %2242 = vmatpush1.bf16.msra.mxu0 %v2134
          %2243 = vmatprep.subr.bf16.mxu0 %v2137
          %2244 = vmatpush1.bf16.msra.mxu0 %v2136
          %2245 = vmatprep.subr.bf16.mxu0 %v2139
          %2246 = vmatpush1.bf16.msra.mxu0 %v2138
          %2247 = vmatprep.subr.bf16.mxu0 %v2141
          %2248 = vmatpush1.bf16.msra.mxu0 %v2140
          %2249 = vmatprep.subr.bf16.mxu0 %v2143
          %2250 = vmatpush1.bf16.msra.mxu0 %v2142
          %2251 = vmatprep.subr.bf16.mxu0 %v2145
          %2252 = vmatpush1.bf16.msra.mxu0 %v2144
          %2253 = vmatprep.subr.bf16.mxu0 %v2147
          %2254 = vmatpush1.bf16.msra.mxu0 %v2146
          %2255 = vmatprep.subr.bf16.mxu0 %v2149
          %2256 = vmatpush1.bf16.msra.mxu0 %v2148
          %2257 = vmatprep.subr.bf16.mxu0 %v2151
          %2258 = vmatpush1.bf16.msra.mxu0 %v2150
          %2259 = vmatprep.subr.bf16.mxu0 %v2153
          %2260 = vmatpush1.bf16.msra.mxu0 %v2152
          %2261 = vmatprep.subr.bf16.mxu0 %v2155
          %2262 = vmatpush1.bf16.msra.mxu0 %v2154
          %2263 = vmatprep.subr.bf16.mxu0 %v2157
          %2264 = vmatpush1.bf16.msra.mxu0 %v2156
          %2265 = vmatprep.subr.bf16.mxu0 %v2159
          %2266 = vmatpush1.bf16.msra.mxu0 %v2158
          %2267 = vmatprep.subr.bf16.mxu0 %v2161
          %2268 = vmatpush1.bf16.msra.mxu0 %v2160
          %2269 = vmatprep.subr.bf16.mxu0 %v2163
          %2270 = vmatpush1.bf16.msra.mxu0 %v2162
          %2271 = vmatprep.subr.bf16.mxu0 %v2165
          %2272 = vmatpush1.bf16.msra.mxu0 %v2164
          %2273 = vmatprep.mubr.bf16.mxu0 %v2129
          %2274 = vmatmul.mubr.bf16.gmra.mrb[0].mxu0 %v2128
          %v2275 = vpop.f32.mrb[0].mxu0
          %v2276 = vadd.f32 %v2234, %v2275
          %v2277 = vpop.f32.mrb[0].mxu0
          %v2278 = vadd.f32 %v2238, %v2277
          %v2279 = vpop.f32.mrb[0].mxu0
          %v2280 = vpop.f32.mrb[0].mxu0
          %2281 = vdwg.mxu0
          %2282 = vmatprep.subr.bf16.mxu0 %v2167
          %2283 = vmatpush1.bf16.msra.mxu0 %v2166
          %2284 = vmatprep.subr.bf16.mxu0 %v2169
          %2285 = vmatpush1.bf16.msra.mxu0 %v2168
          %2286 = vmatprep.subr.bf16.mxu0 %v2171
          %2287 = vmatpush1.bf16.msra.mxu0 %v2170
          %2288 = vmatprep.subr.bf16.mxu0 %v2173
          %2289 = vmatpush1.bf16.msra.mxu0 %v2172
          %2290 = vmatprep.subr.bf16.mxu0 %v2175
          %2291 = vmatpush1.bf16.msra.mxu0 %v2174
          %2292 = vmatprep.subr.bf16.mxu0 %v2177
          %2293 = vmatpush1.bf16.msra.mxu0 %v2176
          %2294 = vmatprep.subr.bf16.mxu0 %v2179
          %2295 = vmatpush1.bf16.msra.mxu0 %v2178
          %2296 = vmatprep.subr.bf16.mxu0 %v2181
          %2297 = vmatpush1.bf16.msra.mxu0 %v2180
          %2298 = vmatprep.subr.bf16.mxu0 %v2183
          %2299 = vmatpush1.bf16.msra.mxu0 %v2182
          %2300 = vmatprep.subr.bf16.mxu0 %v2185
          %2301 = vmatpush1.bf16.msra.mxu0 %v2184
          %2302 = vmatprep.subr.bf16.mxu0 %v2187
          %2303 = vmatpush1.bf16.msra.mxu0 %v2186
          %2304 = vmatprep.subr.bf16.mxu0 %v2189
          %2305 = vmatpush1.bf16.msra.mxu0 %v2188
          %2306 = vmatprep.subr.bf16.mxu0 %v2191
          %2307 = vmatpush1.bf16.msra.mxu0 %v2190
          %2308 = vmatprep.subr.bf16.mxu0 %v2193
          %2309 = vmatpush1.bf16.msra.mxu0 %v2192
          %2310 = vmatprep.subr.bf16.mxu0 %v2195
          %2311 = vmatpush1.bf16.msra.mxu0 %v2194
          %2312 = vmatprep.subr.bf16.mxu0 %v2197
          %2313 = vmatpush1.bf16.msra.mxu0 %v2196
          %2314 = vmatprep.mubr.bf16.mxu0 %v2131
          %2315 = vmatmul.mubr.bf16.gmra.mrb[0].mxu0 %v2130
          %v2316 = vpop.f32.mrb[0].mxu0
          %v2317 = vadd.f32 %v2276, %v2316
          %v2318 = vpop.f32.mrb[0].mxu0
          %v2319 = vadd.f32 %v2278, %v2318
          %v2320 = vpop.f32.mrb[0].mxu0
          %v2321 = vpop.f32.mrb[0].mxu0
          %2322 = vdwg.mxu0
          %2323 = vmatprep.subr.bf16.mxu0 %v2199
          %2324 = vmatpush1.bf16.msra.mxu0 %v2198
          %2325 = vmatprep.subr.bf16.mxu0 %v2201
          %2326 = vmatpush1.bf16.msra.mxu0 %v2200
          %2327 = vmatprep.subr.bf16.mxu0 %v2203
          %2328 = vmatpush1.bf16.msra.mxu0 %v2202
          %2329 = vmatprep.subr.bf16.mxu0 %v2205
          %2330 = vmatpush1.bf16.msra.mxu0 %v2204
          %2331 = vmatprep.subr.bf16.mxu0 %v2207
          %2332 = vmatpush1.bf16.msra.mxu0 %v2206
          %2333 = vmatprep.subr.bf16.mxu0 %v2209
          %2334 = vmatpush1.bf16.msra.mxu0 %v2208
          %2335 = vmatprep.subr.bf16.mxu0 %v2211
          %2336 = vmatpush1.bf16.msra.mxu0 %v2210
          %2337 = vmatprep.subr.bf16.mxu0 %v2213
          %2338 = vmatpush1.bf16.msra.mxu0 %v2212
          %2339 = vmatprep.subr.bf16.mxu0 %v2215
          %2340 = vmatpush1.bf16.msra.mxu0 %v2214
          %2341 = vmatprep.subr.bf16.mxu0 %v2217
          %2342 = vmatpush1.bf16.msra.mxu0 %v2216
          %2343 = vmatprep.subr.bf16.mxu0 %v2219
          %2344 = vmatpush1.bf16.msra.mxu0 %v2218
          %2345 = vmatprep.subr.bf16.mxu0 %v2221
          %2346 = vmatpush1.bf16.msra.mxu0 %v2220
          %2347 = vmatprep.subr.bf16.mxu0 %v2223
          %2348 = vmatpush1.bf16.msra.mxu0 %v2222
          %2349 = vmatprep.subr.bf16.mxu0 %v2225
          %2350 = vmatpush1.bf16.msra.mxu0 %v2224
          %2351 = vmatprep.subr.bf16.mxu0 %v2227
          %2352 = vmatpush1.bf16.msra.mxu0 %v2226
          %2353 = vmatprep.subr.bf16.mxu0 %v2229
          %2354 = vmatpush1.bf16.msra.mxu0 %v2228
          %2355 = vmatprep.mubr.bf16.mxu0 %v2133
          %2356 = vmatmul.mubr.bf16.gmra.mrb[0].mxu0 %v2132
          %v2357 = vpop.f32.mrb[0].mxu0
          %v2358 = vadd.f32 %v2317, %v2357
          %v2359 = vpop.f32.mrb[0].mxu0
          %v2360 = vadd.f32 %v2319, %v2359
          %v2361 = vpop.f32.mrb[0].mxu0
          %v2362 = vpop.f32.mrb[0].mxu0
          %2363 = vdwg.mxu0
          %v2364 = vmax.f32 %v2358, 0.0
          %v2365 = vmax.f32 %v2360, 0.0
          %v2366 = vpack.c.bf16 %v2364, %v2364
          %v2367 = vpack.c.bf16 %v2365, %v2365
          %v2368 = vpack.c.bf16 %v2096, %v2095
          %v2369 = vpack.c.bf16 %v2098, %v2097
          %v2370 = vpack.c.bf16 %v2100, %v2099
          %v2371 = vpack.c.bf16 %v2102, %v2101
          %v2372 = vpack.c.bf16 %v2104, %v2103
          %v2373 = vpack.c.bf16 %v2106, %v2105
          %v2374 = vpack.c.bf16 %v2108, %v2107
          %v2375 = vpack.c.bf16 %v2110, %v2109
          %v2376 = vpack.c.bf16 %v2112, %v2111
          %v2377 = vpack.c.bf16 %v2114, %v2113
          %v2378 = vpack.c.bf16 %v2116, %v2115
          %v2379 = vpack.c.bf16 %v2118, %v2117
          %v2380 = vpack.c.bf16 %v2120, %v2119
          %v2381 = vpack.c.bf16 %v2122, %v2121
          %v2382 = vpack.c.bf16 %v2124, %v2123
          %v2383 = vpack.c.bf16 %v2126, %v2125
          %v2385 = vlaneseq
          %v2386 = vshrl.u32 %v2385, 7
          %v2387 = vsub.s32 0, %v2386
          %v2388 = vrot.slane %v2127, %v2387
          %2390 = vmatprep.subr.bf16.mxu0 0
          %2391 = vmatpush1.bf16.msra.mxu0 %v2368
          %2392 = vmatprep.subr.bf16.mxu0 0
          %2393 = vmatpush1.bf16.msra.mxu0 %v2369
          %2394 = vmatprep.subr.bf16.mxu0 0
          %2395 = vmatpush1.bf16.msra.mxu0 %v2370
          %2396 = vmatprep.subr.bf16.mxu0 0
          %2397 = vmatpush1.bf16.msra.mxu0 %v2371
          %2398 = vmatprep.subr.bf16.mxu0 0
          %2399 = vmatpush1.bf16.msra.mxu0 %v2372
          %2400 = vmatprep.subr.bf16.mxu0 0
          %2401 = vmatpush1.bf16.msra.mxu0 %v2373
          %2402 = vmatprep.subr.bf16.mxu0 0
          %2403 = vmatpush1.bf16.msra.mxu0 %v2374
          %2404 = vmatprep.subr.bf16.mxu0 0
          %2405 = vmatpush1.bf16.msra.mxu0 %v2375
          %2406 = vmatprep.subr.bf16.mxu0 0
          %2407 = vmatpush1.bf16.msra.mxu0 %v2376
          %2408 = vmatprep.subr.bf16.mxu0 0
          %2409 = vmatpush1.bf16.msra.mxu0 %v2377
          %2410 = vmatprep.subr.bf16.mxu0 0
          %2411 = vmatpush1.bf16.msra.mxu0 %v2378
          %2412 = vmatprep.subr.bf16.mxu0 0
          %2413 = vmatpush1.bf16.msra.mxu0 %v2379
          %2414 = vmatprep.subr.bf16.mxu0 0
          %2415 = vmatpush1.bf16.msra.mxu0 %v2380
          %2416 = vmatprep.subr.bf16.mxu0 0
          %2417 = vmatpush1.bf16.msra.mxu0 %v2381
          %2418 = vmatprep.subr.bf16.mxu0 0
          %2419 = vmatpush1.bf16.msra.mxu0 %v2382
          %2420 = vmatprep.subr.bf16.mxu0 0
          %2421 = vmatpush1.bf16.msra.mxu0 %v2383
          %2422 = vmatprep.mubr.bf16.mxu0 %v2367
          %2423 = vmatmul.mubr.bf16.gmra.mrb[0].mxu0 %v2366
          %v2424 = vpop.f32.mrb[0].mxu0
          %v2425 = vadd.f32 %v2388, %v2424
          %v2426 = vpop.f32.mrb[0].mxu0
          %v2427 = vpop.f32.mrb[0].mxu0
          %v2428 = vpop.f32.mrb[0].mxu0
          %2429 = vdwg.mxu0
          %v2430 = vmul.f32 %v2425, %v2425
          %2431 = vadd.xlane.f32.xlu0 %v2430
          %v2432 = vpop.xlane.xlu0 %2431
          %v2433 = vmax.f32 %v2432, 1e-24
          %v2434 = vrsqrt.pop %v2433
          %v2435 = vmul.f32 %v2425, %v2434
          %v2436 = vld [vmem:[%s1] sm:$0xff]
          %v2437 = vld [vmem:[%s1 + $0x8] sm:$0xff]
          %v2438 = vld [vmem:[%s1 + $0x10] sm:$0xff]
          %v2439 = vld [vmem:[%s1 + $0x18] sm:$0xff]
          %v2440 = vld [vmem:[%s1 + $0x20] sm:$0xff]
          %v2441 = vld [vmem:[%s1 + $0x28] sm:$0xff]
          %v2442 = vpack.c.bf16 %v2436, %v2436
          %v2443 = vpack.c.bf16 %v2437, %v2437
          %v2444 = vpack.c.bf16 %v2438, %v2438
          %v2445 = vpack.c.bf16 %v2439, %v2439
          %v2446 = vpack.c.bf16 %v2440, %v2440
          %v2447 = vpack.c.bf16 %v2441, %v2441
          %v2448 = vpack.c.bf16 %v1306, %v1304
          %v2449 = vpack.c.bf16 %v1307, %v1305
          %v2450 = vpack.c.bf16 %v1310, %v1308
          %v2451 = vpack.c.bf16 %v1311, %v1309
          %v2452 = vpack.c.bf16 %v1314, %v1312
          %v2453 = vpack.c.bf16 %v1315, %v1313
          %v2454 = vpack.c.bf16 %v1318, %v1316
          %v2455 = vpack.c.bf16 %v1319, %v1317
          %v2456 = vpack.c.bf16 %v1322, %v1320
          %v2457 = vpack.c.bf16 %v1323, %v1321
          %v2458 = vpack.c.bf16 %v1326, %v1324
          %v2459 = vpack.c.bf16 %v1327, %v1325
          %v2460 = vpack.c.bf16 %v1330, %v1328
          %v2461 = vpack.c.bf16 %v1331, %v1329
          %v2462 = vpack.c.bf16 %v1334, %v1332
          %v2463 = vpack.c.bf16 %v1335, %v1333
          %v2464 = vpack.c.bf16 %v1338, %v1336
          %v2465 = vpack.c.bf16 %v1339, %v1337
          %v2466 = vpack.c.bf16 %v1342, %v1340
          %v2467 = vpack.c.bf16 %v1343, %v1341
          %v2468 = vpack.c.bf16 %v1346, %v1344
          %v2469 = vpack.c.bf16 %v1347, %v1345
          %v2470 = vpack.c.bf16 %v1350, %v1348
          %v2471 = vpack.c.bf16 %v1351, %v1349
          %v2472 = vpack.c.bf16 %v1354, %v1352
          %v2473 = vpack.c.bf16 %v1355, %v1353
          %v2474 = vpack.c.bf16 %v1358, %v1356
          %v2475 = vpack.c.bf16 %v1359, %v1357
          %v2476 = vpack.c.bf16 %v1362, %v1360
          %v2477 = vpack.c.bf16 %v1363, %v1361
          %v2478 = vpack.c.bf16 %v1366, %v1364
          %v2479 = vpack.c.bf16 %v1367, %v1365
          %v2480 = vpack.c.bf16 %v1370, %v1368
          %v2481 = vpack.c.bf16 %v1371, %v1369
          %v2482 = vpack.c.bf16 %v1374, %v1372
          %v2483 = vpack.c.bf16 %v1375, %v1373
          %v2484 = vpack.c.bf16 %v1378, %v1376
          %v2485 = vpack.c.bf16 %v1379, %v1377
          %v2486 = vpack.c.bf16 %v1382, %v1380
          %v2487 = vpack.c.bf16 %v1383, %v1381
          %v2488 = vpack.c.bf16 %v1386, %v1384
          %v2489 = vpack.c.bf16 %v1387, %v1385
          %v2490 = vpack.c.bf16 %v1390, %v1388
          %v2491 = vpack.c.bf16 %v1391, %v1389
          %v2492 = vpack.c.bf16 %v1394, %v1392
          %v2493 = vpack.c.bf16 %v1395, %v1393
          %v2494 = vpack.c.bf16 %v1398, %v1396
          %v2495 = vpack.c.bf16 %v1399, %v1397
          %v2496 = vpack.c.bf16 %v1402, %v1400
          %v2497 = vpack.c.bf16 %v1403, %v1401
          %v2498 = vpack.c.bf16 %v1406, %v1404
          %v2499 = vpack.c.bf16 %v1407, %v1405
          %v2500 = vpack.c.bf16 %v1410, %v1408
          %v2501 = vpack.c.bf16 %v1411, %v1409
          %v2502 = vpack.c.bf16 %v1414, %v1412
          %v2503 = vpack.c.bf16 %v1415, %v1413
          %v2504 = vpack.c.bf16 %v1418, %v1416
          %v2505 = vpack.c.bf16 %v1419, %v1417
          %v2506 = vpack.c.bf16 %v1422, %v1420
          %v2507 = vpack.c.bf16 %v1423, %v1421
          %v2508 = vpack.c.bf16 %v1426, %v1424
          %v2509 = vpack.c.bf16 %v1427, %v1425
          %v2510 = vpack.c.bf16 %v1430, %v1428
          %v2511 = vpack.c.bf16 %v1431, %v1429
          %v2512 = vpack.c.bf16 %v1434, %v1432
          %v2513 = vpack.c.bf16 %v1435, %v1433
          %v2514 = vpack.c.bf16 %v1438, %v1436
          %v2515 = vpack.c.bf16 %v1439, %v1437
          %v2516 = vpack.c.bf16 %v1442, %v1440
          %v2517 = vpack.c.bf16 %v1443, %v1441
          %v2518 = vpack.c.bf16 %v1446, %v1444
          %v2519 = vpack.c.bf16 %v1447, %v1445
          %v2520 = vpack.c.bf16 %v1450, %v1448
          %v2521 = vpack.c.bf16 %v1451, %v1449
          %v2522 = vpack.c.bf16 %v1454, %v1452
          %v2523 = vpack.c.bf16 %v1455, %v1453
          %v2524 = vpack.c.bf16 %v1458, %v1456
          %v2525 = vpack.c.bf16 %v1459, %v1457
          %v2526 = vpack.c.bf16 %v1462, %v1460
          %v2527 = vpack.c.bf16 %v1463, %v1461
          %v2528 = vpack.c.bf16 %v1466, %v1464
          %v2529 = vpack.c.bf16 %v1467, %v1465
          %v2530 = vpack.c.bf16 %v1470, %v1468
          %v2531 = vpack.c.bf16 %v1471, %v1469
          %v2532 = vpack.c.bf16 %v1474, %v1472
          %v2533 = vpack.c.bf16 %v1475, %v1473
          %v2534 = vpack.c.bf16 %v1478, %v1476
          %v2535 = vpack.c.bf16 %v1479, %v1477
          %v2536 = vpack.c.bf16 %v1482, %v1480
          %v2537 = vpack.c.bf16 %v1483, %v1481
          %v2538 = vpack.c.bf16 %v1486, %v1484
          %v2539 = vpack.c.bf16 %v1487, %v1485
          %v2540 = vpack.c.bf16 %v1490, %v1488
          %v2541 = vpack.c.bf16 %v1491, %v1489
          %v2542 = vpack.c.bf16 %v1494, %v1492
          %v2543 = vpack.c.bf16 %v1495, %v1493
          %v2545 = vlaneseq
          %v2546 = vshrl.u32 %v2545, 7
          %v2547 = vsub.s32 0, %v2546
          %v2548 = vrot.slane %v1500, %v2547
          %v2549 = vlaneseq
          %v2550 = vshrl.u32 %v2549, 7
          %v2551 = vsub.s32 1, %v2550
          %v2552 = vrot.slane %v1500, %v2551
          %2555 = vmatprep.subr.bf16.mxu0 %v2449
          %2556 = vmatpush1.bf16.msra.mxu0 %v2448
          %2557 = vmatprep.subr.bf16.mxu0 %v2451
          %2558 = vmatpush1.bf16.msra.mxu0 %v2450
          %2559 = vmatprep.subr.bf16.mxu0 %v2453
          %2560 = vmatpush1.bf16.msra.mxu0 %v2452
          %2561 = vmatprep.subr.bf16.mxu0 %v2455
          %2562 = vmatpush1.bf16.msra.mxu0 %v2454
          %2563 = vmatprep.subr.bf16.mxu0 %v2457
          %2564 = vmatpush1.bf16.msra.mxu0 %v2456
          %2565 = vmatprep.subr.bf16.mxu0 %v2459
          %2566 = vmatpush1.bf16.msra.mxu0 %v2458
          %2567 = vmatprep.subr.bf16.mxu0 %v2461
          %2568 = vmatpush1.bf16.msra.mxu0 %v2460
          %2569 = vmatprep.subr.bf16.mxu0 %v2463
          %2570 = vmatpush1.bf16.msra.mxu0 %v2462
          %2571 = vmatprep.subr.bf16.mxu0 %v2465
          %2572 = vmatpush1.bf16.msra.mxu0 %v2464
          %2573 = vmatprep.subr.bf16.mxu0 %v2467
          %2574 = vmatpush1.bf16.msra.mxu0 %v2466
          %2575 = vmatprep.subr.bf16.mxu0 %v2469
          %2576 = vmatpush1.bf16.msra.mxu0 %v2468
          %2577 = vmatprep.subr.bf16.mxu0 %v2471
          %2578 = vmatpush1.bf16.msra.mxu0 %v2470
          %2579 = vmatprep.subr.bf16.mxu0 %v2473
          %2580 = vmatpush1.bf16.msra.mxu0 %v2472
          %2581 = vmatprep.subr.bf16.mxu0 %v2475
          %2582 = vmatpush1.bf16.msra.mxu0 %v2474
          %2583 = vmatprep.subr.bf16.mxu0 %v2477
          %2584 = vmatpush1.bf16.msra.mxu0 %v2476
          %2585 = vmatprep.subr.bf16.mxu0 %v2479
          %2586 = vmatpush1.bf16.msra.mxu0 %v2478
          %2587 = vmatprep.mubr.bf16.mxu0 %v2443
          %2588 = vmatmul.mubr.bf16.gmra.mrb[0].mxu0 %v2442
          %v2589 = vpop.f32.mrb[0].mxu0
          %v2590 = vadd.f32 %v2548, %v2589
          %v2591 = vpop.f32.mrb[0].mxu0
          %v2592 = vadd.f32 %v2552, %v2591
          %v2593 = vpop.f32.mrb[0].mxu0
          %v2594 = vpop.f32.mrb[0].mxu0
          %2595 = vdwg.mxu0
          %2596 = vmatprep.subr.bf16.mxu0 %v2481
          %2597 = vmatpush1.bf16.msra.mxu0 %v2480
          %2598 = vmatprep.subr.bf16.mxu0 %v2483
          %2599 = vmatpush1.bf16.msra.mxu0 %v2482
          %2600 = vmatprep.subr.bf16.mxu0 %v2485
          %2601 = vmatpush1.bf16.msra.mxu0 %v2484
          %2602 = vmatprep.subr.bf16.mxu0 %v2487
          %2603 = vmatpush1.bf16.msra.mxu0 %v2486
          %2604 = vmatprep.subr.bf16.mxu0 %v2489
          %2605 = vmatpush1.bf16.msra.mxu0 %v2488
          %2606 = vmatprep.subr.bf16.mxu0 %v2491
          %2607 = vmatpush1.bf16.msra.mxu0 %v2490
          %2608 = vmatprep.subr.bf16.mxu0 %v2493
          %2609 = vmatpush1.bf16.msra.mxu0 %v2492
          %2610 = vmatprep.subr.bf16.mxu0 %v2495
          %2611 = vmatpush1.bf16.msra.mxu0 %v2494
          %2612 = vmatprep.subr.bf16.mxu0 %v2497
          %2613 = vmatpush1.bf16.msra.mxu0 %v2496
          %2614 = vmatprep.subr.bf16.mxu0 %v2499
          %2615 = vmatpush1.bf16.msra.mxu0 %v2498
          %2616 = vmatprep.subr.bf16.mxu0 %v2501
          %2617 = vmatpush1.bf16.msra.mxu0 %v2500
          %2618 = vmatprep.subr.bf16.mxu0 %v2503
          %2619 = vmatpush1.bf16.msra.mxu0 %v2502
          %2620 = vmatprep.subr.bf16.mxu0 %v2505
          %2621 = vmatpush1.bf16.msra.mxu0 %v2504
          %2622 = vmatprep.subr.bf16.mxu0 %v2507
          %2623 = vmatpush1.bf16.msra.mxu0 %v2506
          %2624 = vmatprep.subr.bf16.mxu0 %v2509
          %2625 = vmatpush1.bf16.msra.mxu0 %v2508
          %2626 = vmatprep.subr.bf16.mxu0 %v2511
          %2627 = vmatpush1.bf16.msra.mxu0 %v2510
          %2628 = vmatprep.mubr.bf16.mxu0 %v2445
          %2629 = vmatmul.mubr.bf16.gmra.mrb[0].mxu0 %v2444
          %v2630 = vpop.f32.mrb[0].mxu0
          %v2631 = vadd.f32 %v2590, %v2630
          %v2632 = vpop.f32.mrb[0].mxu0
          %v2633 = vadd.f32 %v2592, %v2632
          %v2634 = vpop.f32.mrb[0].mxu0
          %v2635 = vpop.f32.mrb[0].mxu0
          %2636 = vdwg.mxu0
          %2637 = vmatprep.subr.bf16.mxu0 %v2513
          %2638 = vmatpush1.bf16.msra.mxu0 %v2512
          %2639 = vmatprep.subr.bf16.mxu0 %v2515
          %2640 = vmatpush1.bf16.msra.mxu0 %v2514
          %2641 = vmatprep.subr.bf16.mxu0 %v2517
          %2642 = vmatpush1.bf16.msra.mxu0 %v2516
          %2643 = vmatprep.subr.bf16.mxu0 %v2519
          %2644 = vmatpush1.bf16.msra.mxu0 %v2518
          %2645 = vmatprep.subr.bf16.mxu0 %v2521
          %2646 = vmatpush1.bf16.msra.mxu0 %v2520
          %2647 = vmatprep.subr.bf16.mxu0 %v2523
          %2648 = vmatpush1.bf16.msra.mxu0 %v2522
          %2649 = vmatprep.subr.bf16.mxu0 %v2525
          %2650 = vmatpush1.bf16.msra.mxu0 %v2524
          %2651 = vmatprep.subr.bf16.mxu0 %v2527
          %2652 = vmatpush1.bf16.msra.mxu0 %v2526
          %2653 = vmatprep.subr.bf16.mxu0 %v2529
          %2654 = vmatpush1.bf16.msra.mxu0 %v2528
          %2655 = vmatprep.subr.bf16.mxu0 %v2531
          %2656 = vmatpush1.bf16.msra.mxu0 %v2530
          %2657 = vmatprep.subr.bf16.mxu0 %v2533
          %2658 = vmatpush1.bf16.msra.mxu0 %v2532
          %2659 = vmatprep.subr.bf16.mxu0 %v2535
          %2660 = vmatpush1.bf16.msra.mxu0 %v2534
          %2661 = vmatprep.subr.bf16.mxu0 %v2537
          %2662 = vmatpush1.bf16.msra.mxu0 %v2536
          %2663 = vmatprep.subr.bf16.mxu0 %v2539
          %2664 = vmatpush1.bf16.msra.mxu0 %v2538
          %2665 = vmatprep.subr.bf16.mxu0 %v2541
          %2666 = vmatpush1.bf16.msra.mxu0 %v2540
          %2667 = vmatprep.subr.bf16.mxu0 %v2543
          %2668 = vmatpush1.bf16.msra.mxu0 %v2542
          %2669 = vmatprep.mubr.bf16.mxu0 %v2447
          %2670 = vmatmul.mubr.bf16.gmra.mrb[0].mxu0 %v2446
          %v2671 = vpop.f32.mrb[0].mxu0
          %v2672 = vadd.f32 %v2631, %v2671
          %v2673 = vpop.f32.mrb[0].mxu0
          %v2674 = vadd.f32 %v2633, %v2673
          %v2675 = vpop.f32.mrb[0].mxu0
          %v2676 = vpop.f32.mrb[0].mxu0
          %2677 = vdwg.mxu0
          %v2678 = vmax.f32 %v2672, 0.0
          %v2679 = vmax.f32 %v2674, 0.0
          %v2680 = vpack.c.bf16 %v2678, %v2678
          %v2681 = vpack.c.bf16 %v2679, %v2679
          %v2682 = vpack.c.bf16 %v1630, %v1629
          %v2683 = vpack.c.bf16 %v1632, %v1631
          %v2684 = vpack.c.bf16 %v1634, %v1633
          %v2685 = vpack.c.bf16 %v1636, %v1635
          %v2686 = vpack.c.bf16 %v1638, %v1637
          %v2687 = vpack.c.bf16 %v1640, %v1639
          %v2688 = vpack.c.bf16 %v1642, %v1641
          %v2689 = vpack.c.bf16 %v1644, %v1643
          %v2690 = vpack.c.bf16 %v1646, %v1645
          %v2691 = vpack.c.bf16 %v1648, %v1647
          %v2692 = vpack.c.bf16 %v1650, %v1649
          %v2693 = vpack.c.bf16 %v1652, %v1651
          %v2694 = vpack.c.bf16 %v1654, %v1653
          %v2695 = vpack.c.bf16 %v1656, %v1655
          %v2696 = vpack.c.bf16 %v1658, %v1657
          %v2697 = vpack.c.bf16 %v1660, %v1659
          %v2699 = vlaneseq
          %v2700 = vshrl.u32 %v2699, 7
          %v2701 = vsub.s32 0, %v2700
          %v2702 = vrot.slane %v1665, %v2701
          %2704 = vmatprep.subr.bf16.mxu0 0
          %2705 = vmatpush1.bf16.msra.mxu0 %v2682
          %2706 = vmatprep.subr.bf16.mxu0 0
          %2707 = vmatpush1.bf16.msra.mxu0 %v2683
          %2708 = vmatprep.subr.bf16.mxu0 0
          %2709 = vmatpush1.bf16.msra.mxu0 %v2684
          %2710 = vmatprep.subr.bf16.mxu0 0
          %2711 = vmatpush1.bf16.msra.mxu0 %v2685
          %2712 = vmatprep.subr.bf16.mxu0 0
          %2713 = vmatpush1.bf16.msra.mxu0 %v2686
          %2714 = vmatprep.subr.bf16.mxu0 0
          %2715 = vmatpush1.bf16.msra.mxu0 %v2687
          %2716 = vmatprep.subr.bf16.mxu0 0
          %2717 = vmatpush1.bf16.msra.mxu0 %v2688
          %2718 = vmatprep.subr.bf16.mxu0 0
          %2719 = vmatpush1.bf16.msra.mxu0 %v2689
          %2720 = vmatprep.subr.bf16.mxu0 0
          %2721 = vmatpush1.bf16.msra.mxu0 %v2690
          %2722 = vmatprep.subr.bf16.mxu0 0
          %2723 = vmatpush1.bf16.msra.mxu0 %v2691
          %2724 = vmatprep.subr.bf16.mxu0 0
          %2725 = vmatpush1.bf16.msra.mxu0 %v2692
          %2726 = vmatprep.subr.bf16.mxu0 0
          %2727 = vmatpush1.bf16.msra.mxu0 %v2693
          %2728 = vmatprep.subr.bf16.mxu0 0
          %2729 = vmatpush1.bf16.msra.mxu0 %v2694
          %2730 = vmatprep.subr.bf16.mxu0 0
          %2731 = vmatpush1.bf16.msra.mxu0 %v2695
          %2732 = vmatprep.subr.bf16.mxu0 0
          %2733 = vmatpush1.bf16.msra.mxu0 %v2696
          %2734 = vmatprep.subr.bf16.mxu0 0
          %2735 = vmatpush1.bf16.msra.mxu0 %v2697
          %2736 = vmatprep.mubr.bf16.mxu0 %v2681
          %2737 = vmatmul.mubr.bf16.gmra.mrb[0].mxu0 %v2680
          %v2738 = vpop.f32.mrb[0].mxu0
          %v2739 = vadd.f32 %v2702, %v2738
          %v2740 = vpop.f32.mrb[0].mxu0
          %v2741 = vpop.f32.mrb[0].mxu0
          %v2742 = vpop.f32.mrb[0].mxu0
          %2743 = vdwg.mxu0
          %v2744 = vmul.f32 %v2739, %v2739
          %2745 = vadd.xlane.f32.xlu0 %v2744
          %v2746 = vpop.xlane.xlu0 %2745
          %v2747 = vmax.f32 %v2746, 1e-24
          %v2748 = vrsqrt.pop %v2747
          %v2749 = vmul.f32 %v2739, %v2748
          %v2750 = vmul.f32 %v2435, 14.285714
          %v2751 = vpack.c.bf16 %v2750, %v2750
          %2752 = vst [vmem:[#allocation2] sm:$0xf] %v2751
          %2753 = vst [vmem:[#allocation3] sm:$0xff] %v2749
          %v2754 = vmul.f32 %v2750, %v2749
          %2755 = vadd.xlane.f32.xlu0 %v2754
          %v2756 = vpop.xlane.xlu0 %2755
          %vm2757 = vcmask 7168
          %2758 = vst.msk [vmem:[%s12] sm:$0xff] %vm2757, %v2756
        $region76: #{_moco_forward_impl.1} parent=63 // pred_fallthru
          _
        %p2759 = scmp.lt.s32.totalorder %s34, 0
        %s2760 = ssub.s32 0, %s34
        %s2761 = scalar_select %p2759, %s2760, %s34
        %s2762 = sand.u32 %s2761, 1
        %s2763 = ssub.s32 0, %s2762
        %s2764 = scalar_select %p2759, %s2763, %s2762
        %p2765 = scmp.ne.s32.totalorder %s2764, 0
        %p2766 = scmp.lt.s32.totalorder %s2764, 0
        %p2767 = pnand %p2766, %p2765
        %p2768 = pneg %p2767
        %s2769 = sadd.s32 %s2764, 2
        %s2770 = scalar_select %p2768, %s2769, %s2764
        %s2771 = smul.u32 %s2770, 128
        %s2772 = scalar_lea.vmem [#allocation4], %s2771
        %s2773 = scalar_lea.sflag [#allocation5], %s2770
        %s2774 = smul.u32 128, 1
        %s2775 = sshll.u32 %s2774, 4
        %2776 = dma.done %s2773, %s2775
        %s2777 = sadd.s32 %s34, 1
        %p2778 = scmp.lt.s32.totalorder %s2777, 2
        // Predicated region
        $region81: #{_moco_forward_impl.1} parent=63 // pred_check
          %p2779 = pneg %p2778
        $region82: #{_moco_forward_impl.1} parent=63 // pred_check_branch
          %2781 = sbr.rel (%p2779) target = $region84
        $region83: #{_moco_forward_impl.1} parent=63 // pred_region
          %s2782 = ssub.s32 1, %s2770
          %s2783 = smul.u32 %s2777, 128
          %s2784 = smul.addr %s2783, 16
          %s2785 = scalar_lea.hbm %s11, %s2784
          %s2786 = smul.u32 %s2782, 128
          %s2787 = scalar_lea.vmem [#allocation4], %s2786
          %s2788 = scalar_lea.sflag [#allocation5], %s2782
          // Predicated region
          $region85: #{_moco_forward_impl.1} parent=83 // pred_check
            _
          $region86: #{_moco_forward_impl.1} parent=83 // pred_check_branch
            %2790 = sbr.rel target = $region88
          $region87: #{_moco_forward_impl.1} parent=83 // pred_region
            %2791 = sst [smem:[#allocation16]] [#allocation19]
            %2792 = sst [smem:[#allocation17]] [#allocation18]
          $region88: #{_moco_forward_impl.1} parent=83 // pred_fallthru
            _
          %2794 = shalt.err (0)
          %s2796 = sshll.u32 %s2787, 4
          %s2797 = int_to_ptr.vmem [resolvable:$true] %s2796
          %2799 = dma.hbm_to_vmem [thread:$0]  %s2785, 2048, %s2797, %s2788
        $region84: #{_moco_forward_impl.1} parent=63 // pred_fallthru
          _
        %v2800 = vld [vmem:[#allocation2] sm:$0xf]
        %v2801 = vld [vmem:[%s2772] sm:$0xff]
        %v2802 = vld [vmem:[%s2772 + $0x8] sm:$0xff]
        %v2803 = vld [vmem:[%s2772 + $0x10] sm:$0xff]
        %v2804 = vld [vmem:[%s2772 + $0x18] sm:$0xff]
        %v2805 = vld [vmem:[%s2772 + $0x20] sm:$0xff]
        %v2806 = vld [vmem:[%s2772 + $0x28] sm:$0xff]
        %v2807 = vld [vmem:[%s2772 + $0x30] sm:$0xff]
        %v2808 = vld [vmem:[%s2772 + $0x38] sm:$0xff]
        %v2809 = vld [vmem:[%s2772 + $0x40] sm:$0xff]
        %v2810 = vld [vmem:[%s2772 + $0x48] sm:$0xff]
        %v2811 = vld [vmem:[%s2772 + $0x50] sm:$0xff]
        %v2812 = vld [vmem:[%s2772 + $0x58] sm:$0xff]
        %v2813 = vld [vmem:[%s2772 + $0x60] sm:$0xff]
        %v2814 = vld [vmem:[%s2772 + $0x68] sm:$0xff]
        %v2815 = vld [vmem:[%s2772 + $0x70] sm:$0xff]
        %v2816 = vld [vmem:[%s2772 + $0x78] sm:$0xff]
        %v2817 = vpack.c.bf16 %v2802, %v2801
        %v2818 = vpack.c.bf16 %v2804, %v2803
        %v2819 = vpack.c.bf16 %v2806, %v2805
        %v2820 = vpack.c.bf16 %v2808, %v2807
        %v2821 = vpack.c.bf16 %v2810, %v2809
        %v2822 = vpack.c.bf16 %v2812, %v2811
        %v2823 = vpack.c.bf16 %v2814, %v2813
        %v2824 = vpack.c.bf16 %v2816, %v2815
        %2825 = vmatprep.subr.bf16.mxu0 0
        %2826 = vmatpush1.bf16.xpose.msra.mxu0 %v2817
        %2827 = vmatprep.subr.bf16.mxu0 0
        %2828 = vmatpush1.bf16.xpose.msra.mxu0 %v2818
        %2829 = vmatprep.subr.bf16.mxu0 0
        %2830 = vmatpush1.bf16.xpose.msra.mxu0 %v2819
        %2831 = vmatprep.subr.bf16.mxu0 0
        %2832 = vmatpush1.bf16.xpose.msra.mxu0 %v2820
        %2833 = vmatprep.subr.bf16.mxu0 0
        %2834 = vmatpush1.bf16.xpose.msra.mxu0 %v2821
        %2835 = vmatprep.subr.bf16.mxu0 0
        %2836 = vmatpush1.bf16.xpose.msra.mxu0 %v2822
        %2837 = vmatprep.subr.bf16.mxu0 0
        %2838 = vmatpush1.bf16.xpose.msra.mxu0 %v2823
        %2839 = vmatprep.subr.bf16.mxu0 0
        %2840 = vmatpush1.bf16.xpose.msra.mxu0 %v2824
        %2841 = vmatprep.subr.bf16.mxu0 0
        %2842 = vmatpush1.bf16.xpose.msra.mxu0 0
        %2843 = vmatprep.subr.bf16.mxu0 0
        %2844 = vmatpush1.bf16.xpose.msra.mxu0 0
        %2845 = vmatprep.subr.bf16.mxu0 0
        %2846 = vmatpush1.bf16.xpose.msra.mxu0 0
        %2847 = vmatprep.subr.bf16.mxu0 0
        %2848 = vmatpush1.bf16.xpose.msra.mxu0 0
        %2849 = vmatprep.subr.bf16.mxu0 0
        %2850 = vmatpush1.bf16.xpose.msra.mxu0 0
        %2851 = vmatprep.subr.bf16.mxu0 0
        %2852 = vmatpush1.bf16.xpose.msra.mxu0 0
        %2853 = vmatprep.subr.bf16.mxu0 0
        %2854 = vmatpush1.bf16.xpose.msra.mxu0 0
        %2855 = vmatprep.subr.bf16.mxu0 0
        %2856 = vmatpush1.bf16.xpose.msra.mxu0 0
        %2857 = vmatprep.mubr.bf16.mxu0 0
        %2858 = vmatmul.mubr.bf16.gmra.mrb[0].mxu0 %v2800
        %v2859 = vpop.f32.mrb[0].mxu0
        %v2860 = vadd.f32 0.0, %v2859
        %v2861 = vpop.f32.mrb[0].mxu0
        %v2862 = vpop.f32.mrb[0].mxu0
        %v2863 = vpop.f32.mrb[0].mxu0
        %2864 = vdwg.mxu0
        %2865 = vst [vmem:[%s519] sm:$0xff] %v2860
        %p2866 = scmp.eq.s32.totalorder %s34, 1
        // Predicated region
        $region89: #{_moco_forward_impl.1} parent=63 // pred_check
          %p2867 = pneg %p2866
        $region90: #{_moco_forward_impl.1} parent=63 // pred_check_branch
          %2869 = sbr.rel (%p2867) target = $region92
        $region91: #{_moco_forward_impl.1} parent=63 // pred_region
          %s2870 = sld [smem:[#allocation7]]
          %s2871 = smul.addr %s2870, 16
          %s2872 = scalar_lea.hbm %s18, %s2871
          // Predicated region
          $region93: #{_moco_forward_impl.1} parent=91 // pred_check
            _
          $region94: #{_moco_forward_impl.1} parent=91 // pred_check_branch
            %2874 = sbr.rel target = $region96
          $region95: #{_moco_forward_impl.1} parent=91 // pred_region
            %2875 = sst [smem:[#allocation16]] [#allocation21]
            %2876 = sst [smem:[#allocation17]] [#allocation20]
          $region96: #{_moco_forward_impl.1} parent=91 // pred_fallthru
            _
          %2878 = shalt.err (0)
          %s2880 = sshll.u32 [#allocation3], 4
          %s2881 = int_to_ptr.vmem [resolvable:$true] %s2880
          %2883 = dma.vmem_to_hbm [thread:$0]  %s2881, 128, %s2872, [#allocation6]
          %s2884 = smul.u32 8, 1
          %s2885 = sshll.u32 %s2884, 4
          %2886 = dma.done [#allocation6], %s2885
        $region92: #{_moco_forward_impl.1} parent=63 // pred_fallthru
          _
        %p2887 = scmp.lt.s32.totalorder %s34, 1
        %s2888 = scalar_select %p2887, %s34, 1
        %s2889 = smul.addr %s2888, 8
        %s2890 = scalar_lea.vmem %s13, %s2889
        // Predicated region
        $region97: #{_moco_forward_impl.1} parent=63 // pred_check
          %p2891 = pneg %p278
        $region98: #{_moco_forward_impl.1} parent=63 // pred_check_branch
          %2893 = sbr.rel (%p2891) target = $region100
        $region99: #{_moco_forward_impl.1} parent=63 // pred_region
          _
        $region100: #{_moco_forward_impl.1} parent=63 // pred_fallthru
          _
        // Predicated region
        $region101: #{_moco_forward_impl.1} parent=63 // pred_check
          %p2894 = pneg %p304
        $region102: #{_moco_forward_impl.1} parent=63 // pred_check_branch
          %2896 = sbr.rel (%p2894) target = $region104
        $region103: #{_moco_forward_impl.1} parent=63 // pred_region
          _
        $region104: #{_moco_forward_impl.1} parent=63 // pred_fallthru
          _
        // Predicated region
        $region105: #{_moco_forward_impl.1} parent=63 // pred_check
          %p2897 = pneg %p325
        $region106: #{_moco_forward_impl.1} parent=63 // pred_check_branch
          %2899 = sbr.rel (%p2897) target = $region108
        $region107: #{_moco_forward_impl.1} parent=63 // pred_region
          %s2901 = ssub.s32 24576, 24576
          %2902 = vsyncadd [#allocation10], %s2901
          %s2903 = sshll.u32 [#allocation13], 4
          %s2904 = int_to_ptr.vmem [resolvable:$true] %s2903
          %2909 = dma.vmem_to_hbm [thread:$0]  %s2904, 24576, %s14, [#allocation10], 256, 256, 16
        $region108: #{_moco_forward_impl.1} parent=63 // pred_fallthru
          _
        // Predicated region
        $region109: #{_moco_forward_impl.1} parent=63 // pred_check
          %p2910 = pneg %p346
        $region110: #{_moco_forward_impl.1} parent=63 // pred_check_branch
          %2912 = sbr.rel (%p2910) target = $region112
        $region111: #{_moco_forward_impl.1} parent=63 // pred_region
          _
        $region112: #{_moco_forward_impl.1} parent=63 // pred_fallthru
          _
        // Predicated region
        $region113: #{_moco_forward_impl.1} parent=63 // pred_check
          %p2913 = pneg %p367
        $region114: #{_moco_forward_impl.1} parent=63 // pred_check_branch
          %2915 = sbr.rel (%p2913) target = $region116
        $region115: #{_moco_forward_impl.1} parent=63 // pred_region
          _
        $region116: #{_moco_forward_impl.1} parent=63 // pred_fallthru
          _
        // Predicated region
        $region117: #{_moco_forward_impl.1} parent=63 // pred_check
          %p2916 = pneg %p388
        $region118: #{_moco_forward_impl.1} parent=63 // pred_check_branch
          %2918 = sbr.rel (%p2916) target = $region120
        $region119: #{_moco_forward_impl.1} parent=63 // pred_region
          _
        $region120: #{_moco_forward_impl.1} parent=63 // pred_fallthru
          _
        // Predicated region
        $region121: #{_moco_forward_impl.1} parent=63 // pred_check
          %p2919 = pneg %p278
        $region122: #{_moco_forward_impl.1} parent=63 // pred_check_branch
          %2921 = sbr.rel (%p2919) target = $region124
        $region123: #{_moco_forward_impl.1} parent=63 // pred_region
          _
        $region124: #{_moco_forward_impl.1} parent=63 // pred_fallthru
          _
        // Predicated region
        $region125: #{_moco_forward_impl.1} parent=63 // pred_check
          %p2922 = pneg %p325
        $region126: #{_moco_forward_impl.1} parent=63 // pred_check_branch
          %2924 = sbr.rel (%p2922) target = $region128
        $region127: #{_moco_forward_impl.1} parent=63 // pred_region
          %2925 = dma.done [#allocation10], 24576
        $region128: #{_moco_forward_impl.1} parent=63 // pred_fallthru
          _
        // Predicated region
        $region129: #{_moco_forward_impl.1} parent=63 // pred_check
          %p2926 = pneg %p346
        $region130: #{_moco_forward_impl.1} parent=63 // pred_check_branch
          %2928 = sbr.rel (%p2926) target = $region132
        $region131: #{_moco_forward_impl.1} parent=63 // pred_region
          _
        $region132: #{_moco_forward_impl.1} parent=63 // pred_fallthru
          _
        // Predicated region
        $region133: #{_moco_forward_impl.1} parent=63 // pred_check
          %p2929 = pneg %p367
        $region134: #{_moco_forward_impl.1} parent=63 // pred_check_branch
          %2931 = sbr.rel (%p2929) target = $region136
        $region135: #{_moco_forward_impl.1} parent=63 // pred_region
          _
        $region136: #{_moco_forward_impl.1} parent=63 // pred_fallthru
          _
        // Predicated region
        $region137: #{_moco_forward_impl.1} parent=63 // pred_check
          %p2932 = pneg %p388
        $region138: #{_moco_forward_impl.1} parent=63 // pred_check_branch
          %2934 = sbr.rel (%p2932) target = $region140
        $region139: #{_moco_forward_impl.1} parent=63 // pred_region
          _
        $region140: #{_moco_forward_impl.1} parent=63 // pred_fallthru
          _
      $region64: #{_moco_forward_impl.1} parent=5 // pred_fallthru
        _
      %p2935 = scmp.le.s32.totalorder 2, %s29
      // Predicated region
      $region141: #{_moco_forward_impl.1} parent=5 // pred_check
        %p2936 = pneg %p2935
      $region142: #{_moco_forward_impl.1} parent=5 // pred_check_branch
        %2938 = sbr.rel (%p2936) target = $region144
      $region143: #{_moco_forward_impl.1} parent=5 // pred_region
        %s2939 = ssub.s32 %s29, 2
        // Predicated region
        $region145: #{_moco_forward_impl.1} parent=143 // pred_check
          %p2940 = pneg %p310
        $region146: #{_moco_forward_impl.1} parent=143 // pred_check_branch
          %2942 = sbr.rel (%p2940) target = $region148
        $region147: #{_moco_forward_impl.1} parent=143 // pred_region
          %p2943 = scmp.lt.s32.totalorder %s35, 1
          %s2944 = scalar_select %p2943, %s35, 1
          %s2945 = smul.addr %s2944, 8
          %s2946 = scalar_lea.vmem %s13, %s2945
        $region148: #{_moco_forward_impl.1} parent=143 // pred_fallthru
          _
      $region144: #{_moco_forward_impl.1} parent=5 // pred_fallthru
        _
    $region6: #{_moco_forward_impl.1} parent=1 // loop_footer
      %s33 = sadd.s32 1, %s29
    $region7: #{_moco_forward_impl.1} parent=1 // loop_footer_branch
      %28 = sbr.rel target = $region3
    $region8: #{_moco_forward_impl.1} parent=1 // loop_exit
      _
    %2947 = vsyncpa [#allocation9], 1
    %s2948 = scalar_lea.sflag [#allocation9], 1
    %2949 = vsyncpa %s2948, 1
    %2950 = vsyncpa [#allocation12], 1
    %2951 = vsyncpa [#allocation10], 1
    %s2952 = scalar_lea.sflag [#allocation10], 1
    %2953 = vsyncpa %s2952, 1
  %2954 = vsyncmov [#allocation5]
  %s2955 = vpop.sfrf %2954
  %p2956 = scmp.eq.s32.totalorder %s2955, 0
  %p2957 = pneg %p2956
  %2959 = shalt.err (%p2957)
  %s2960 = scalar_lea.sflag [#allocation5], 1
  %2961 = vsyncmov %s2960
  %s2962 = vpop.sfrf %2961
  %p2963 = scmp.eq.s32.totalorder %s2962, 0
  %p2964 = pneg %p2963
  %2966 = shalt.err (%p2964)
  %2967 = vsyncmov [#allocation6]
  %s2968 = vpop.sfrf %2967
  %p2969 = scmp.eq.s32.totalorder %s2968, 0
  %p2970 = pneg %p2969
  %2972 = shalt.err (%p2970)

</llo_original>
